<compile_context>
chip_gen: v5e
topology: v5e:2x2
jax: 0.10.0
libtpu: 0.0.40
codegen_flags: <defaults>
</compile_context>

<pallas_src>
import functools

import jax
import jax.numpy as jnp
import numpy as np
from jax.experimental import pallas as pl
from jax.experimental.pallas import tpu as pltpu


def _basic_block_kernel(x_ref, w1_ref, b1_ref, w2_ref, b2_ref, res_ref, o_ref,
                        xpad_ref, mid_ref, *, lane_dense_out):
    """Fused BasicBlock for one batch-block of images.

    x_ref   : (NB, H, W, Cin)            unpadded input block
    w1_ref  : (9, Cin,  Cmid)            conv1 weight (BN1 scale folded), tap-major
    b1_ref  : (1, Cmid)  f32             BN1 folded bias
    w2_ref  : (9, Cmid, Cout)            conv2 weight (BN2 scale folded), tap-major
    b2_ref  : (1, Cout)  f32             BN2 folded bias
    res_ref : (NB, H, W*Cout) | (NB, H, W, Cout)   residual
    o_ref   : (NB, H, W*Cout) | (NB, H, W, Cout)   output
    xpad_ref: VMEM (NB, H+2, W+2, Cin)   padded input scratch (compute dtype)
    mid_ref : VMEM (NB, H+2, W+2, Cmid)  padded conv1 activation scratch
    """
    NB, H, W, Cin = x_ref.shape
    Cmid = w1_ref.shape[2]
    Cout = w2_ref.shape[2]
    cdt = xpad_ref.dtype
    M = NB * H * W

    def zero_border(ref, C):
        # Only the 1-px halo needs zeroing; the interior is overwritten below.
        ref[:, 0:1, :, :] = jnp.zeros((NB, 1, W + 2, C), cdt)
        ref[:, H + 1:H + 2, :, :] = jnp.zeros((NB, 1, W + 2, C), cdt)
        ref[:, :, 0:1, :] = jnp.zeros((NB, H + 2, 1, C), cdt)
        ref[:, :, W + 1:W + 2, :] = jnp.zeros((NB, H + 2, 1, C), cdt)

    def conv3x3(pad_ref, w_ref, c_in, c_out):
        # 9 accumulating K=c_in MXU taps into one f32 accumulator
        # (no im2col lane-concat, no (M, 9*c_in) patch buffer).
        acc = jnp.zeros((M, c_out), jnp.float32)
        for kh in range(3):
            for kw in range(3):
                tap = pad_ref[:, kh:kh + H, kw:kw + W, :].reshape(M, c_in)
                acc = acc + jnp.dot(tap, w_ref[kh * 3 + kw],
                                    preferred_element_type=jnp.float32)
        return acc

    # ---------------- conv1 + bn1 + relu ----------------
    zero_border(xpad_ref, Cin)
    xpad_ref[:, 1:H + 1, 1:W + 1, :] = x_ref[...].astype(cdt)
    act = conv3x3(xpad_ref, w1_ref, Cin, Cmid)
    act = jnp.maximum(act + b1_ref[...], 0.0)                 # (M, Cmid) f32

    # -------- conv2 + bn2 + residual add + relu ----------
    zero_border(mid_ref, Cmid)
    mid_ref[:, 1:H + 1, 1:W + 1, :] = act.reshape(NB, H, W, Cmid).astype(cdt)
    out = conv3x3(mid_ref, w2_ref, Cmid, Cout) + b2_ref[...]  # (M, Cout) f32

    if lane_dense_out:
        # Lane-dense epilogue: W folded into the lane axis of res/out.
        out = out.reshape(NB, H, W * Cout) + res_ref[...].astype(jnp.float32)
        o_ref[...] = jnp.maximum(out, 0.0).astype(o_ref.dtype)
    else:
        out = out + res_ref[...].reshape(M, Cout).astype(jnp.float32)
        out = jnp.maximum(out, 0.0)
        o_ref[...] = out.reshape(NB, H, W, Cout).astype(o_ref.dtype)


def _basic_block_pallas(x, w1, b1, w2, b2, residual, *, batch_block,
                        compute_dtype, lane_dense_out):
    N, H, W, Cin = x.shape
    Cmid = w1.shape[2]
    Cout = w2.shape[2]
    NB = batch_block

    kernel = functools.partial(_basic_block_kernel,
                               lane_dense_out=lane_dense_out)

    if lane_dense_out:
        # Contiguous NHWC -> (N, H, W*C) is a free (metadata-only) reshape.
        res_in = residual.reshape(N, H, W * Cout)
        res_spec = pl.BlockSpec((NB, H, W * Cout), lambda n: (n, 0, 0))
        out_spec = pl.BlockSpec((NB, H, W * Cout), lambda n: (n, 0, 0))
        out_shape = jax.ShapeDtypeStruct((N, H, W * Cout), x.dtype)
    else:
        res_in = residual
        res_spec = pl.BlockSpec((NB, H, W, Cout), lambda n: (n, 0, 0, 0))
        out_spec = pl.BlockSpec((NB, H, W, Cout), lambda n: (n, 0, 0, 0))
        out_shape = jax.ShapeDtypeStruct((N, H, W, Cout), x.dtype)

    grid_spec = pltpu.PrefetchScalarGridSpec(
        num_scalar_prefetch=0,
        grid=(N // NB,),
        in_specs=[
            pl.BlockSpec((NB, H, W, Cin), lambda n: (n, 0, 0, 0)),
            # Grid-invariant weights / biases (double-buffered by default;
            # use pipeline_mode=pl.Buffered(1) for large channel counts).
            pl.BlockSpec((9, Cin, Cmid), lambda n: (0, 0, 0)),
            pl.BlockSpec((1, Cmid), lambda n: (0, 0)),
            pl.BlockSpec((9, Cmid, Cout), lambda n: (0, 0, 0)),
            pl.BlockSpec((1, Cout), lambda n: (0, 0)),
            res_spec,
        ],
        out_specs=out_spec,
        scratch_shapes=[
            pltpu.VMEM((NB, H + 2, W + 2, Cin), compute_dtype),
            pltpu.VMEM((NB, H + 2, W + 2, Cmid), compute_dtype),
        ],
    )
    out = pl.pallas_call(
        kernel,
        out_shape=out_shape,
        grid_spec=grid_spec,
        compiler_params=pltpu.CompilerParams(
            dimension_semantics=("parallel",)),
    )(x, w1, b1, w2, b2, res_in)
    return out.reshape(N, H, W, Cout)


def basic_block_forward(x, params, residual=None, *, batch_block=1,
                        compute_dtype=jnp.bfloat16, lane_dense_out=None):
    """Pallas BasicBlock.forward (stride=1, dilation=1), NHWC activations.

    x: (N, H, W, Cin); params["w1"]/["w2"]: HWIO (3, 3, Cin, Cout).
    batch_block images are folded into the matmul M dimension per grid step.
    """
    if residual is None:
        residual = x
    N, H, W, Cin = x.shape
    Cmid = params["w1"].shape[3]
    Cout = params["w2"].shape[3]
    if Cin != Cout or residual.shape != (N, H, W, Cout):
        # TODO(synk): downsample/projection residual branch not implemented.
        raise NotImplementedError("identity residual only (Cin == Cout, stride=1)")
    if N % batch_block != 0:
        raise ValueError("batch_block must divide N")
    eps = 1e-5

    # Fold BN (inference running-stats form) into conv weights + a f32 bias.
    s1 = params["bn1_gamma"] / jnp.sqrt(params["bn1_var"] + eps)
    b1 = (params["bn1_beta"] - params["bn1_mean"] * s1).reshape(1, Cmid)
    b1 = b1.astype(jnp.float32)
    s2 = params["bn2_gamma"] / jnp.sqrt(params["bn2_var"] + eps)
    b2 = (params["bn2_beta"] - params["bn2_mean"] * s2).reshape(1, Cout)
    b2 = b2.astype(jnp.float32)
    # HWIO -> (9, Cin, Cout), tap index t = kh*3 + kw (matches kernel taps).
    w1 = (params["w1"] * s1[None, None, None, :]).reshape(9, Cin, Cmid)
    w1 = w1.astype(compute_dtype)
    w2 = (params["w2"] * s2[None, None, None, :]).reshape(9, Cmid, Cout)
    w2 = w2.astype(compute_dtype)

    impl = functools.partial(_basic_block_pallas, x, w1, b1, w2, b2, residual,
                             batch_block=batch_block,
                             compute_dtype=compute_dtype)
    if lane_dense_out is not None:
        return impl(lane_dense_out=lane_dense_out)
    # Prefer the lane-dense output presentation; fall back to the plain NHWC
    # block if this Mosaic build rejects the minor-dim-merging relayout.
    try:
        out = impl(lane_dense_out=True)
        jax.block_until_ready(out)
        return out
    except Exception:
        return impl(lane_dense_out=False)


def _reference_forward(x, params, residual=None):
    """Pure-JAX reference for validation."""
    if residual is None:
        residual = x
    eps = 1e-5
    dn = ("NHWC", "HWIO", "NHWC")

    def conv(y, w):
        return jax.lax.conv_general_dilated(
            y, w, window_strides=(1, 1), padding="SAME",
            dimension_numbers=dn)

    def bn(y, g, b, m, v):
        return (y - m) / jnp.sqrt(v + eps) * g + b

    out = conv(x, params["w1"])
    out = bn(out, params["bn1_gamma"], params["bn1_beta"],
             params["bn1_mean"], params["bn1_var"])
    out = jnp.maximum(out, 0.0)
    out = conv(out, params["w2"])
    out = bn(out, params["bn2_gamma"], params["bn2_beta"],
             params["bn2_mean"], params["bn2_var"])
    out = out + residual
    return jnp.maximum(out, 0.0)


if __name__ == "__main__":
    # Shapes consistent with BasicBlock(inplanes=4, planes=4, stride=1).
    N, H, W = 2, 16, 16
    inplanes = planes = 4

    key = jax.random.PRNGKey(0)
    k = jax.random.split(key, 8)

    # NCHW input (PyTorch convention) -> NHWC kernel layout.
    x_nchw = jax.random.normal(k[0], (N, inplanes, H, W), jnp.float32)
    x = jnp.transpose(x_nchw, (0, 2, 3, 1))                 # NHWC

    params = {
        # HWIO conv weights (PyTorch OIHW would be permuted (2, 3, 1, 0)).
        "w1": 0.1 * jax.random.normal(k[1], (3, 3, inplanes, planes), jnp.float32),
        "w2": 0.1 * jax.random.normal(k[2], (3, 3, planes, planes), jnp.float32),
        "bn1_gamma": 1.0 + 0.1 * jax.random.normal(k[3], (planes,), jnp.float32),
        "bn1_beta": 0.1 * jax.random.normal(k[4], (planes,), jnp.float32),
        "bn1_mean": jnp.zeros((planes,), jnp.float32),
        "bn1_var": jnp.ones((planes,), jnp.float32),
        "bn2_gamma": 1.0 + 0.1 * jax.random.normal(k[5], (planes,), jnp.float32),
        "bn2_beta": 0.1 * jax.random.normal(k[6], (planes,), jnp.float32),
        "bn2_mean": jnp.zeros((planes,), jnp.float32),
        "bn2_var": jnp.ones((planes,), jnp.float32),
    }

    ref = jax.block_until_ready(_reference_forward(x, params))

    # Exact-precision path (f32 MXU operands), one image per grid step.
    out_f32 = jax.block_until_ready(
        basic_block_forward(x, params, batch_block=1,
                            compute_dtype=jnp.float32))
    assert out_f32.shape == (N, H, W, planes)
    np.testing.assert_allclose(np.asarray(out_f32), np.asarray(ref),
                               rtol=1e-4, atol=1e-4)

    # bf16-MXU path with both images folded into the matmul M dimension.
    out_bf16 = jax.block_until_ready(
        basic_block_forward(x, params, batch_block=2,
                            compute_dtype=jnp.bfloat16))
    assert out_bf16.shape == (N, H, W, planes)
    np.testing.assert_allclose(np.asarray(out_bf16), np.asarray(ref),
                               rtol=5e-2, atol=5e-2)

    print("KERNEL_OK")
</pallas_src>

<mosaic_0001>
module attributes {stable_mosaic.version = 11 : i64} {
  func.func @_basic_block_kernel(%arg0: i32, %arg1: memref<1x16x16x4xf32, #tpu.memory_space<vmem>>, %arg2: memref<9x4x4xf32, #tpu.memory_space<vmem>>, %arg3: memref<1x4xf32, #tpu.memory_space<vmem>>, %arg4: memref<9x4x4xf32, #tpu.memory_space<vmem>>, %arg5: memref<1x4xf32, #tpu.memory_space<vmem>>, %arg6: memref<1x16x64xf32, #tpu.memory_space<vmem>>, %arg7: memref<1x16x64xf32, #tpu.memory_space<vmem>>, %arg8: memref<1x18x18x4xf32, #tpu.memory_space<vmem>>, %arg9: memref<1x18x18x4xf32, #tpu.memory_space<vmem>>) attributes {dimension_semantics = [#tpu.dimension_semantics<parallel>], iteration_bounds = array<i64: 2>, scalar_prefetch = 0 : i64, scratch_operands = 2 : i64, tpu.core_type = #tpu.core_type<tc>, window_params = [{transform_indices = @transform_0, window_bounds = array<i64: 1, 16, 16, 4>}, {pipeline_mode = #tpu.pipeline_mode<synchronous>, transform_indices = @transform_1, window_bounds = array<i64: 9, 4, 4>}, {pipeline_mode = #tpu.pipeline_mode<synchronous>, transform_indices = @transform_2, window_bounds = array<i64: 1, 4>}, {pipeline_mode = #tpu.pipeline_mode<synchronous>, transform_indices = @transform_3, window_bounds = array<i64: 9, 4, 4>}, {pipeline_mode = #tpu.pipeline_mode<synchronous>, transform_indices = @transform_4, window_bounds = array<i64: 1, 4>}, {transform_indices = @transform_5, window_bounds = array<i64: 1, 16, 64>}, {transform_indices = @transform_6, window_bounds = array<i64: 1, 16, 64>}]} {
    %cst = arith.constant 0.000000e+00 : f32
    %0 = vector.broadcast %cst : f32 to vector<1x1x18x4xf32>
    %c0 = arith.constant 0 : index
    %c0_0 = arith.constant 0 : index
    %c0_1 = arith.constant 0 : index
    %c0_2 = arith.constant 0 : index
    %1 = vector.load %arg8[%c0, %c0_0, %c0_1, %c0_2] : memref<1x18x18x4xf32, #tpu.memory_space<vmem>>, vector<1x1x18x4xf32>
    tpu.vector_store %arg8[%c0, %c0_0, %c0_1, %c0_2], %0 {strides = array<i32>} : memref<1x18x18x4xf32, #tpu.memory_space<vmem>>, vector<1x1x18x4xf32>,
    %cst_3 = arith.constant 0.000000e+00 : f32
    %2 = vector.broadcast %cst_3 : f32 to vector<1x1x18x4xf32>
    %c0_4 = arith.constant 0 : index
    %c17 = arith.constant 17 : index
    %c0_5 = arith.constant 0 : index
    %c0_6 = arith.constant 0 : index
    %3 = vector.load %arg8[%c0_4, %c17, %c0_5, %c0_6] : memref<1x18x18x4xf32, #tpu.memory_space<vmem>>, vector<1x1x18x4xf32>
    tpu.vector_store %arg8[%c0_4, %c17, %c0_5, %c0_6], %2 {strides = array<i32>} : memref<1x18x18x4xf32, #tpu.memory_space<vmem>>, vector<1x1x18x4xf32>,
    %cst_7 = arith.constant 0.000000e+00 : f32
    %4 = vector.broadcast %cst_7 : f32 to vector<1x18x1x4xf32>
    %c0_8 = arith.constant 0 : index
    %c0_9 = arith.constant 0 : index
    %c0_10 = arith.constant 0 : index
    %c0_11 = arith.constant 0 : index
    %5 = vector.load %arg8[%c0_8, %c0_9, %c0_10, %c0_11] : memref<1x18x18x4xf32, #tpu.memory_space<vmem>>, vector<1x18x1x4xf32>
    tpu.vector_store %arg8[%c0_8, %c0_9, %c0_10, %c0_11], %4 {strides = array<i32>} : memref<1x18x18x4xf32, #tpu.memory_space<vmem>>, vector<1x18x1x4xf32>,
    %cst_12 = arith.constant 0.000000e+00 : f32
    %6 = vector.broadcast %cst_12 : f32 to vector<1x18x1x4xf32>
    %c0_13 = arith.constant 0 : index
    %c0_14 = arith.constant 0 : index
    %c17_15 = arith.constant 17 : index
    %c0_16 = arith.constant 0 : index
    %7 = vector.load %arg8[%c0_13, %c0_14, %c17_15, %c0_16] : memref<1x18x18x4xf32, #tpu.memory_space<vmem>>, vector<1x18x1x4xf32>
    tpu.vector_store %arg8[%c0_13, %c0_14, %c17_15, %c0_16], %6 {strides = array<i32>} : memref<1x18x18x4xf32, #tpu.memory_space<vmem>>, vector<1x18x1x4xf32>,
    %c0_17 = arith.constant 0 : index
    %c0_18 = arith.constant 0 : index
    %c0_19 = arith.constant 0 : index
    %c0_20 = arith.constant 0 : index
    %8 = vector.load %arg1[%c0_17, %c0_18, %c0_19, %c0_20] : memref<1x16x16x4xf32, #tpu.memory_space<vmem>>, vector<1x16x16x4xf32>
    %c0_21 = arith.constant 0 : index
    %c1 = arith.constant 1 : index
    %c1_22 = arith.constant 1 : index
    %c0_23 = arith.constant 0 : index
    %9 = vector.load %arg8[%c0_21, %c1, %c1_22, %c0_23] : memref<1x18x18x4xf32, #tpu.memory_space<vmem>>, vector<1x16x16x4xf32>
    tpu.vector_store %arg8[%c0_21, %c1, %c1_22, %c0_23], %8 {strides = array<i32>} : memref<1x18x18x4xf32, #tpu.memory_space<vmem>>, vector<1x16x16x4xf32>,
    %cst_24 = arith.constant 0.000000e+00 : f32
    %10 = vector.broadcast %cst_24 : f32 to vector<256x4xf32>
    %c0_25 = arith.constant 0 : index
    %c0_26 = arith.constant 0 : index
    %c0_27 = arith.constant 0 : index
    %c0_28 = arith.constant 0 : index
    %11 = vector.load %arg8[%c0_25, %c0_26, %c0_27, %c0_28] : memref<1x18x18x4xf32, #tpu.memory_space<vmem>>, vector<1x16x16x4xf32>
    %12 = vector.shape_cast %11 : vector<1x16x16x4xf32> to vector<256x4xf32>
    %c0_29 = arith.constant 0 : index
    %c0_30 = arith.constant 0 : index
    %c0_31 = arith.constant 0 : index
    %13 = vector.load %arg2[%c0_29, %c0_30, %c0_31] : memref<9x4x4xf32, #tpu.memory_space<vmem>>, vector<1x4x4xf32>
    %14 = vector.shape_cast %13 : vector<1x4x4xf32> to vector<4x4xf32>
    %cst_32 = arith.constant dense<0.000000e+00> : vector<256x4xf32>
    %15 = tpu.matmul %12, %14, %cst_32 {dimension_numbers = #tpu.dot_dimension_numbers<[1], [0], [0], [1], [0, 0, 1, 1], [], []>} : vector<256x4xf32>, vector<4x4xf32>, vector<256x4xf32> -> vector<256x4xf32>
    %16 = arith.addf %10, %15 : vector<256x4xf32>
    %c0_33 = arith.constant 0 : index
    %c0_34 = arith.constant 0 : index
    %c1_35 = arith.constant 1 : index
    %c0_36 = arith.constant 0 : index
    %17 = vector.load %arg8[%c0_33, %c0_34, %c1_35, %c0_36] : memref<1x18x18x4xf32, #tpu.memory_space<vmem>>, vector<1x16x16x4xf32>
    %18 = vector.shape_cast %17 : vector<1x16x16x4xf32> to vector<256x4xf32>
    %c1_37 = arith.constant 1 : index
    %c0_38 = arith.constant 0 : index
    %c0_39 = arith.constant 0 : index
    %19 = vector.load %arg2[%c1_37, %c0_38, %c0_39] : memref<9x4x4xf32, #tpu.memory_space<vmem>>, vector<1x4x4xf32>
    %20 = vector.shape_cast %19 : vector<1x4x4xf32> to vector<4x4xf32>
    %cst_40 = arith.constant dense<0.000000e+00> : vector<256x4xf32>
    %21 = tpu.matmul %18, %20, %cst_40 {dimension_numbers = #tpu.dot_dimension_numbers<[1], [0], [0], [1], [0, 0, 1, 1], [], []>} : vector<256x4xf32>, vector<4x4xf32>, vector<256x4xf32> -> vector<256x4xf32>
    %22 = arith.addf %16, %21 : vector<256x4xf32>
    %c0_41 = arith.constant 0 : index
    %c0_42 = arith.constant 0 : index
    %c2 = arith.constant 2 : index
    %c0_43 = arith.constant 0 : index
    %23 = vector.load %arg8[%c0_41, %c0_42, %c2, %c0_43] : memref<1x18x18x4xf32, #tpu.memory_space<vmem>>, vector<1x16x16x4xf32>
    %24 = vector.shape_cast %23 : vector<1x16x16x4xf32> to vector<256x4xf32>
    %c2_44 = arith.constant 2 : index
    %c0_45 = arith.constant 0 : index
    %c0_46 = arith.constant 0 : index
    %25 = vector.load %arg2[%c2_44, %c0_45, %c0_46] : memref<9x4x4xf32, #tpu.memory_space<vmem>>, vector<1x4x4xf32>
    %26 = vector.shape_cast %25 : vector<1x4x4xf32> to vector<4x4xf32>
    %cst_47 = arith.constant dense<0.000000e+00> : vector<256x4xf32>
    %27 = tpu.matmul %24, %26, %cst_47 {dimension_numbers = #tpu.dot_dimension_numbers<[1], [0], [0], [1], [0, 0, 1, 1], [], []>} : vector<256x4xf32>, vector<4x4xf32>, vector<256x4xf32> -> vector<256x4xf32>
    %28 = arith.addf %22, %27 : vector<256x4xf32>
    %c0_48 = arith.constant 0 : index
    %c1_49 = arith.constant 1 : index
    %c0_50 = arith.constant 0 : index
    %c0_51 = arith.constant 0 : index
    %29 = vector.load %arg8[%c0_48, %c1_49, %c0_50, %c0_51] : memref<1x18x18x4xf32, #tpu.memory_space<vmem>>, vector<1x16x16x4xf32>
    %30 = vector.shape_cast %29 : vector<1x16x16x4xf32> to vector<256x4xf32>
    %c3 = arith.constant 3 : index
    %c0_52 = arith.constant 0 : index
    %c0_53 = arith.constant 0 : index
    %31 = vector.load %arg2[%c3, %c0_52, %c0_53] : memref<9x4x4xf32, #tpu.memory_space<vmem>>, vector<1x4x4xf32>
    %32 = vector.shape_cast %31 : vector<1x4x4xf32> to vector<4x4xf32>
    %cst_54 = arith.constant dense<0.000000e+00> : vector<256x4xf32>
    %33 = tpu.matmul %30, %32, %cst_54 {dimension_numbers = #tpu.dot_dimension_numbers<[1], [0], [0], [1], [0, 0, 1, 1], [], []>} : vector<256x4xf32>, vector<4x4xf32>, vector<256x4xf32> -> vector<256x4xf32>
    %34 = arith.addf %28, %33 : vector<256x4xf32>
    %c0_55 = arith.constant 0 : index
    %c1_56 = arith.constant 1 : index
    %c1_57 = arith.constant 1 : index
    %c0_58 = arith.constant 0 : index
    %35 = vector.load %arg8[%c0_55, %c1_56, %c1_57, %c0_58] : memref<1x18x18x4xf32, #tpu.memory_space<vmem>>, vector<1x16x16x4xf32>
    %36 = vector.shape_cast %35 : vector<1x16x16x4xf32> to vector<256x4xf32>
    %c4 = arith.constant 4 : index
    %c0_59 = arith.constant 0 : index
    %c0_60 = arith.constant 0 : index
    %37 = vector.load %arg2[%c4, %c0_59, %c0_60] : memref<9x4x4xf32, #tpu.memory_space<vmem>>, vector<1x4x4xf32>
    %38 = vector.shape_cast %37 : vector<1x4x4xf32> to vector<4x4xf32>
    %cst_61 = arith.constant dense<0.000000e+00> : vector<256x4xf32>
    %39 = tpu.matmul %36, %38, %cst_61 {dimension_numbers = #tpu.dot_dimension_numbers<[1], [0], [0], [1], [0, 0, 1, 1], [], []>} : vector<256x4xf32>, vector<4x4xf32>, vector<256x4xf32> -> vector<256x4xf32>
    %40 = arith.addf %34, %39 : vector<256x4xf32>
    %c0_62 = arith.constant 0 : index
    %c1_63 = arith.constant 1 : index
    %c2_64 = arith.constant 2 : index
    %c0_65 = arith.constant 0 : index
    %41 = vector.load %arg8[%c0_62, %c1_63, %c2_64, %c0_65] : memref<1x18x18x4xf32, #tpu.memory_space<vmem>>, vector<1x16x16x4xf32>
    %42 = vector.shape_cast %41 : vector<1x16x16x4xf32> to vector<256x4xf32>
    %c5 = arith.constant 5 : index
    %c0_66 = arith.constant 0 : index
    %c0_67 = arith.constant 0 : index
    %43 = vector.load %arg2[%c5, %c0_66, %c0_67] : memref<9x4x4xf32, #tpu.memory_space<vmem>>, vector<1x4x4xf32>
    %44 = vector.shape_cast %43 : vector<1x4x4xf32> to vector<4x4xf32>
    %cst_68 = arith.constant dense<0.000000e+00> : vector<256x4xf32>
    %45 = tpu.matmul %42, %44, %cst_68 {dimension_numbers = #tpu.dot_dimension_numbers<[1], [0], [0], [1], [0, 0, 1, 1], [], []>} : vector<256x4xf32>, vector<4x4xf32>, vector<256x4xf32> -> vector<256x4xf32>
    %46 = arith.addf %40, %45 : vector<256x4xf32>
    %c0_69 = arith.constant 0 : index
    %c2_70 = arith.constant 2 : index
    %c0_71 = arith.constant 0 : index
    %c0_72 = arith.constant 0 : index
    %47 = vector.load %arg8[%c0_69, %c2_70, %c0_71, %c0_72] : memref<1x18x18x4xf32, #tpu.memory_space<vmem>>, vector<1x16x16x4xf32>
    %48 = vector.shape_cast %47 : vector<1x16x16x4xf32> to vector<256x4xf32>
    %c6 = arith.constant 6 : index
    %c0_73 = arith.constant 0 : index
    %c0_74 = arith.constant 0 : index
    %49 = vector.load %arg2[%c6, %c0_73, %c0_74] : memref<9x4x4xf32, #tpu.memory_space<vmem>>, vector<1x4x4xf32>
    %50 = vector.shape_cast %49 : vector<1x4x4xf32> to vector<4x4xf32>
    %cst_75 = arith.constant dense<0.000000e+00> : vector<256x4xf32>
    %51 = tpu.matmul %48, %50, %cst_75 {dimension_numbers = #tpu.dot_dimension_numbers<[1], [0], [0], [1], [0, 0, 1, 1], [], []>} : vector<256x4xf32>, vector<4x4xf32>, vector<256x4xf32> -> vector<256x4xf32>
    %52 = arith.addf %46, %51 : vector<256x4xf32>
    %c0_76 = arith.constant 0 : index
    %c2_77 = arith.constant 2 : index
    %c1_78 = arith.constant 1 : index
    %c0_79 = arith.constant 0 : index
    %53 = vector.load %arg8[%c0_76, %c2_77, %c1_78, %c0_79] : memref<1x18x18x4xf32, #tpu.memory_space<vmem>>, vector<1x16x16x4xf32>
    %54 = vector.shape_cast %53 : vector<1x16x16x4xf32> to vector<256x4xf32>
    %c7 = arith.constant 7 : index
    %c0_80 = arith.constant 0 : index
    %c0_81 = arith.constant 0 : index
    %55 = vector.load %arg2[%c7, %c0_80, %c0_81] : memref<9x4x4xf32, #tpu.memory_space<vmem>>, vector<1x4x4xf32>
    %56 = vector.shape_cast %55 : vector<1x4x4xf32> to vector<4x4xf32>
    %cst_82 = arith.constant dense<0.000000e+00> : vector<256x4xf32>
    %57 = tpu.matmul %54, %56, %cst_82 {dimension_numbers = #tpu.dot_dimension_numbers<[1], [0], [0], [1], [0, 0, 1, 1], [], []>} : vector<256x4xf32>, vector<4x4xf32>, vector<256x4xf32> -> vector<256x4xf32>
    %58 = arith.addf %52, %57 : vector<256x4xf32>
    %c0_83 = arith.constant 0 : index
    %c2_84 = arith.constant 2 : index
    %c2_85 = arith.constant 2 : index
    %c0_86 = arith.constant 0 : index
    %59 = vector.load %arg8[%c0_83, %c2_84, %c2_85, %c0_86] : memref<1x18x18x4xf32, #tpu.memory_space<vmem>>, vector<1x16x16x4xf32>
    %60 = vector.shape_cast %59 : vector<1x16x16x4xf32> to vector<256x4xf32>
    %c8 = arith.constant 8 : index
    %c0_87 = arith.constant 0 : index
    %c0_88 = arith.constant 0 : index
    %61 = vector.load %arg2[%c8, %c0_87, %c0_88] : memref<9x4x4xf32, #tpu.memory_space<vmem>>, vector<1x4x4xf32>
    %62 = vector.shape_cast %61 : vector<1x4x4xf32> to vector<4x4xf32>
    %cst_89 = arith.constant dense<0.000000e+00> : vector<256x4xf32>
    %63 = tpu.matmul %60, %62, %cst_89 {dimension_numbers = #tpu.dot_dimension_numbers<[1], [0], [0], [1], [0, 0, 1, 1], [], []>} : vector<256x4xf32>, vector<4x4xf32>, vector<256x4xf32> -> vector<256x4xf32>
    %64 = arith.addf %58, %63 : vector<256x4xf32>
    %c0_90 = arith.constant 0 : index
    %c0_91 = arith.constant 0 : index
    %65 = vector.load %arg3[%c0_90, %c0_91] : memref<1x4xf32, #tpu.memory_space<vmem>>, vector<1x4xf32>
    %66 = vector.broadcast %65 : vector<1x4xf32> to vector<256x4xf32>
    %67 = arith.addf %64, %66 : vector<256x4xf32>
    %cst_92 = arith.constant 0.000000e+00 : f32
    %68 = vector.broadcast %cst_92 : f32 to vector<256x4xf32>
    %69 = arith.maximumf %67, %68 : vector<256x4xf32>
    %cst_93 = arith.constant 0.000000e+00 : f32
    %70 = vector.broadcast %cst_93 : f32 to vector<1x1x18x4xf32>
    %c0_94 = arith.constant 0 : index
    %c0_95 = arith.constant 0 : index
    %c0_96 = arith.constant 0 : index
    %c0_97 = arith.constant 0 : index
    %71 = vector.load %arg9[%c0_94, %c0_95, %c0_96, %c0_97] : memref<1x18x18x4xf32, #tpu.memory_space<vmem>>, vector<1x1x18x4xf32>
    tpu.vector_store %arg9[%c0_94, %c0_95, %c0_96, %c0_97], %70 {strides = array<i32>} : memref<1x18x18x4xf32, #tpu.memory_space<vmem>>, vector<1x1x18x4xf32>,
    %cst_98 = arith.constant 0.000000e+00 : f32
    %72 = vector.broadcast %cst_98 : f32 to vector<1x1x18x4xf32>
    %c0_99 = arith.constant 0 : index
    %c17_100 = arith.constant 17 : index
    %c0_101 = arith.constant 0 : index
    %c0_102 = arith.constant 0 : index
    %73 = vector.load %arg9[%c0_99, %c17_100, %c0_101, %c0_102] : memref<1x18x18x4xf32, #tpu.memory_space<vmem>>, vector<1x1x18x4xf32>
    tpu.vector_store %arg9[%c0_99, %c17_100, %c0_101, %c0_102], %72 {strides = array<i32>} : memref<1x18x18x4xf32, #tpu.memory_space<vmem>>, vector<1x1x18x4xf32>,
    %cst_103 = arith.constant 0.000000e+00 : f32
    %74 = vector.broadcast %cst_103 : f32 to vector<1x18x1x4xf32>
    %c0_104 = arith.constant 0 : index
    %c0_105 = arith.constant 0 : index
    %c0_106 = arith.constant 0 : index
    %c0_107 = arith.constant 0 : index
    %75 = vector.load %arg9[%c0_104, %c0_105, %c0_106, %c0_107] : memref<1x18x18x4xf32, #tpu.memory_space<vmem>>, vector<1x18x1x4xf32>
    tpu.vector_store %arg9[%c0_104, %c0_105, %c0_106, %c0_107], %74 {strides = array<i32>} : memref<1x18x18x4xf32, #tpu.memory_space<vmem>>, vector<1x18x1x4xf32>,
    %cst_108 = arith.constant 0.000000e+00 : f32
    %76 = vector.broadcast %cst_108 : f32 to vector<1x18x1x4xf32>
    %c0_109 = arith.constant 0 : index
    %c0_110 = arith.constant 0 : index
    %c17_111 = arith.constant 17 : index
    %c0_112 = arith.constant 0 : index
    %77 = vector.load %arg9[%c0_109, %c0_110, %c17_111, %c0_112] : memref<1x18x18x4xf32, #tpu.memory_space<vmem>>, vector<1x18x1x4xf32>
    tpu.vector_store %arg9[%c0_109, %c0_110, %c17_111, %c0_112], %76 {strides = array<i32>} : memref<1x18x18x4xf32, #tpu.memory_space<vmem>>, vector<1x18x1x4xf32>,
    %78 = vector.shape_cast %69 : vector<256x4xf32> to vector<1x16x16x4xf32>
    %c0_113 = arith.constant 0 : index
    %c1_114 = arith.constant 1 : index
    %c1_115 = arith.constant 1 : index
    %c0_116 = arith.constant 0 : index
    %79 = vector.load %arg9[%c0_113, %c1_114, %c1_115, %c0_116] : memref<1x18x18x4xf32, #tpu.memory_space<vmem>>, vector<1x16x16x4xf32>
    tpu.vector_store %arg9[%c0_113, %c1_114, %c1_115, %c0_116], %78 {strides = array<i32>} : memref<1x18x18x4xf32, #tpu.memory_space<vmem>>, vector<1x16x16x4xf32>,
    %cst_117 = arith.constant 0.000000e+00 : f32
    %80 = vector.broadcast %cst_117 : f32 to vector<256x4xf32>
    %c0_118 = arith.constant 0 : index
    %c0_119 = arith.constant 0 : index
    %c0_120 = arith.constant 0 : index
    %c0_121 = arith.constant 0 : index
    %81 = vector.load %arg9[%c0_118, %c0_119, %c0_120, %c0_121] : memref<1x18x18x4xf32, #tpu.memory_space<vmem>>, vector<1x16x16x4xf32>
    %82 = vector.shape_cast %81 : vector<1x16x16x4xf32> to vector<256x4xf32>
    %c0_122 = arith.constant 0 : index
    %c0_123 = arith.constant 0 : index
    %c0_124 = arith.constant 0 : index
    %83 = vector.load %arg4[%c0_122, %c0_123, %c0_124] : memref<9x4x4xf32, #tpu.memory_space<vmem>>, vector<1x4x4xf32>
    %84 = vector.shape_cast %83 : vector<1x4x4xf32> to vector<4x4xf32>
    %cst_125 = arith.constant dense<0.000000e+00> : vector<256x4xf32>
    %85 = tpu.matmul %82, %84, %cst_125 {dimension_numbers = #tpu.dot_dimension_numbers<[1], [0], [0], [1], [0, 0, 1, 1], [], []>} : vector<256x4xf32>, vector<4x4xf32>, vector<256x4xf32> -> vector<256x4xf32>
    %86 = arith.addf %80, %85 : vector<256x4xf32>
    %c0_126 = arith.constant 0 : index
    %c0_127 = arith.constant 0 : index
    %c1_128 = arith.constant 1 : index
    %c0_129 = arith.constant 0 : index
    %87 = vector.load %arg9[%c0_126, %c0_127, %c1_128, %c0_129] : memref<1x18x18x4xf32, #tpu.memory_space<vmem>>, vector<1x16x16x4xf32>
    %88 = vector.shape_cast %87 : vector<1x16x16x4xf32> to vector<256x4xf32>
    %c1_130 = arith.constant 1 : index
    %c0_131 = arith.constant 0 : index
    %c0_132 = arith.constant 0 : index
    %89 = vector.load %arg4[%c1_130, %c0_131, %c0_132] : memref<9x4x4xf32, #tpu.memory_space<vmem>>, vector<1x4x4xf32>
    %90 = vector.shape_cast %89 : vector<1x4x4xf32> to vector<4x4xf32>
    %cst_133 = arith.constant dense<0.000000e+00> : vector<256x4xf32>
    %91 = tpu.matmul %88, %90, %cst_133 {dimension_numbers = #tpu.dot_dimension_numbers<[1], [0], [0], [1], [0, 0, 1, 1], [], []>} : vector<256x4xf32>, vector<4x4xf32>, vector<256x4xf32> -> vector<256x4xf32>
    %92 = arith.addf %86, %91 : vector<256x4xf32>
    %c0_134 = arith.constant 0 : index
    %c0_135 = arith.constant 0 : index
    %c2_136 = arith.constant 2 : index
    %c0_137 = arith.constant 0 : index
    %93 = vector.load %arg9[%c0_134, %c0_135, %c2_136, %c0_137] : memref<1x18x18x4xf32, #tpu.memory_space<vmem>>, vector<1x16x16x4xf32>
    %94 = vector.shape_cast %93 : vector<1x16x16x4xf32> to vector<256x4xf32>
    %c2_138 = arith.constant 2 : index
    %c0_139 = arith.constant 0 : index
    %c0_140 = arith.constant 0 : index
    %95 = vector.load %arg4[%c2_138, %c0_139, %c0_140] : memref<9x4x4xf32, #tpu.memory_space<vmem>>, vector<1x4x4xf32>
    %96 = vector.shape_cast %95 : vector<1x4x4xf32> to vector<4x4xf32>
    %cst_141 = arith.constant dense<0.000000e+00> : vector<256x4xf32>
    %97 = tpu.matmul %94, %96, %cst_141 {dimension_numbers = #tpu.dot_dimension_numbers<[1], [0], [0], [1], [0, 0, 1, 1], [], []>} : vector<256x4xf32>, vector<4x4xf32>, vector<256x4xf32> -> vector<256x4xf32>
    %98 = arith.addf %92, %97 : vector<256x4xf32>
    %c0_142 = arith.constant 0 : index
    %c1_143 = arith.constant 1 : index
    %c0_144 = arith.constant 0 : index
    %c0_145 = arith.constant 0 : index
    %99 = vector.load %arg9[%c0_142, %c1_143, %c0_144, %c0_145] : memref<1x18x18x4xf32, #tpu.memory_space<vmem>>, vector<1x16x16x4xf32>
    %100 = vector.shape_cast %99 : vector<1x16x16x4xf32> to vector<256x4xf32>
    %c3_146 = arith.constant 3 : index
    %c0_147 = arith.constant 0 : index
    %c0_148 = arith.constant 0 : index
    %101 = vector.load %arg4[%c3_146, %c0_147, %c0_148] : memref<9x4x4xf32, #tpu.memory_space<vmem>>, vector<1x4x4xf32>
    %102 = vector.shape_cast %101 : vector<1x4x4xf32> to vector<4x4xf32>
    %cst_149 = arith.constant dense<0.000000e+00> : vector<256x4xf32>
    %103 = tpu.matmul %100, %102, %cst_149 {dimension_numbers = #tpu.dot_dimension_numbers<[1], [0], [0], [1], [0, 0, 1, 1], [], []>} : vector<256x4xf32>, vector<4x4xf32>, vector<256x4xf32> -> vector<256x4xf32>
    %104 = arith.addf %98, %103 : vector<256x4xf32>
    %c0_150 = arith.constant 0 : index
    %c1_151 = arith.constant 1 : index
    %c1_152 = arith.constant 1 : index
    %c0_153 = arith.constant 0 : index
    %105 = vector.load %arg9[%c0_150, %c1_151, %c1_152, %c0_153] : memref<1x18x18x4xf32, #tpu.memory_space<vmem>>, vector<1x16x16x4xf32>
    %106 = vector.shape_cast %105 : vector<1x16x16x4xf32> to vector<256x4xf32>
    %c4_154 = arith.constant 4 : index
    %c0_155 = arith.constant 0 : index
    %c0_156 = arith.constant 0 : index
    %107 = vector.load %arg4[%c4_154, %c0_155, %c0_156] : memref<9x4x4xf32, #tpu.memory_space<vmem>>, vector<1x4x4xf32>
    %108 = vector.shape_cast %107 : vector<1x4x4xf32> to vector<4x4xf32>
    %cst_157 = arith.constant dense<0.000000e+00> : vector<256x4xf32>
    %109 = tpu.matmul %106, %108, %cst_157 {dimension_numbers = #tpu.dot_dimension_numbers<[1], [0], [0], [1], [0, 0, 1, 1], [], []>} : vector<256x4xf32>, vector<4x4xf32>, vector<256x4xf32> -> vector<256x4xf32>
    %110 = arith.addf %104, %109 : vector<256x4xf32>
    %c0_158 = arith.constant 0 : index
    %c1_159 = arith.constant 1 : index
    %c2_160 = arith.constant 2 : index
    %c0_161 = arith.constant 0 : index
    %111 = vector.load %arg9[%c0_158, %c1_159, %c2_160, %c0_161] : memref<1x18x18x4xf32, #tpu.memory_space<vmem>>, vector<1x16x16x4xf32>
    %112 = vector.shape_cast %111 : vector<1x16x16x4xf32> to vector<256x4xf32>
    %c5_162 = arith.constant 5 : index
    %c0_163 = arith.constant 0 : index
    %c0_164 = arith.constant 0 : index
    %113 = vector.load %arg4[%c5_162, %c0_163, %c0_164] : memref<9x4x4xf32, #tpu.memory_space<vmem>>, vector<1x4x4xf32>
    %114 = vector.shape_cast %113 : vector<1x4x4xf32> to vector<4x4xf32>
    %cst_165 = arith.constant dense<0.000000e+00> : vector<256x4xf32>
    %115 = tpu.matmul %112, %114, %cst_165 {dimension_numbers = #tpu.dot_dimension_numbers<[1], [0], [0], [1], [0, 0, 1, 1], [], []>} : vector<256x4xf32>, vector<4x4xf32>, vector<256x4xf32> -> vector<256x4xf32>
    %116 = arith.addf %110, %115 : vector<256x4xf32>
    %c0_166 = arith.constant 0 : index
    %c2_167 = arith.constant 2 : index
    %c0_168 = arith.constant 0 : index
    %c0_169 = arith.constant 0 : index
    %117 = vector.load %arg9[%c0_166, %c2_167, %c0_168, %c0_169] : memref<1x18x18x4xf32, #tpu.memory_space<vmem>>, vector<1x16x16x4xf32>
    %118 = vector.shape_cast %117 : vector<1x16x16x4xf32> to vector<256x4xf32>
    %c6_170 = arith.constant 6 : index
    %c0_171 = arith.constant 0 : index
    %c0_172 = arith.constant 0 : index
    %119 = vector.load %arg4[%c6_170, %c0_171, %c0_172] : memref<9x4x4xf32, #tpu.memory_space<vmem>>, vector<1x4x4xf32>
    %120 = vector.shape_cast %119 : vector<1x4x4xf32> to vector<4x4xf32>
    %cst_173 = arith.constant dense<0.000000e+00> : vector<256x4xf32>
    %121 = tpu.matmul %118, %120, %cst_173 {dimension_numbers = #tpu.dot_dimension_numbers<[1], [0], [0], [1], [0, 0, 1, 1], [], []>} : vector<256x4xf32>, vector<4x4xf32>, vector<256x4xf32> -> vector<256x4xf32>
    %122 = arith.addf %116, %121 : vector<256x4xf32>
    %c0_174 = arith.constant 0 : index
    %c2_175 = arith.constant 2 : index
    %c1_176 = arith.constant 1 : index
    %c0_177 = arith.constant 0 : index
    %123 = vector.load %arg9[%c0_174, %c2_175, %c1_176, %c0_177] : memref<1x18x18x4xf32, #tpu.memory_space<vmem>>, vector<1x16x16x4xf32>
    %124 = vector.shape_cast %123 : vector<1x16x16x4xf32> to vector<256x4xf32>
    %c7_178 = arith.constant 7 : index
    %c0_179 = arith.constant 0 : index
    %c0_180 = arith.constant 0 : index
    %125 = vector.load %arg4[%c7_178, %c0_179, %c0_180] : memref<9x4x4xf32, #tpu.memory_space<vmem>>, vector<1x4x4xf32>
    %126 = vector.shape_cast %125 : vector<1x4x4xf32> to vector<4x4xf32>
    %cst_181 = arith.constant dense<0.000000e+00> : vector<256x4xf32>
    %127 = tpu.matmul %124, %126, %cst_181 {dimension_numbers = #tpu.dot_dimension_numbers<[1], [0], [0], [1], [0, 0, 1, 1], [], []>} : vector<256x4xf32>, vector<4x4xf32>, vector<256x4xf32> -> vector<256x4xf32>
    %128 = arith.addf %122, %127 : vector<256x4xf32>
    %c0_182 = arith.constant 0 : index
    %c2_183 = arith.constant 2 : index
    %c2_184 = arith.constant 2 : index
    %c0_185 = arith.constant 0 : index
    %129 = vector.load %arg9[%c0_182, %c2_183, %c2_184, %c0_185] : memref<1x18x18x4xf32, #tpu.memory_space<vmem>>, vector<1x16x16x4xf32>
    %130 = vector.shape_cast %129 : vector<1x16x16x4xf32> to vector<256x4xf32>
    %c8_186 = arith.constant 8 : index
    %c0_187 = arith.constant 0 : index
    %c0_188 = arith.constant 0 : index
    %131 = vector.load %arg4[%c8_186, %c0_187, %c0_188] : memref<9x4x4xf32, #tpu.memory_space<vmem>>, vector<1x4x4xf32>
    %132 = vector.shape_cast %131 : vector<1x4x4xf32> to vector<4x4xf32>
    %cst_189 = arith.constant dense<0.000000e+00> : vector<256x4xf32>
    %133 = tpu.matmul %130, %132, %cst_189 {dimension_numbers = #tpu.dot_dimension_numbers<[1], [0], [0], [1], [0, 0, 1, 1], [], []>} : vector<256x4xf32>, vector<4x4xf32>, vector<256x4xf32> -> vector<256x4xf32>
    %134 = arith.addf %128, %133 : vector<256x4xf32>
    %c0_190 = arith.constant 0 : index
    %c0_191 = arith.constant 0 : index
    %135 = vector.load %arg5[%c0_190, %c0_191] : memref<1x4xf32, #tpu.memory_space<vmem>>, vector<1x4xf32>
    %136 = vector.broadcast %135 : vector<1x4xf32> to vector<256x4xf32>
    %137 = arith.addf %134, %136 : vector<256x4xf32>
    %138 = vector.shape_cast %137 : vector<256x4xf32> to vector<1x16x64xf32>
    %c0_192 = arith.constant 0 : index
    %c0_193 = arith.constant 0 : index
    %c0_194 = arith.constant 0 : index
    %139 = vector.load %arg6[%c0_192, %c0_193, %c0_194] : memref<1x16x64xf32, #tpu.memory_space<vmem>>, vector<1x16x64xf32>
    %140 = arith.addf %138, %139 : vector<1x16x64xf32>
    %cst_195 = arith.constant 0.000000e+00 : f32
    %141 = vector.broadcast %cst_195 : f32 to vector<1x16x64xf32>
    %142 = arith.maximumf %140, %141 : vector<1x16x64xf32>
    %c0_196 = arith.constant 0 : index
    %c0_197 = arith.constant 0 : index
    %c0_198 = arith.constant 0 : index
    %143 = vector.load %arg7[%c0_196, %c0_197, %c0_198] : memref<1x16x64xf32, #tpu.memory_space<vmem>>, vector<1x16x64xf32>
    tpu.vector_store %arg7[%c0_196, %c0_197, %c0_198], %142 {strides = array<i32>} : memref<1x16x64xf32, #tpu.memory_space<vmem>>, vector<1x16x64xf32>,
    return
  }
  func.func @transform_0(%arg0: i32) -> (i32, i32, i32, i32) {
    %c0_i32 = arith.constant 0 : i32
    %c0_i32_0 = arith.constant 0 : i32
    %c0_i32_1 = arith.constant 0 : i32
    %c0_i32_2 = arith.constant 0 : i32
    return %arg0, %c0_i32, %c0_i32_0, %c0_i32_1 : i32, i32, i32, i32
  }
  func.func @transform_1(%arg0: i32) -> (i32, i32, i32) {
    %c0_i32 = arith.constant 0 : i32
    %c0_i32_0 = arith.constant 0 : i32
    %c0_i32_1 = arith.constant 0 : i32
    %c0_i32_2 = arith.constant 0 : i32
    return %c0_i32, %c0_i32_0, %c0_i32_1 : i32, i32, i32
  }
  func.func @transform_2(%arg0: i32) -> (i32, i32) {
    %c0_i32 = arith.constant 0 : i32
    %c0_i32_0 = arith.constant 0 : i32
    %c0_i32_1 = arith.constant 0 : i32
    return %c0_i32, %c0_i32_0 : i32, i32
  }
  func.func @transform_3(%arg0: i32) -> (i32, i32, i32) {
    %c0_i32 = arith.constant 0 : i32
    %c0_i32_0 = arith.constant 0 : i32
    %c0_i32_1 = arith.constant 0 : i32
    %c0_i32_2 = arith.constant 0 : i32
    return %c0_i32, %c0_i32_0, %c0_i32_1 : i32, i32, i32
  }
  func.func @transform_4(%arg0: i32) -> (i32, i32) {
    %c0_i32 = arith.constant 0 : i32
    %c0_i32_0 = arith.constant 0 : i32
    %c0_i32_1 = arith.constant 0 : i32
    return %c0_i32, %c0_i32_0 : i32, i32
  }
  func.func @transform_5(%arg0: i32) -> (i32, i32, i32) {
    %c0_i32 = arith.constant 0 : i32
    %c0_i32_0 = arith.constant 0 : i32
    %c0_i32_1 = arith.constant 0 : i32
    return %arg0, %c0_i32, %c0_i32_0 : i32, i32, i32
  }
  func.func @transform_6(%arg0: i32) -> (i32, i32, i32) {
    %c0_i32 = arith.constant 0 : i32
    %c0_i32_0 = arith.constant 0 : i32
    %c0_i32_1 = arith.constant 0 : i32
    return %arg0, %c0_i32, %c0_i32_0 : i32, i32, i32
  }
}

module attributes {stable_mosaic.version = 11 : i64} {
  func.func @_basic_block_kernel(%arg0: i32, %arg1: memref<1x16x16x4xf32, #tpu.memory_space<vmem>>, %arg2: memref<9x4x4xf32, #tpu.memory_space<vmem>>, %arg3: memref<1x4xf32, #tpu.memory_space<vmem>>, %arg4: memref<9x4x4xf32, #tpu.memory_space<vmem>>, %arg5: memref<1x4xf32, #tpu.memory_space<vmem>>, %arg6: memref<1x16x16x4xf32, #tpu.memory_space<vmem>>, %arg7: memref<1x16x16x4xf32, #tpu.memory_space<vmem>>, %arg8: memref<1x18x18x4xf32, #tpu.memory_space<vmem>>, %arg9: memref<1x18x18x4xf32, #tpu.memory_space<vmem>>) attributes {dimension_semantics = [#tpu.dimension_semantics<parallel>], iteration_bounds = array<i64: 2>, scalar_prefetch = 0 : i64, scratch_operands = 2 : i64, tpu.core_type = #tpu.core_type<tc>, window_params = [{transform_indices = @transform_0, window_bounds = array<i64: 1, 16, 16, 4>}, {pipeline_mode = #tpu.pipeline_mode<synchronous>, transform_indices = @transform_1, window_bounds = array<i64: 9, 4, 4>}, {pipeline_mode = #tpu.pipeline_mode<synchronous>, transform_indices = @transform_2, window_bounds = array<i64: 1, 4>}, {pipeline_mode = #tpu.pipeline_mode<synchronous>, transform_indices = @transform_3, window_bounds = array<i64: 9, 4, 4>}, {pipeline_mode = #tpu.pipeline_mode<synchronous>, transform_indices = @transform_4, window_bounds = array<i64: 1, 4>}, {transform_indices = @transform_5, window_bounds = array<i64: 1, 16, 16, 4>}, {transform_indices = @transform_6, window_bounds = array<i64: 1, 16, 16, 4>}]} {
    %cst = arith.constant 0.000000e+00 : f32
    %0 = vector.broadcast %cst : f32 to vector<1x1x18x4xf32>
    %c0 = arith.constant 0 : index
    %c0_0 = arith.constant 0 : index
    %c0_1 = arith.constant 0 : index
    %c0_2 = arith.constant 0 : index
    %1 = vector.load %arg8[%c0, %c0_0, %c0_1, %c0_2] : memref<1x18x18x4xf32, #tpu.memory_space<vmem>>, vector<1x1x18x4xf32>
    tpu.vector_store %arg8[%c0, %c0_0, %c0_1, %c0_2], %0 {strides = array<i32>} : memref<1x18x18x4xf32, #tpu.memory_space<vmem>>, vector<1x1x18x4xf32>,
    %cst_3 = arith.constant 0.000000e+00 : f32
    %2 = vector.broadcast %cst_3 : f32 to vector<1x1x18x4xf32>
    %c0_4 = arith.constant 0 : index
    %c17 = arith.constant 17 : index
    %c0_5 = arith.constant 0 : index
    %c0_6 = arith.constant 0 : index
    %3 = vector.load %arg8[%c0_4, %c17, %c0_5, %c0_6] : memref<1x18x18x4xf32, #tpu.memory_space<vmem>>, vector<1x1x18x4xf32>
    tpu.vector_store %arg8[%c0_4, %c17, %c0_5, %c0_6], %2 {strides = array<i32>} : memref<1x18x18x4xf32, #tpu.memory_space<vmem>>, vector<1x1x18x4xf32>,
    %cst_7 = arith.constant 0.000000e+00 : f32
    %4 = vector.broadcast %cst_7 : f32 to vector<1x18x1x4xf32>
    %c0_8 = arith.constant 0 : index
    %c0_9 = arith.constant 0 : index
    %c0_10 = arith.constant 0 : index
    %c0_11 = arith.constant 0 : index
    %5 = vector.load %arg8[%c0_8, %c0_9, %c0_10, %c0_11] : memref<1x18x18x4xf32, #tpu.memory_space<vmem>>, vector<1x18x1x4xf32>
    tpu.vector_store %arg8[%c0_8, %c0_9, %c0_10, %c0_11], %4 {strides = array<i32>} : memref<1x18x18x4xf32, #tpu.memory_space<vmem>>, vector<1x18x1x4xf32>,
    %cst_12 = arith.constant 0.000000e+00 : f32
    %6 = vector.broadcast %cst_12 : f32 to vector<1x18x1x4xf32>
    %c0_13 = arith.constant 0 : index
    %c0_14 = arith.constant 0 : index
    %c17_15 = arith.constant 17 : index
    %c0_16 = arith.constant 0 : index
    %7 = vector.load %arg8[%c0_13, %c0_14, %c17_15, %c0_16] : memref<1x18x18x4xf32, #tpu.memory_space<vmem>>, vector<1x18x1x4xf32>
    tpu.vector_store %arg8[%c0_13, %c0_14, %c17_15, %c0_16], %6 {strides = array<i32>} : memref<1x18x18x4xf32, #tpu.memory_space<vmem>>, vector<1x18x1x4xf32>,
    %c0_17 = arith.constant 0 : index
    %c0_18 = arith.constant 0 : index
    %c0_19 = arith.constant 0 : index
    %c0_20 = arith.constant 0 : index
    %8 = vector.load %arg1[%c0_17, %c0_18, %c0_19, %c0_20] : memref<1x16x16x4xf32, #tpu.memory_space<vmem>>, vector<1x16x16x4xf32>
    %c0_21 = arith.constant 0 : index
    %c1 = arith.constant 1 : index
    %c1_22 = arith.constant 1 : index
    %c0_23 = arith.constant 0 : index
    %9 = vector.load %arg8[%c0_21, %c1, %c1_22, %c0_23] : memref<1x18x18x4xf32, #tpu.memory_space<vmem>>, vector<1x16x16x4xf32>
    tpu.vector_store %arg8[%c0_21, %c1, %c1_22, %c0_23], %8 {strides = array<i32>} : memref<1x18x18x4xf32, #tpu.memory_space<vmem>>, vector<1x16x16x4xf32>,
    %cst_24 = arith.constant 0.000000e+00 : f32
    %10 = vector.broadcast %cst_24 : f32 to vector<256x4xf32>
    %c0_25 = arith.constant 0 : index
    %c0_26 = arith.constant 0 : index
    %c0_27 = arith.constant 0 : index
    %c0_28 = arith.constant 0 : index
    %11 = vector.load %arg8[%c0_25, %c0_26, %c0_27, %c0_28] : memref<1x18x18x4xf32, #tpu.memory_space<vmem>>, vector<1x16x16x4xf32>
    %12 = vector.shape_cast %11 : vector<1x16x16x4xf32> to vector<256x4xf32>
    %c0_29 = arith.constant 0 : index
    %c0_30 = arith.constant 0 : index
    %c0_31 = arith.constant 0 : index
    %13 = vector.load %arg2[%c0_29, %c0_30, %c0_31] : memref<9x4x4xf32, #tpu.memory_space<vmem>>, vector<1x4x4xf32>
    %14 = vector.shape_cast %13 : vector<1x4x4xf32> to vector<4x4xf32>
    %cst_32 = arith.constant dense<0.000000e+00> : vector<256x4xf32>
    %15 = tpu.matmul %12, %14, %cst_32 {dimension_numbers = #tpu.dot_dimension_numbers<[1], [0], [0], [1], [0, 0, 1, 1], [], []>} : vector<256x4xf32>, vector<4x4xf32>, vector<256x4xf32> -> vector<256x4xf32>
    %16 = arith.addf %10, %15 : vector<256x4xf32>
    %c0_33 = arith.constant 0 : index
    %c0_34 = arith.constant 0 : index
    %c1_35 = arith.constant 1 : index
    %c0_36 = arith.constant 0 : index
    %17 = vector.load %arg8[%c0_33, %c0_34, %c1_35, %c0_36] : memref<1x18x18x4xf32, #tpu.memory_space<vmem>>, vector<1x16x16x4xf32>
    %18 = vector.shape_cast %17 : vector<1x16x16x4xf32> to vector<256x4xf32>
    %c1_37 = arith.constant 1 : index
    %c0_38 = arith.constant 0 : index
    %c0_39 = arith.constant 0 : index
    %19 = vector.load %arg2[%c1_37, %c0_38, %c0_39] : memref<9x4x4xf32, #tpu.memory_space<vmem>>, vector<1x4x4xf32>
    %20 = vector.shape_cast %19 : vector<1x4x4xf32> to vector<4x4xf32>
    %cst_40 = arith.constant dense<0.000000e+00> : vector<256x4xf32>
    %21 = tpu.matmul %18, %20, %cst_40 {dimension_numbers = #tpu.dot_dimension_numbers<[1], [0], [0], [1], [0, 0, 1, 1], [], []>} : vector<256x4xf32>, vector<4x4xf32>, vector<256x4xf32> -> vector<256x4xf32>
    %22 = arith.addf %16, %21 : vector<256x4xf32>
    %c0_41 = arith.constant 0 : index
    %c0_42 = arith.constant 0 : index
    %c2 = arith.constant 2 : index
    %c0_43 = arith.constant 0 : index
    %23 = vector.load %arg8[%c0_41, %c0_42, %c2, %c0_43] : memref<1x18x18x4xf32, #tpu.memory_space<vmem>>, vector<1x16x16x4xf32>
    %24 = vector.shape_cast %23 : vector<1x16x16x4xf32> to vector<256x4xf32>
    %c2_44 = arith.constant 2 : index
    %c0_45 = arith.constant 0 : index
    %c0_46 = arith.constant 0 : index
    %25 = vector.load %arg2[%c2_44, %c0_45, %c0_46] : memref<9x4x4xf32, #tpu.memory_space<vmem>>, vector<1x4x4xf32>
    %26 = vector.shape_cast %25 : vector<1x4x4xf32> to vector<4x4xf32>
    %cst_47 = arith.constant dense<0.000000e+00> : vector<256x4xf32>
    %27 = tpu.matmul %24, %26, %cst_47 {dimension_numbers = #tpu.dot_dimension_numbers<[1], [0], [0], [1], [0, 0, 1, 1], [], []>} : vector<256x4xf32>, vector<4x4xf32>, vector<256x4xf32> -> vector<256x4xf32>
    %28 = arith.addf %22, %27 : vector<256x4xf32>
    %c0_48 = arith.constant 0 : index
    %c1_49 = arith.constant 1 : index
    %c0_50 = arith.constant 0 : index
    %c0_51 = arith.constant 0 : index
    %29 = vector.load %arg8[%c0_48, %c1_49, %c0_50, %c0_51] : memref<1x18x18x4xf32, #tpu.memory_space<vmem>>, vector<1x16x16x4xf32>
    %30 = vector.shape_cast %29 : vector<1x16x16x4xf32> to vector<256x4xf32>
    %c3 = arith.constant 3 : index
    %c0_52 = arith.constant 0 : index
    %c0_53 = arith.constant 0 : index
    %31 = vector.load %arg2[%c3, %c0_52, %c0_53] : memref<9x4x4xf32, #tpu.memory_space<vmem>>, vector<1x4x4xf32>
    %32 = vector.shape_cast %31 : vector<1x4x4xf32> to vector<4x4xf32>
    %cst_54 = arith.constant dense<0.000000e+00> : vector<256x4xf32>
    %33 = tpu.matmul %30, %32, %cst_54 {dimension_numbers = #tpu.dot_dimension_numbers<[1], [0], [0], [1], [0, 0, 1, 1], [], []>} : vector<256x4xf32>, vector<4x4xf32>, vector<256x4xf32> -> vector<256x4xf32>
    %34 = arith.addf %28, %33 : vector<256x4xf32>
    %c0_55 = arith.constant 0 : index
    %c1_56 = arith.constant 1 : index
    %c1_57 = arith.constant 1 : index
    %c0_58 = arith.constant 0 : index
    %35 = vector.load %arg8[%c0_55, %c1_56, %c1_57, %c0_58] : memref<1x18x18x4xf32, #tpu.memory_space<vmem>>, vector<1x16x16x4xf32>
    %36 = vector.shape_cast %35 : vector<1x16x16x4xf32> to vector<256x4xf32>
    %c4 = arith.constant 4 : index
    %c0_59 = arith.constant 0 : index
    %c0_60 = arith.constant 0 : index
    %37 = vector.load %arg2[%c4, %c0_59, %c0_60] : memref<9x4x4xf32, #tpu.memory_space<vmem>>, vector<1x4x4xf32>
    %38 = vector.shape_cast %37 : vector<1x4x4xf32> to vector<4x4xf32>
    %cst_61 = arith.constant dense<0.000000e+00> : vector<256x4xf32>
    %39 = tpu.matmul %36, %38, %cst_61 {dimension_numbers = #tpu.dot_dimension_numbers<[1], [0], [0], [1], [0, 0, 1, 1], [], []>} : vector<256x4xf32>, vector<4x4xf32>, vector<256x4xf32> -> vector<256x4xf32>
    %40 = arith.addf %34, %39 : vector<256x4xf32>
    %c0_62 = arith.constant 0 : index
    %c1_63 = arith.constant 1 : index
    %c2_64 = arith.constant 2 : index
    %c0_65 = arith.constant 0 : index
    %41 = vector.load %arg8[%c0_62, %c1_63, %c2_64, %c0_65] : memref<1x18x18x4xf32, #tpu.memory_space<vmem>>, vector<1x16x16x4xf32>
    %42 = vector.shape_cast %41 : vector<1x16x16x4xf32> to vector<256x4xf32>
    %c5 = arith.constant 5 : index
    %c0_66 = arith.constant 0 : index
    %c0_67 = arith.constant 0 : index
    %43 = vector.load %arg2[%c5, %c0_66, %c0_67] : memref<9x4x4xf32, #tpu.memory_space<vmem>>, vector<1x4x4xf32>
    %44 = vector.shape_cast %43 : vector<1x4x4xf32> to vector<4x4xf32>
    %cst_68 = arith.constant dense<0.000000e+00> : vector<256x4xf32>
    %45 = tpu.matmul %42, %44, %cst_68 {dimension_numbers = #tpu.dot_dimension_numbers<[1], [0], [0], [1], [0, 0, 1, 1], [], []>} : vector<256x4xf32>, vector<4x4xf32>, vector<256x4xf32> -> vector<256x4xf32>
    %46 = arith.addf %40, %45 : vector<256x4xf32>
    %c0_69 = arith.constant 0 : index
    %c2_70 = arith.constant 2 : index
    %c0_71 = arith.constant 0 : index
    %c0_72 = arith.constant 0 : index
    %47 = vector.load %arg8[%c0_69, %c2_70, %c0_71, %c0_72] : memref<1x18x18x4xf32, #tpu.memory_space<vmem>>, vector<1x16x16x4xf32>
    %48 = vector.shape_cast %47 : vector<1x16x16x4xf32> to vector<256x4xf32>
    %c6 = arith.constant 6 : index
    %c0_73 = arith.constant 0 : index
    %c0_74 = arith.constant 0 : index
    %49 = vector.load %arg2[%c6, %c0_73, %c0_74] : memref<9x4x4xf32, #tpu.memory_space<vmem>>, vector<1x4x4xf32>
    %50 = vector.shape_cast %49 : vector<1x4x4xf32> to vector<4x4xf32>
    %cst_75 = arith.constant dense<0.000000e+00> : vector<256x4xf32>
    %51 = tpu.matmul %48, %50, %cst_75 {dimension_numbers = #tpu.dot_dimension_numbers<[1], [0], [0], [1], [0, 0, 1, 1], [], []>} : vector<256x4xf32>, vector<4x4xf32>, vector<256x4xf32> -> vector<256x4xf32>
    %52 = arith.addf %46, %51 : vector<256x4xf32>
    %c0_76 = arith.constant 0 : index
    %c2_77 = arith.constant 2 : index
    %c1_78 = arith.constant 1 : index
    %c0_79 = arith.constant 0 : index
    %53 = vector.load %arg8[%c0_76, %c2_77, %c1_78, %c0_79] : memref<1x18x18x4xf32, #tpu.memory_space<vmem>>, vector<1x16x16x4xf32>
    %54 = vector.shape_cast %53 : vector<1x16x16x4xf32> to vector<256x4xf32>
    %c7 = arith.constant 7 : index
    %c0_80 = arith.constant 0 : index
    %c0_81 = arith.constant 0 : index
    %55 = vector.load %arg2[%c7, %c0_80, %c0_81] : memref<9x4x4xf32, #tpu.memory_space<vmem>>, vector<1x4x4xf32>
    %56 = vector.shape_cast %55 : vector<1x4x4xf32> to vector<4x4xf32>
    %cst_82 = arith.constant dense<0.000000e+00> : vector<256x4xf32>
    %57 = tpu.matmul %54, %56, %cst_82 {dimension_numbers = #tpu.dot_dimension_numbers<[1], [0], [0], [1], [0, 0, 1, 1], [], []>} : vector<256x4xf32>, vector<4x4xf32>, vector<256x4xf32> -> vector<256x4xf32>
    %58 = arith.addf %52, %57 : vector<256x4xf32>
    %c0_83 = arith.constant 0 : index
    %c2_84 = arith.constant 2 : index
    %c2_85 = arith.constant 2 : index
    %c0_86 = arith.constant 0 : index
    %59 = vector.load %arg8[%c0_83, %c2_84, %c2_85, %c0_86] : memref<1x18x18x4xf32, #tpu.memory_space<vmem>>, vector<1x16x16x4xf32>
    %60 = vector.shape_cast %59 : vector<1x16x16x4xf32> to vector<256x4xf32>
    %c8 = arith.constant 8 : index
    %c0_87 = arith.constant 0 : index
    %c0_88 = arith.constant 0 : index
    %61 = vector.load %arg2[%c8, %c0_87, %c0_88] : memref<9x4x4xf32, #tpu.memory_space<vmem>>, vector<1x4x4xf32>
    %62 = vector.shape_cast %61 : vector<1x4x4xf32> to vector<4x4xf32>
    %cst_89 = arith.constant dense<0.000000e+00> : vector<256x4xf32>
    %63 = tpu.matmul %60, %62, %cst_89 {dimension_numbers = #tpu.dot_dimension_numbers<[1], [0], [0], [1], [0, 0, 1, 1], [], []>} : vector<256x4xf32>, vector<4x4xf32>, vector<256x4xf32> -> vector<256x4xf32>
    %64 = arith.addf %58, %63 : vector<256x4xf32>
    %c0_90 = arith.constant 0 : index
    %c0_91 = arith.constant 0 : index
    %65 = vector.load %arg3[%c0_90, %c0_91] : memref<1x4xf32, #tpu.memory_space<vmem>>, vector<1x4xf32>
    %66 = vector.broadcast %65 : vector<1x4xf32> to vector<256x4xf32>
    %67 = arith.addf %64, %66 : vector<256x4xf32>
    %cst_92 = arith.constant 0.000000e+00 : f32
    %68 = vector.broadcast %cst_92 : f32 to vector<256x4xf32>
    %69 = arith.maximumf %67, %68 : vector<256x4xf32>
    %cst_93 = arith.constant 0.000000e+00 : f32
    %70 = vector.broadcast %cst_93 : f32 to vector<1x1x18x4xf32>
    %c0_94 = arith.constant 0 : index
    %c0_95 = arith.constant 0 : index
    %c0_96 = arith.constant 0 : index
    %c0_97 = arith.constant 0 : index
    %71 = vector.load %arg9[%c0_94, %c0_95, %c0_96, %c0_97] : memref<1x18x18x4xf32, #tpu.memory_space<vmem>>, vector<1x1x18x4xf32>
    tpu.vector_store %arg9[%c0_94, %c0_95, %c0_96, %c0_97], %70 {strides = array<i32>} : memref<1x18x18x4xf32, #tpu.memory_space<vmem>>, vector<1x1x18x4xf32>,
    %cst_98 = arith.constant 0.000000e+00 : f32
    %72 = vector.broadcast %cst_98 : f32 to vector<1x1x18x4xf32>
    %c0_99 = arith.constant 0 : index
    %c17_100 = arith.constant 17 : index
    %c0_101 = arith.constant 0 : index
    %c0_102 = arith.constant 0 : index
    %73 = vector.load %arg9[%c0_99, %c17_100, %c0_101, %c0_102] : memref<1x18x18x4xf32, #tpu.memory_space<vmem>>, vector<1x1x18x4xf32>
    tpu.vector_store %arg9[%c0_99, %c17_100, %c0_101, %c0_102], %72 {strides = array<i32>} : memref<1x18x18x4xf32, #tpu.memory_space<vmem>>, vector<1x1x18x4xf32>,
    %cst_103 = arith.constant 0.000000e+00 : f32
    %74 = vector.broadcast %cst_103 : f32 to vector<1x18x1x4xf32>
    %c0_104 = arith.constant 0 : index
    %c0_105 = arith.constant 0 : index
    %c0_106 = arith.constant 0 : index
    %c0_107 = arith.constant 0 : index
    %75 = vector.load %arg9[%c0_104, %c0_105, %c0_106, %c0_107] : memref<1x18x18x4xf32, #tpu.memory_space<vmem>>, vector<1x18x1x4xf32>
    tpu.vector_store %arg9[%c0_104, %c0_105, %c0_106, %c0_107], %74 {strides = array<i32>} : memref<1x18x18x4xf32, #tpu.memory_space<vmem>>, vector<1x18x1x4xf32>,
    %cst_108 = arith.constant 0.000000e+00 : f32
    %76 = vector.broadcast %cst_108 : f32 to vector<1x18x1x4xf32>
    %c0_109 = arith.constant 0 : index
    %c0_110 = arith.constant 0 : index
    %c17_111 = arith.constant 17 : index
    %c0_112 = arith.constant 0 : index
    %77 = vector.load %arg9[%c0_109, %c0_110, %c17_111, %c0_112] : memref<1x18x18x4xf32, #tpu.memory_space<vmem>>, vector<1x18x1x4xf32>
    tpu.vector_store %arg9[%c0_109, %c0_110, %c17_111, %c0_112], %76 {strides = array<i32>} : memref<1x18x18x4xf32, #tpu.memory_space<vmem>>, vector<1x18x1x4xf32>,
    %78 = vector.shape_cast %69 : vector<256x4xf32> to vector<1x16x16x4xf32>
    %c0_113 = arith.constant 0 : index
    %c1_114 = arith.constant 1 : index
    %c1_115 = arith.constant 1 : index
    %c0_116 = arith.constant 0 : index
    %79 = vector.load %arg9[%c0_113, %c1_114, %c1_115, %c0_116] : memref<1x18x18x4xf32, #tpu.memory_space<vmem>>, vector<1x16x16x4xf32>
    tpu.vector_store %arg9[%c0_113, %c1_114, %c1_115, %c0_116], %78 {strides = array<i32>} : memref<1x18x18x4xf32, #tpu.memory_space<vmem>>, vector<1x16x16x4xf32>,
    %cst_117 = arith.constant 0.000000e+00 : f32
    %80 = vector.broadcast %cst_117 : f32 to vector<256x4xf32>
    %c0_118 = arith.constant 0 : index
    %c0_119 = arith.constant 0 : index
    %c0_120 = arith.constant 0 : index
    %c0_121 = arith.constant 0 : index
    %81 = vector.load %arg9[%c0_118, %c0_119, %c0_120, %c0_121] : memref<1x18x18x4xf32, #tpu.memory_space<vmem>>, vector<1x16x16x4xf32>
    %82 = vector.shape_cast %81 : vector<1x16x16x4xf32> to vector<256x4xf32>
    %c0_122 = arith.constant 0 : index
    %c0_123 = arith.constant 0 : index
    %c0_124 = arith.constant 0 : index
    %83 = vector.load %arg4[%c0_122, %c0_123, %c0_124] : memref<9x4x4xf32, #tpu.memory_space<vmem>>, vector<1x4x4xf32>
    %84 = vector.shape_cast %83 : vector<1x4x4xf32> to vector<4x4xf32>
    %cst_125 = arith.constant dense<0.000000e+00> : vector<256x4xf32>
    %85 = tpu.matmul %82, %84, %cst_125 {dimension_numbers = #tpu.dot_dimension_numbers<[1], [0], [0], [1], [0, 0, 1, 1], [], []>} : vector<256x4xf32>, vector<4x4xf32>, vector<256x4xf32> -> vector<256x4xf32>
    %86 = arith.addf %80, %85 : vector<256x4xf32>
    %c0_126 = arith.constant 0 : index
    %c0_127 = arith.constant 0 : index
    %c1_128 = arith.constant 1 : index
    %c0_129 = arith.constant 0 : index
    %87 = vector.load %arg9[%c0_126, %c0_127, %c1_128, %c0_129] : memref<1x18x18x4xf32, #tpu.memory_space<vmem>>, vector<1x16x16x4xf32>
    %88 = vector.shape_cast %87 : vector<1x16x16x4xf32> to vector<256x4xf32>
    %c1_130 = arith.constant 1 : index
    %c0_131 = arith.constant 0 : index
    %c0_132 = arith.constant 0 : index
    %89 = vector.load %arg4[%c1_130, %c0_131, %c0_132] : memref<9x4x4xf32, #tpu.memory_space<vmem>>, vector<1x4x4xf32>
    %90 = vector.shape_cast %89 : vector<1x4x4xf32> to vector<4x4xf32>
    %cst_133 = arith.constant dense<0.000000e+00> : vector<256x4xf32>
    %91 = tpu.matmul %88, %90, %cst_133 {dimension_numbers = #tpu.dot_dimension_numbers<[1], [0], [0], [1], [0, 0, 1, 1], [], []>} : vector<256x4xf32>, vector<4x4xf32>, vector<256x4xf32> -> vector<256x4xf32>
    %92 = arith.addf %86, %91 : vector<256x4xf32>
    %c0_134 = arith.constant 0 : index
    %c0_135 = arith.constant 0 : index
    %c2_136 = arith.constant 2 : index
    %c0_137 = arith.constant 0 : index
    %93 = vector.load %arg9[%c0_134, %c0_135, %c2_136, %c0_137] : memref<1x18x18x4xf32, #tpu.memory_space<vmem>>, vector<1x16x16x4xf32>
    %94 = vector.shape_cast %93 : vector<1x16x16x4xf32> to vector<256x4xf32>
    %c2_138 = arith.constant 2 : index
    %c0_139 = arith.constant 0 : index
    %c0_140 = arith.constant 0 : index
    %95 = vector.load %arg4[%c2_138, %c0_139, %c0_140] : memref<9x4x4xf32, #tpu.memory_space<vmem>>, vector<1x4x4xf32>
    %96 = vector.shape_cast %95 : vector<1x4x4xf32> to vector<4x4xf32>
    %cst_141 = arith.constant dense<0.000000e+00> : vector<256x4xf32>
    %97 = tpu.matmul %94, %96, %cst_141 {dimension_numbers = #tpu.dot_dimension_numbers<[1], [0], [0], [1], [0, 0, 1, 1], [], []>} : vector<256x4xf32>, vector<4x4xf32>, vector<256x4xf32> -> vector<256x4xf32>
    %98 = arith.addf %92, %97 : vector<256x4xf32>
    %c0_142 = arith.constant 0 : index
    %c1_143 = arith.constant 1 : index
    %c0_144 = arith.constant 0 : index
    %c0_145 = arith.constant 0 : index
    %99 = vector.load %arg9[%c0_142, %c1_143, %c0_144, %c0_145] : memref<1x18x18x4xf32, #tpu.memory_space<vmem>>, vector<1x16x16x4xf32>
    %100 = vector.shape_cast %99 : vector<1x16x16x4xf32> to vector<256x4xf32>
    %c3_146 = arith.constant 3 : index
    %c0_147 = arith.constant 0 : index
    %c0_148 = arith.constant 0 : index
    %101 = vector.load %arg4[%c3_146, %c0_147, %c0_148] : memref<9x4x4xf32, #tpu.memory_space<vmem>>, vector<1x4x4xf32>
    %102 = vector.shape_cast %101 : vector<1x4x4xf32> to vector<4x4xf32>
    %cst_149 = arith.constant dense<0.000000e+00> : vector<256x4xf32>
    %103 = tpu.matmul %100, %102, %cst_149 {dimension_numbers = #tpu.dot_dimension_numbers<[1], [0], [0], [1], [0, 0, 1, 1], [], []>} : vector<256x4xf32>, vector<4x4xf32>, vector<256x4xf32> -> vector<256x4xf32>
    %104 = arith.addf %98, %103 : vector<256x4xf32>
    %c0_150 = arith.constant 0 : index
    %c1_151 = arith.constant 1 : index
    %c1_152 = arith.constant 1 : index
    %c0_153 = arith.constant 0 : index
    %105 = vector.load %arg9[%c0_150, %c1_151, %c1_152, %c0_153] : memref<1x18x18x4xf32, #tpu.memory_space<vmem>>, vector<1x16x16x4xf32>
    %106 = vector.shape_cast %105 : vector<1x16x16x4xf32> to vector<256x4xf32>
    %c4_154 = arith.constant 4 : index
    %c0_155 = arith.constant 0 : index
    %c0_156 = arith.constant 0 : index
    %107 = vector.load %arg4[%c4_154, %c0_155, %c0_156] : memref<9x4x4xf32, #tpu.memory_space<vmem>>, vector<1x4x4xf32>
    %108 = vector.shape_cast %107 : vector<1x4x4xf32> to vector<4x4xf32>
    %cst_157 = arith.constant dense<0.000000e+00> : vector<256x4xf32>
    %109 = tpu.matmul %106, %108, %cst_157 {dimension_numbers = #tpu.dot_dimension_numbers<[1], [0], [0], [1], [0, 0, 1, 1], [], []>} : vector<256x4xf32>, vector<4x4xf32>, vector<256x4xf32> -> vector<256x4xf32>
    %110 = arith.addf %104, %109 : vector<256x4xf32>
    %c0_158 = arith.constant 0 : index
    %c1_159 = arith.constant 1 : index
    %c2_160 = arith.constant 2 : index
    %c0_161 = arith.constant 0 : index
    %111 = vector.load %arg9[%c0_158, %c1_159, %c2_160, %c0_161] : memref<1x18x18x4xf32, #tpu.memory_space<vmem>>, vector<1x16x16x4xf32>
    %112 = vector.shape_cast %111 : vector<1x16x16x4xf32> to vector<256x4xf32>
    %c5_162 = arith.constant 5 : index
    %c0_163 = arith.constant 0 : index
    %c0_164 = arith.constant 0 : index
    %113 = vector.load %arg4[%c5_162, %c0_163, %c0_164] : memref<9x4x4xf32, #tpu.memory_space<vmem>>, vector<1x4x4xf32>
    %114 = vector.shape_cast %113 : vector<1x4x4xf32> to vector<4x4xf32>
    %cst_165 = arith.constant dense<0.000000e+00> : vector<256x4xf32>
    %115 = tpu.matmul %112, %114, %cst_165 {dimension_numbers = #tpu.dot_dimension_numbers<[1], [0], [0], [1], [0, 0, 1, 1], [], []>} : vector<256x4xf32>, vector<4x4xf32>, vector<256x4xf32> -> vector<256x4xf32>
    %116 = arith.addf %110, %115 : vector<256x4xf32>
    %c0_166 = arith.constant 0 : index
    %c2_167 = arith.constant 2 : index
    %c0_168 = arith.constant 0 : index
    %c0_169 = arith.constant 0 : index
    %117 = vector.load %arg9[%c0_166, %c2_167, %c0_168, %c0_169] : memref<1x18x18x4xf32, #tpu.memory_space<vmem>>, vector<1x16x16x4xf32>
    %118 = vector.shape_cast %117 : vector<1x16x16x4xf32> to vector<256x4xf32>
    %c6_170 = arith.constant 6 : index
    %c0_171 = arith.constant 0 : index
    %c0_172 = arith.constant 0 : index
    %119 = vector.load %arg4[%c6_170, %c0_171, %c0_172] : memref<9x4x4xf32, #tpu.memory_space<vmem>>, vector<1x4x4xf32>
    %120 = vector.shape_cast %119 : vector<1x4x4xf32> to vector<4x4xf32>
    %cst_173 = arith.constant dense<0.000000e+00> : vector<256x4xf32>
    %121 = tpu.matmul %118, %120, %cst_173 {dimension_numbers = #tpu.dot_dimension_numbers<[1], [0], [0], [1], [0, 0, 1, 1], [], []>} : vector<256x4xf32>, vector<4x4xf32>, vector<256x4xf32> -> vector<256x4xf32>
    %122 = arith.addf %116, %121 : vector<256x4xf32>
    %c0_174 = arith.constant 0 : index
    %c2_175 = arith.constant 2 : index
    %c1_176 = arith.constant 1 : index
    %c0_177 = arith.constant 0 : index
    %123 = vector.load %arg9[%c0_174, %c2_175, %c1_176, %c0_177] : memref<1x18x18x4xf32, #tpu.memory_space<vmem>>, vector<1x16x16x4xf32>
    %124 = vector.shape_cast %123 : vector<1x16x16x4xf32> to vector<256x4xf32>
    %c7_178 = arith.constant 7 : index
    %c0_179 = arith.constant 0 : index
    %c0_180 = arith.constant 0 : index
    %125 = vector.load %arg4[%c7_178, %c0_179, %c0_180] : memref<9x4x4xf32, #tpu.memory_space<vmem>>, vector<1x4x4xf32>
    %126 = vector.shape_cast %125 : vector<1x4x4xf32> to vector<4x4xf32>
    %cst_181 = arith.constant dense<0.000000e+00> : vector<256x4xf32>
    %127 = tpu.matmul %124, %126, %cst_181 {dimension_numbers = #tpu.dot_dimension_numbers<[1], [0], [0], [1], [0, 0, 1, 1], [], []>} : vector<256x4xf32>, vector<4x4xf32>, vector<256x4xf32> -> vector<256x4xf32>
    %128 = arith.addf %122, %127 : vector<256x4xf32>
    %c0_182 = arith.constant 0 : index
    %c2_183 = arith.constant 2 : index
    %c2_184 = arith.constant 2 : index
    %c0_185 = arith.constant 0 : index
    %129 = vector.load %arg9[%c0_182, %c2_183, %c2_184, %c0_185] : memref<1x18x18x4xf32, #tpu.memory_space<vmem>>, vector<1x16x16x4xf32>
    %130 = vector.shape_cast %129 : vector<1x16x16x4xf32> to vector<256x4xf32>
    %c8_186 = arith.constant 8 : index
    %c0_187 = arith.constant 0 : index
    %c0_188 = arith.constant 0 : index
    %131 = vector.load %arg4[%c8_186, %c0_187, %c0_188] : memref<9x4x4xf32, #tpu.memory_space<vmem>>, vector<1x4x4xf32>
    %132 = vector.shape_cast %131 : vector<1x4x4xf32> to vector<4x4xf32>
    %cst_189 = arith.constant dense<0.000000e+00> : vector<256x4xf32>
    %133 = tpu.matmul %130, %132, %cst_189 {dimension_numbers = #tpu.dot_dimension_numbers<[1], [0], [0], [1], [0, 0, 1, 1], [], []>} : vector<256x4xf32>, vector<4x4xf32>, vector<256x4xf32> -> vector<256x4xf32>
    %134 = arith.addf %128, %133 : vector<256x4xf32>
    %c0_190 = arith.constant 0 : index
    %c0_191 = arith.constant 0 : index
    %135 = vector.load %arg5[%c0_190, %c0_191] : memref<1x4xf32, #tpu.memory_space<vmem>>, vector<1x4xf32>
    %136 = vector.broadcast %135 : vector<1x4xf32> to vector<256x4xf32>
    %137 = arith.addf %134, %136 : vector<256x4xf32>
    %c0_192 = arith.constant 0 : index
    %c0_193 = arith.constant 0 : index
    %c0_194 = arith.constant 0 : index
    %c0_195 = arith.constant 0 : index
    %138 = vector.load %arg6[%c0_192, %c0_193, %c0_194, %c0_195] : memref<1x16x16x4xf32, #tpu.memory_space<vmem>>, vector<1x16x16x4xf32>
    %139 = vector.shape_cast %138 : vector<1x16x16x4xf32> to vector<256x4xf32>
    %140 = arith.addf %137, %139 : vector<256x4xf32>
    %cst_196 = arith.constant 0.000000e+00 : f32
    %141 = vector.broadcast %cst_196 : f32 to vector<256x4xf32>
    %142 = arith.maximumf %140, %141 : vector<256x4xf32>
    %143 = vector.shape_cast %142 : vector<256x4xf32> to vector<1x16x16x4xf32>
    %c0_197 = arith.constant 0 : index
    %c0_198 = arith.constant 0 : index
    %c0_199 = arith.constant 0 : index
    %c0_200 = arith.constant 0 : index
    %144 = vector.load %arg7[%c0_197, %c0_198, %c0_199, %c0_200] : memref<1x16x16x4xf32, #tpu.memory_space<vmem>>, vector<1x16x16x4xf32>
    tpu.vector_store %arg7[%c0_197, %c0_198, %c0_199, %c0_200], %143 {strides = array<i32>} : memref<1x16x16x4xf32, #tpu.memory_space<vmem>>, vector<1x16x16x4xf32>,
    return
  }
  func.func @transform_0(%arg0: i32) -> (i32, i32, i32, i32) {
    %c0_i32 = arith.constant 0 : i32
    %c0_i32_0 = arith.constant 0 : i32
    %c0_i32_1 = arith.constant 0 : i32
    %c0_i32_2 = arith.constant 0 : i32
    return %arg0, %c0_i32, %c0_i32_0, %c0_i32_1 : i32, i32, i32, i32
  }
  func.func @transform_1(%arg0: i32) -> (i32, i32, i32) {
    %c0_i32 = arith.constant 0 : i32
    %c0_i32_0 = arith.constant 0 : i32
    %c0_i32_1 = arith.constant 0 : i32
    %c0_i32_2 = arith.constant 0 : i32
    return %c0_i32, %c0_i32_0, %c0_i32_1 : i32, i32, i32
  }
  func.func @transform_2(%arg0: i32) -> (i32, i32) {
    %c0_i32 = arith.constant 0 : i32
    %c0_i32_0 = arith.constant 0 : i32
    %c0_i32_1 = arith.constant 0 : i32
    return %c0_i32, %c0_i32_0 : i32, i32
  }
  func.func @transform_3(%arg0: i32) -> (i32, i32, i32) {
    %c0_i32 = arith.constant 0 : i32
    %c0_i32_0 = arith.constant 0 : i32
    %c0_i32_1 = arith.constant 0 : i32
    %c0_i32_2 = arith.constant 0 : i32
    return %c0_i32, %c0_i32_0, %c0_i32_1 : i32, i32, i32
  }
  func.func @transform_4(%arg0: i32) -> (i32, i32) {
    %c0_i32 = arith.constant 0 : i32
    %c0_i32_0 = arith.constant 0 : i32
    %c0_i32_1 = arith.constant 0 : i32
    return %c0_i32, %c0_i32_0 : i32, i32
  }
  func.func @transform_5(%arg0: i32) -> (i32, i32, i32, i32) {
    %c0_i32 = arith.constant 0 : i32
    %c0_i32_0 = arith.constant 0 : i32
    %c0_i32_1 = arith.constant 0 : i32
    %c0_i32_2 = arith.constant 0 : i32
    return %arg0, %c0_i32, %c0_i32_0, %c0_i32_1 : i32, i32, i32, i32
  }
  func.func @transform_6(%arg0: i32) -> (i32, i32, i32, i32) {
    %c0_i32 = arith.constant 0 : i32
    %c0_i32_0 = arith.constant 0 : i32
    %c0_i32_1 = arith.constant 0 : i32
    %c0_i32_2 = arith.constant 0 : i32
    return %arg0, %c0_i32, %c0_i32_0, %c0_i32_1 : i32, i32, i32, i32
  }
}

</mosaic_0001>

<llo_original>
// kernel: tpu_custom_call.1
$region0: #{tpu_custom_call.1}
  #allocation0 [shape = 'u32[]', space=smem, size = 0x4, offset = 0x4, fixed_abs, tag = 'smem constant byte address 0x4 - core index']
  #allocation1 [shape = 'u32[72,128]{1,0:T(1,128)}', space=vmem, size = 0x9000, scoped, tag = 'internal scratch']
  #allocation2 [shape = 'f32[1,18,18,4]{3,2,1,0:T(8,128)}', space=vmem, size = 0x36000, scoped, tag = 'scratch operand']
  #allocation3 [shape = 'f32[1,18,18,4]{3,2,1,0:T(8,128)}', space=vmem, size = 0x36000, scoped, tag = 'scratch operand']
  %s0 = inlined_call_operand.vmem [shape: f32[2,16,16,4], index: 0, kind: input, shape index: {}]
  %s1 = inlined_call_operand.vmem [shape: f32[9,4,4], index: 1, kind: input, shape index: {}]
  %s2 = inlined_call_operand.vmem [shape: f32[1,4], index: 2, kind: input, shape index: {}]
  %s3 = inlined_call_operand.vmem [shape: f32[9,4,4], index: 3, kind: input, shape index: {}]
  %s4 = inlined_call_operand.vmem [shape: f32[1,4], index: 4, kind: input, shape index: {}]
  %s5 = inlined_call_operand.vmem [shape: f32[2,16,16,4], index: 5, kind: input, shape index: {}]
  %s6 = inlined_call_operand.vmem [shape: f32[2,16,16,4], index: 6, kind: output, shape index: {}]
  %s7 = sld [smem:[#allocation0]]
  $region57: #{tpu_custom_call.1} parent=0
    _
  %s9 = ssub.s32 1, %s7
  %s10 = scalar_select 0, %s9, %s7
  loop: start=0, step=1, limit=4
  $region2: #{tpu_custom_call.1} parent=0 // loop_pre_header
    _
  $region3: #{tpu_custom_call.1} parent=0 // loop_header
    %s12 = sphi 0, %s16
    %p13 = scmp.ge.s32.totalorder %s12, 4
    %s22 = sphi 0, %s24
    %s25 = sphi 0, %s22
    %s26 = sphi 0, %s25
    %s42 = sphi 0, %s26
    %s46 = sphi 0, %s46
    %s48 = sphi 0, %s46
    %s49 = sphi 0, %s48
    %s63 = sphi 0, %s49
    %s67 = sphi 0, %s67
    %s69 = sphi 0, %s67
    %s70 = sphi 0, %s69
    %s84 = sphi 0, %s70
    %s88 = sphi 0, %s88
    %s90 = sphi 0, %s88
    %s91 = sphi 0, %s90
    %s105 = sphi 0, %s91
    %s109 = sphi 0, %s109
    %s111 = sphi 0, %s109
    %s112 = sphi 0, %s111
    %s126 = sphi 0, %s112
    %s132 = sphi 0, %s134
    %s135 = sphi 0, %s132
    %s136 = sphi 0, %s135
    %s152 = sphi 0, %s136
    %s158 = sphi 0, %s160
    %s161 = sphi 0, %s158
    %s162 = sphi 0, %s161
    %s178 = sphi 0, %s162
  $region4: #{tpu_custom_call.1} parent=0 // loop_header_branch
    %15 = sbr.rel (%p13) target = $region8
  $region5: #{tpu_custom_call.1} parent=0 // loop_body
    %s17 = ssub.s32 %s12, 1
    %s18 = ssub.s32 %s12, 2
    %s19 = sadd.s32 %s12, 1
    %s20 = ssub.s32 %s12, %s19
    %p21 = scmp.eq.s32.totalorder %s20, 0
    %s23 = sadd.s32 %s22, 1
    %s24 = scalar_select %p21, %s22, %s23
    %p27 = pneg %p21
    %p28 = scmp.eq.s32.totalorder %s12, 1
    %p29 = por %p27, %p28
    %p30 = scmp.ne.s32.totalorder %s22, %s25
    %p31 = scmp.eq.s32.totalorder %s12, 0
    %p32 = por %p30, %p31
    %p33 = scmp.ne.s32.totalorder %s22, %s25
    %p34 = scmp.eq.s32.totalorder %s17, 1
    %p35 = por %p33, %p34
    %p36 = scmp.ne.s32.totalorder %s25, %s26
    %p37 = scmp.eq.s32.totalorder %s17, 0
    %p38 = por %p36, %p37
    %p39 = scmp.ne.s32.totalorder %s25, %s26
    %p40 = scmp.eq.s32.totalorder %s18, 1
    %p41 = por %p39, %p40
    %p43 = scmp.ne.s32.totalorder %s26, %s42
    %p44 = scmp.eq.s32.totalorder %s18, 0
    %p45 = por %p43, %p44
    %s47 = sadd.s32 %s46, 1
    %p50 = scmp.eq.s32.totalorder %s12, 1
    %p51 = scmp.ne.s32.totalorder %s46, %s48
    %p52 = scmp.eq.s32.totalorder %s12, 0
    %p53 = por %p51, %p52
    %p54 = scmp.ne.s32.totalorder %s46, %s48
    %p55 = scmp.eq.s32.totalorder %s17, 1
    %p56 = por %p54, %p55
    %p57 = scmp.ne.s32.totalorder %s48, %s49
    %p58 = scmp.eq.s32.totalorder %s17, 0
    %p59 = por %p57, %p58
    %p60 = scmp.ne.s32.totalorder %s48, %s49
    %p61 = scmp.eq.s32.totalorder %s18, 1
    %p62 = por %p60, %p61
    %p64 = scmp.ne.s32.totalorder %s49, %s63
    %p65 = scmp.eq.s32.totalorder %s18, 0
    %p66 = por %p64, %p65
    %s68 = sadd.s32 %s67, 1
    %p71 = scmp.eq.s32.totalorder %s12, 1
    %p72 = scmp.ne.s32.totalorder %s67, %s69
    %p73 = scmp.eq.s32.totalorder %s12, 0
    %p74 = por %p72, %p73
    %p75 = scmp.ne.s32.totalorder %s67, %s69
    %p76 = scmp.eq.s32.totalorder %s17, 1
    %p77 = por %p75, %p76
    %p78 = scmp.ne.s32.totalorder %s69, %s70
    %p79 = scmp.eq.s32.totalorder %s17, 0
    %p80 = por %p78, %p79
    %p81 = scmp.ne.s32.totalorder %s69, %s70
    %p82 = scmp.eq.s32.totalorder %s18, 1
    %p83 = por %p81, %p82
    %p85 = scmp.ne.s32.totalorder %s70, %s84
    %p86 = scmp.eq.s32.totalorder %s18, 0
    %p87 = por %p85, %p86
    %s89 = sadd.s32 %s88, 1
    %p92 = scmp.eq.s32.totalorder %s12, 1
    %p93 = scmp.ne.s32.totalorder %s88, %s90
    %p94 = scmp.eq.s32.totalorder %s12, 0
    %p95 = por %p93, %p94
    %p96 = scmp.ne.s32.totalorder %s88, %s90
    %p97 = scmp.eq.s32.totalorder %s17, 1
    %p98 = por %p96, %p97
    %p99 = scmp.ne.s32.totalorder %s90, %s91
    %p100 = scmp.eq.s32.totalorder %s17, 0
    %p101 = por %p99, %p100
    %p102 = scmp.ne.s32.totalorder %s90, %s91
    %p103 = scmp.eq.s32.totalorder %s18, 1
    %p104 = por %p102, %p103
    %p106 = scmp.ne.s32.totalorder %s91, %s105
    %p107 = scmp.eq.s32.totalorder %s18, 0
    %p108 = por %p106, %p107
    %s110 = sadd.s32 %s109, 1
    %p113 = scmp.eq.s32.totalorder %s12, 1
    %p114 = scmp.ne.s32.totalorder %s109, %s111
    %p115 = scmp.eq.s32.totalorder %s12, 0
    %p116 = por %p114, %p115
    %p117 = scmp.ne.s32.totalorder %s109, %s111
    %p118 = scmp.eq.s32.totalorder %s17, 1
    %p119 = por %p117, %p118
    %p120 = scmp.ne.s32.totalorder %s111, %s112
    %p121 = scmp.eq.s32.totalorder %s17, 0
    %p122 = por %p120, %p121
    %p123 = scmp.ne.s32.totalorder %s111, %s112
    %p124 = scmp.eq.s32.totalorder %s18, 1
    %p125 = por %p123, %p124
    %p127 = scmp.ne.s32.totalorder %s112, %s126
    %p128 = scmp.eq.s32.totalorder %s18, 0
    %p129 = por %p127, %p128
    %s130 = ssub.s32 %s12, %s19
    %p131 = scmp.eq.s32.totalorder %s130, 0
    %s133 = sadd.s32 %s132, 1
    %s134 = scalar_select %p131, %s132, %s133
    %p137 = pneg %p131
    %p138 = scmp.eq.s32.totalorder %s12, 1
    %p139 = por %p137, %p138
    %p140 = scmp.ne.s32.totalorder %s132, %s135
    %p141 = scmp.eq.s32.totalorder %s12, 0
    %p142 = por %p140, %p141
    %p143 = scmp.ne.s32.totalorder %s132, %s135
    %p144 = scmp.eq.s32.totalorder %s17, 1
    %p145 = por %p143, %p144
    %p146 = scmp.ne.s32.totalorder %s135, %s136
    %p147 = scmp.eq.s32.totalorder %s17, 0
    %p148 = por %p146, %p147
    %p149 = scmp.ne.s32.totalorder %s135, %s136
    %p150 = scmp.eq.s32.totalorder %s18, 1
    %p151 = por %p149, %p150
    %p153 = scmp.ne.s32.totalorder %s136, %s152
    %p154 = scmp.eq.s32.totalorder %s18, 0
    %p155 = por %p153, %p154
    %s156 = ssub.s32 %s12, %s19
    %p157 = scmp.eq.s32.totalorder %s156, 0
    %s159 = sadd.s32 %s158, 1
    %s160 = scalar_select %p157, %s158, %s159
    %p163 = pneg %p157
    %p164 = scmp.eq.s32.totalorder %s12, 1
    %p165 = por %p163, %p164
    %p166 = scmp.ne.s32.totalorder %s158, %s161
    %p167 = scmp.eq.s32.totalorder %s12, 0
    %p168 = por %p166, %p167
    %p169 = scmp.ne.s32.totalorder %s158, %s161
    %p170 = scmp.eq.s32.totalorder %s17, 1
    %p171 = por %p169, %p170
    %p172 = scmp.ne.s32.totalorder %s161, %s162
    %p173 = scmp.eq.s32.totalorder %s17, 0
    %p174 = por %p172, %p173
    %p175 = scmp.ne.s32.totalorder %s161, %s162
    %p176 = scmp.eq.s32.totalorder %s18, 1
    %p177 = por %p175, %p176
    %p179 = scmp.ne.s32.totalorder %s162, %s178
    %p180 = scmp.eq.s32.totalorder %s18, 0
    %p181 = por %p179, %p180
    %p182 = scmp.le.s32.totalorder 1, %s12
    %p183 = scmp.lt.s32.totalorder %s12, 3
    %p184 = pnand %p182, %p183
    %p185 = pneg %p184
    // Predicated region
    $region9: #{tpu_custom_call.1} parent=5 // pred_check
      _
    $region10: #{tpu_custom_call.1} parent=5 // pred_check_branch
      %187 = sbr.rel (%p184) target = $region12
    $region11: #{tpu_custom_call.1} parent=5 // pred_region
      %s188 = ssub.s32 %s12, 1
      // Predicated region
      $region13: #{tpu_custom_call.1} parent=11 // pred_check
        %p189 = pneg %p59
      $region14: #{tpu_custom_call.1} parent=11 // pred_check_branch
        %191 = sbr.rel (%p189) target = $region16
      $region15: #{tpu_custom_call.1} parent=11 // pred_region
        _
      $region16: #{tpu_custom_call.1} parent=11 // pred_fallthru
        _
      // Predicated region
      $region17: #{tpu_custom_call.1} parent=11 // pred_check
        %p192 = pneg %p80
      $region18: #{tpu_custom_call.1} parent=11 // pred_check_branch
        %194 = sbr.rel (%p192) target = $region20
      $region19: #{tpu_custom_call.1} parent=11 // pred_region
        _
      $region20: #{tpu_custom_call.1} parent=11 // pred_fallthru
        _
      // Predicated region
      $region21: #{tpu_custom_call.1} parent=11 // pred_check
        %p195 = pneg %p101
      $region22: #{tpu_custom_call.1} parent=11 // pred_check_branch
        %197 = sbr.rel (%p195) target = $region24
      $region23: #{tpu_custom_call.1} parent=11 // pred_region
        _
      $region24: #{tpu_custom_call.1} parent=11 // pred_fallthru
        _
      // Predicated region
      $region25: #{tpu_custom_call.1} parent=11 // pred_check
        %p198 = pneg %p122
      $region26: #{tpu_custom_call.1} parent=11 // pred_check_branch
        %200 = sbr.rel (%p198) target = $region28
      $region27: #{tpu_custom_call.1} parent=11 // pred_region
        _
      $region28: #{tpu_custom_call.1} parent=11 // pred_fallthru
        _
    $region12: #{tpu_custom_call.1} parent=5 // pred_fallthru
      _
    %p201 = scmp.lt.s32.totalorder %s12, 2
    // Predicated region
    $region29: #{tpu_custom_call.1} parent=5 // pred_check
      %p202 = pneg %p201
    $region30: #{tpu_custom_call.1} parent=5 // pred_check_branch
      %204 = sbr.rel (%p202) target = $region32
    $region31: #{tpu_custom_call.1} parent=5 // pred_region
      // Predicated region
      $region33: #{tpu_custom_call.1} parent=31 // pred_check
        %p205 = pneg %p32
      $region34: #{tpu_custom_call.1} parent=31 // pred_check_branch
        %207 = sbr.rel (%p205) target = $region36
      $region35: #{tpu_custom_call.1} parent=31 // pred_region
        %p208 = scmp.lt.s32.totalorder %s12, 1
        %s209 = scalar_select %p208, %s12, 1
        %s210 = smul.addr %s209, 32
        %s211 = smul.addr %s210, 8
        %s212 = scalar_lea.vmem %s0, %s211
      $region36: #{tpu_custom_call.1} parent=31 // pred_fallthru
        _
      // Predicated region
      $region37: #{tpu_custom_call.1} parent=31 // pred_check
        %p213 = pneg %p142
      $region38: #{tpu_custom_call.1} parent=31 // pred_check_branch
        %215 = sbr.rel (%p213) target = $region40
      $region39: #{tpu_custom_call.1} parent=31 // pred_region
        %p216 = scmp.lt.s32.totalorder %s12, 1
        %s217 = scalar_select %p216, %s12, 1
        %s218 = smul.addr %s217, 32
        %s219 = smul.addr %s218, 8
        %s220 = scalar_lea.vmem %s5, %s219
      $region40: #{tpu_custom_call.1} parent=31 // pred_fallthru
        _
    $region32: #{tpu_custom_call.1} parent=5 // pred_fallthru
      _
    %p221 = scmp.le.s32.totalorder 1, %s12
    %p222 = scmp.lt.s32.totalorder %s12, 3
    %p223 = pnand %p221, %p222
    %p224 = pneg %p223
    // Predicated region
    $region41: #{tpu_custom_call.1} parent=5 // pred_check
      _
    $region42: #{tpu_custom_call.1} parent=5 // pred_check_branch
      %226 = sbr.rel (%p223) target = $region44
    $region43: #{tpu_custom_call.1} parent=5 // pred_region
      %s227 = ssub.s32 %s12, 1
      %p228 = scmp.lt.s32.totalorder %s17, 1
      %s229 = scalar_select %p228, %s17, 1
      %s230 = smul.addr %s229, 32
      %s231 = smul.addr %s230, 8
      %s232 = scalar_lea.vmem %s0, %s231
      %p233 = pneg %p38
      %p234 = pneg %p35
      %p235 = pneg %p59
      %p236 = pneg %p56
      %p237 = pneg %p80
      %p238 = pneg %p77
      %p239 = pneg %p101
      %p240 = pneg %p98
      %p241 = pneg %p122
      %p242 = pneg %p119
      %p243 = scmp.lt.s32.totalorder %s17, 1
      %s244 = scalar_select %p243, %s17, 1
      %s245 = smul.addr %s244, 32
      %s246 = smul.addr %s245, 8
      %s247 = scalar_lea.vmem %s5, %s246
      %p248 = pneg %p148
      %p249 = pneg %p145
      %p250 = pneg %p174
      %p251 = pneg %p171
      %p252 = scmp.lt.s32.totalorder %s17, 1
      %s253 = scalar_select %p252, %s17, 1
      %s254 = smul.addr %s253, 32
      %s255 = smul.addr %s254, 8
      %s256 = scalar_lea.vmem %s6, %s255
      %p257 = scmp.lt.s32.totalorder %s17, 1
      %s258 = scalar_select %p257, %s17, 1
      %s259 = smul.addr %s258, 32
      %s260 = smul.addr %s259, 8
      %s261 = scalar_lea.vmem %s0, %s260
      %p262 = scmp.lt.s32.totalorder %s17, 1
      %s263 = scalar_select %p262, %s17, 1
      %s264 = smul.addr %s263, 32
      %s265 = smul.addr %s264, 8
      %s266 = scalar_lea.vmem %s5, %s265
      %p267 = scmp.lt.s32.totalorder %s17, 1
      %s268 = scalar_select %p267, %s17, 1
      %s269 = smul.addr %s268, 32
      %s270 = smul.addr %s269, 8
      %s271 = scalar_lea.vmem %s6, %s270
      %vm272 = vcmask 31744
      %273 = vst.msk [vmem:[#allocation2] sm:$0xff] %vm272, 0.0
      %274 = vst.msk [vmem:[#allocation2 + $0x8] sm:$0xff] %vm272, 0.0
      %vm275 = vcmask 25600
      %276 = vst.msk [vmem:[#allocation2 + $0x10] sm:$0x3] %vm275, 0.0
      %s277 = scalar_lea.vmem [#allocation2], 408
      %278 = vst.msk [vmem:[%s277] sm:$0xff] %vm272, 0.0
      %279 = vst.msk [vmem:[%s277 + $0x8] sm:$0xff] %vm272, 0.0
      %280 = vst.msk [vmem:[%s277 + $0x10] sm:$0x3] %vm275, 0.0
      %vm281 = vcmask 24576
      %282 = vst.msk [vmem:[#allocation2] sm:$0x1] %vm281, 0.0
      %283 = vst.msk [vmem:[#allocation2 + $0x18] sm:$0x1] %vm281, 0.0
      %284 = vst.msk [vmem:[#allocation2 + $0x30] sm:$0x1] %vm281, 0.0
      %285 = vst.msk [vmem:[#allocation2 + $0x48] sm:$0x1] %vm281, 0.0
      %286 = vst.msk [vmem:[#allocation2 + $0x60] sm:$0x1] %vm281, 0.0
      %287 = vst.msk [vmem:[#allocation2 + $0x78] sm:$0x1] %vm281, 0.0
      %288 = vst.msk [vmem:[#allocation2 + $0x90] sm:$0x1] %vm281, 0.0
      %289 = vst.msk [vmem:[#allocation2 + $0xa8] sm:$0x1] %vm281, 0.0
      %290 = vst.msk [vmem:[#allocation2 + $0xc0] sm:$0x1] %vm281, 0.0
      %291 = vst.msk [vmem:[#allocation2 + $0xd8] sm:$0x1] %vm281, 0.0
      %292 = vst.msk [vmem:[#allocation2 + $0xf0] sm:$0x1] %vm281, 0.0
      %293 = vst.msk [vmem:[#allocation2 + $0x108] sm:$0x1] %vm281, 0.0
      %294 = vst.msk [vmem:[#allocation2 + $0x120] sm:$0x1] %vm281, 0.0
      %295 = vst.msk [vmem:[#allocation2 + $0x138] sm:$0x1] %vm281, 0.0
      %296 = vst.msk [vmem:[#allocation2 + $0x150] sm:$0x1] %vm281, 0.0
      %297 = vst.msk [vmem:[#allocation2 + $0x168] sm:$0x1] %vm281, 0.0
      %298 = vst.msk [vmem:[#allocation2 + $0x180] sm:$0x1] %vm281, 0.0
      %299 = vst.msk [vmem:[#allocation2 + $0x198] sm:$0x1] %vm281, 0.0
      %300 = vst.msk [vmem:[#allocation2 + $0x11] sm:$0x1] %vm281, 0.0
      %301 = vst.msk [vmem:[#allocation2 + $0x29] sm:$0x1] %vm281, 0.0
      %302 = vst.msk [vmem:[#allocation2 + $0x41] sm:$0x1] %vm281, 0.0
      %303 = vst.msk [vmem:[#allocation2 + $0x59] sm:$0x1] %vm281, 0.0
      %304 = vst.msk [vmem:[#allocation2 + $0x71] sm:$0x1] %vm281, 0.0
      %305 = vst.msk [vmem:[#allocation2 + $0x89] sm:$0x1] %vm281, 0.0
      %306 = vst.msk [vmem:[#allocation2 + $0xa1] sm:$0x1] %vm281, 0.0
      %307 = vst.msk [vmem:[#allocation2 + $0xb9] sm:$0x1] %vm281, 0.0
      %308 = vst.msk [vmem:[#allocation2 + $0xd1] sm:$0x1] %vm281, 0.0
      %309 = vst.msk [vmem:[#allocation2 + $0xe9] sm:$0x1] %vm281, 0.0
      %310 = vst.msk [vmem:[#allocation2 + $0x101] sm:$0x1] %vm281, 0.0
      %311 = vst.msk [vmem:[#allocation2 + $0x119] sm:$0x1] %vm281, 0.0
      %312 = vst.msk [vmem:[#allocation2 + $0x131] sm:$0x1] %vm281, 0.0
      %313 = vst.msk [vmem:[#allocation2 + $0x149] sm:$0x1] %vm281, 0.0
      %314 = vst.msk [vmem:[#allocation2 + $0x161] sm:$0x1] %vm281, 0.0
      %315 = vst.msk [vmem:[#allocation2 + $0x179] sm:$0x1] %vm281, 0.0
      %316 = vst.msk [vmem:[#allocation2 + $0x191] sm:$0x1] %vm281, 0.0
      %317 = vst.msk [vmem:[#allocation2 + $0x1a9] sm:$0x1] %vm281, 0.0
      %v318 = vld [vmem:[%s261] sm:$0xff]
      %v319 = vld [vmem:[%s261 + $0x8] sm:$0xff]
      %v320 = vld [vmem:[%s261 + $0x10] sm:$0xff]
      %v321 = vld [vmem:[%s261 + $0x18] sm:$0xff]
      %v322 = vld [vmem:[%s261 + $0x20] sm:$0xff]
      %v323 = vld [vmem:[%s261 + $0x28] sm:$0xff]
      %v324 = vld [vmem:[%s261 + $0x30] sm:$0xff]
      %v325 = vld [vmem:[%s261 + $0x38] sm:$0xff]
      %v326 = vld [vmem:[%s261 + $0x40] sm:$0xff]
      %v327 = vld [vmem:[%s261 + $0x48] sm:$0xff]
      %v328 = vld [vmem:[%s261 + $0x50] sm:$0xff]
      %v329 = vld [vmem:[%s261 + $0x58] sm:$0xff]
      %v330 = vld [vmem:[%s261 + $0x60] sm:$0xff]
      %v331 = vld [vmem:[%s261 + $0x68] sm:$0xff]
      %v332 = vld [vmem:[%s261 + $0x70] sm:$0xff]
      %v333 = vld [vmem:[%s261 + $0x78] sm:$0xff]
      %v334 = vld [vmem:[%s261 + $0x80] sm:$0xff]
      %v335 = vld [vmem:[%s261 + $0x88] sm:$0xff]
      %v336 = vld [vmem:[%s261 + $0x90] sm:$0xff]
      %v337 = vld [vmem:[%s261 + $0x98] sm:$0xff]
      %v338 = vld [vmem:[%s261 + $0xa0] sm:$0xff]
      %v339 = vld [vmem:[%s261 + $0xa8] sm:$0xff]
      %v340 = vld [vmem:[%s261 + $0xb0] sm:$0xff]
      %v341 = vld [vmem:[%s261 + $0xb8] sm:$0xff]
      %v342 = vld [vmem:[%s261 + $0xc0] sm:$0xff]
      %v343 = vld [vmem:[%s261 + $0xc8] sm:$0xff]
      %v344 = vld [vmem:[%s261 + $0xd0] sm:$0xff]
      %v345 = vld [vmem:[%s261 + $0xd8] sm:$0xff]
      %v346 = vld [vmem:[%s261 + $0xe0] sm:$0xff]
      %v347 = vld [vmem:[%s261 + $0xe8] sm:$0xff]
      %v348 = vld [vmem:[%s261 + $0xf0] sm:$0xff]
      %v349 = vld [vmem:[%s261 + $0xf8] sm:$0xff]
      %s350 = scalar_lea.vmem [#allocation2], 24
      %351 = vst.msk [vmem:[%s350 + $0x1] sm:$0xff] %vm272, %v318
      %352 = vst.msk [vmem:[%s350 + $0x9] sm:$0xff] %vm272, %v319
      %353 = vst.msk [vmem:[%s350 + $0x19] sm:$0xff] %vm272, %v320
      %354 = vst.msk [vmem:[%s350 + $0x21] sm:$0xff] %vm272, %v321
      %355 = vst.msk [vmem:[%s350 + $0x31] sm:$0xff] %vm272, %v322
      %356 = vst.msk [vmem:[%s350 + $0x39] sm:$0xff] %vm272, %v323
      %357 = vst.msk [vmem:[%s350 + $0x49] sm:$0xff] %vm272, %v324
      %358 = vst.msk [vmem:[%s350 + $0x51] sm:$0xff] %vm272, %v325
      %359 = vst.msk [vmem:[%s350 + $0x61] sm:$0xff] %vm272, %v326
      %360 = vst.msk [vmem:[%s350 + $0x69] sm:$0xff] %vm272, %v327
      %361 = vst.msk [vmem:[%s350 + $0x79] sm:$0xff] %vm272, %v328
      %362 = vst.msk [vmem:[%s350 + $0x81] sm:$0xff] %vm272, %v329
      %363 = vst.msk [vmem:[%s350 + $0x91] sm:$0xff] %vm272, %v330
      %364 = vst.msk [vmem:[%s350 + $0x99] sm:$0xff] %vm272, %v331
      %365 = vst.msk [vmem:[%s350 + $0xa9] sm:$0xff] %vm272, %v332
      %366 = vst.msk [vmem:[%s350 + $0xb1] sm:$0xff] %vm272, %v333
      %367 = vst.msk [vmem:[%s350 + $0xc1] sm:$0xff] %vm272, %v334
      %368 = vst.msk [vmem:[%s350 + $0xc9] sm:$0xff] %vm272, %v335
      %369 = vst.msk [vmem:[%s350 + $0xd9] sm:$0xff] %vm272, %v336
      %370 = vst.msk [vmem:[%s350 + $0xe1] sm:$0xff] %vm272, %v337
      %371 = vst.msk [vmem:[%s350 + $0xf1] sm:$0xff] %vm272, %v338
      %372 = vst.msk [vmem:[%s350 + $0xf9] sm:$0xff] %vm272, %v339
      %373 = vst.msk [vmem:[%s350 + $0x109] sm:$0xff] %vm272, %v340
      %374 = vst.msk [vmem:[%s350 + $0x111] sm:$0xff] %vm272, %v341
      %375 = vst.msk [vmem:[%s350 + $0x121] sm:$0xff] %vm272, %v342
      %376 = vst.msk [vmem:[%s350 + $0x129] sm:$0xff] %vm272, %v343
      %377 = vst.msk [vmem:[%s350 + $0x139] sm:$0xff] %vm272, %v344
      %378 = vst.msk [vmem:[%s350 + $0x141] sm:$0xff] %vm272, %v345
      %379 = vst.msk [vmem:[%s350 + $0x151] sm:$0xff] %vm272, %v346
      %380 = vst.msk [vmem:[%s350 + $0x159] sm:$0xff] %vm272, %v347
      %381 = vst.msk [vmem:[%s350 + $0x169] sm:$0xff] %vm272, %v348
      %382 = vst.msk [vmem:[%s350 + $0x171] sm:$0xff] %vm272, %v349
      %v383 = vld [vmem:[#allocation2] sm:$0xff]
      %v384 = vld [vmem:[#allocation2 + $0x8] sm:$0xff]
      %v385 = vld [vmem:[#allocation2 + $0x18] sm:$0xff]
      %v386 = vld [vmem:[#allocation2 + $0x20] sm:$0xff]
      %v387 = vld [vmem:[#allocation2 + $0x30] sm:$0xff]
      %v388 = vld [vmem:[#allocation2 + $0x38] sm:$0xff]
      %v389 = vld [vmem:[#allocation2 + $0x48] sm:$0xff]
      %v390 = vld [vmem:[#allocation2 + $0x50] sm:$0xff]
      %v391 = vld [vmem:[#allocation2 + $0x60] sm:$0xff]
      %v392 = vld [vmem:[#allocation2 + $0x68] sm:$0xff]
      %v393 = vld [vmem:[#allocation2 + $0x78] sm:$0xff]
      %v394 = vld [vmem:[#allocation2 + $0x80] sm:$0xff]
      %v395 = vld [vmem:[#allocation2 + $0x90] sm:$0xff]
      %v396 = vld [vmem:[#allocation2 + $0x98] sm:$0xff]
      %v397 = vld [vmem:[#allocation2 + $0xa8] sm:$0xff]
      %v398 = vld [vmem:[#allocation2 + $0xb0] sm:$0xff]
      %v399 = vld [vmem:[#allocation2 + $0xc0] sm:$0xff]
      %v400 = vld [vmem:[#allocation2 + $0xc8] sm:$0xff]
      %v401 = vld [vmem:[#allocation2 + $0xd8] sm:$0xff]
      %v402 = vld [vmem:[#allocation2 + $0xe0] sm:$0xff]
      %v403 = vld [vmem:[#allocation2 + $0xf0] sm:$0xff]
      %v404 = vld [vmem:[#allocation2 + $0xf8] sm:$0xff]
      %v405 = vld [vmem:[#allocation2 + $0x108] sm:$0xff]
      %v406 = vld [vmem:[#allocation2 + $0x110] sm:$0xff]
      %v407 = vld [vmem:[#allocation2 + $0x120] sm:$0xff]
      %v408 = vld [vmem:[#allocation2 + $0x128] sm:$0xff]
      %v409 = vld [vmem:[#allocation2 + $0x138] sm:$0xff]
      %v410 = vld [vmem:[#allocation2 + $0x140] sm:$0xff]
      %v411 = vld [vmem:[#allocation2 + $0x150] sm:$0xff]
      %v412 = vld [vmem:[#allocation2 + $0x158] sm:$0xff]
      %v413 = vld [vmem:[#allocation2 + $0x168] sm:$0xff]
      %v414 = vld [vmem:[#allocation2 + $0x170] sm:$0xff]
      %v415 = vld [vmem:[%s1] sm:$0xf]
      %v416 = vld [vmem:[#allocation2 + $0x1] sm:$0xff]
      %v417 = vld [vmem:[#allocation2 + $0x9] sm:$0xff]
      %v418 = vld [vmem:[#allocation2 + $0x19] sm:$0xff]
      %v419 = vld [vmem:[#allocation2 + $0x21] sm:$0xff]
      %v420 = vld [vmem:[#allocation2 + $0x31] sm:$0xff]
      %v421 = vld [vmem:[#allocation2 + $0x39] sm:$0xff]
      %v422 = vld [vmem:[#allocation2 + $0x49] sm:$0xff]
      %v423 = vld [vmem:[#allocation2 + $0x51] sm:$0xff]
      %v424 = vld [vmem:[#allocation2 + $0x61] sm:$0xff]
      %v425 = vld [vmem:[#allocation2 + $0x69] sm:$0xff]
      %v426 = vld [vmem:[#allocation2 + $0x79] sm:$0xff]
      %v427 = vld [vmem:[#allocation2 + $0x81] sm:$0xff]
      %v428 = vld [vmem:[#allocation2 + $0x91] sm:$0xff]
      %v429 = vld [vmem:[#allocation2 + $0x99] sm:$0xff]
      %v430 = vld [vmem:[#allocation2 + $0xa9] sm:$0xff]
      %v431 = vld [vmem:[#allocation2 + $0xb1] sm:$0xff]
      %v432 = vld [vmem:[#allocation2 + $0xc1] sm:$0xff]
      %v433 = vld [vmem:[#allocation2 + $0xc9] sm:$0xff]
      %v434 = vld [vmem:[#allocation2 + $0xd9] sm:$0xff]
      %v435 = vld [vmem:[#allocation2 + $0xe1] sm:$0xff]
      %v436 = vld [vmem:[#allocation2 + $0xf1] sm:$0xff]
      %v437 = vld [vmem:[#allocation2 + $0xf9] sm:$0xff]
      %v438 = vld [vmem:[#allocation2 + $0x109] sm:$0xff]
      %v439 = vld [vmem:[#allocation2 + $0x111] sm:$0xff]
      %v440 = vld [vmem:[#allocation2 + $0x121] sm:$0xff]
      %v441 = vld [vmem:[#allocation2 + $0x129] sm:$0xff]
      %v442 = vld [vmem:[#allocation2 + $0x139] sm:$0xff]
      %v443 = vld [vmem:[#allocation2 + $0x141] sm:$0xff]
      %v444 = vld [vmem:[#allocation2 + $0x151] sm:$0xff]
      %v445 = vld [vmem:[#allocation2 + $0x159] sm:$0xff]
      %v446 = vld [vmem:[#allocation2 + $0x169] sm:$0xff]
      %v447 = vld [vmem:[#allocation2 + $0x171] sm:$0xff]
      %s448 = scalar_lea.vmem %s1, 4
      %v449 = vld [vmem:[%s448] sm:$0xf]
      %v451 = vsel %vm272, %v416, 0
      %v454 = vsel %vm272, %v417, 0
      %v457 = vsel %vm272, %v418, 0
      %v460 = vsel %vm272, %v419, 0
      %v463 = vsel %vm272, %v420, 0
      %v466 = vsel %vm272, %v421, 0
      %v469 = vsel %vm272, %v422, 0
      %v472 = vsel %vm272, %v423, 0
      %v475 = vsel %vm272, %v424, 0
      %v478 = vsel %vm272, %v425, 0
      %v481 = vsel %vm272, %v426, 0
      %v484 = vsel %vm272, %v427, 0
      %v487 = vsel %vm272, %v428, 0
      %v490 = vsel %vm272, %v429, 0
      %v493 = vsel %vm272, %v430, 0
      %v496 = vsel %vm272, %v431, 0
      %v499 = vsel %vm272, %v432, 0
      %v502 = vsel %vm272, %v433, 0
      %v505 = vsel %vm272, %v434, 0
      %v508 = vsel %vm272, %v435, 0
      %v511 = vsel %vm272, %v436, 0
      %v514 = vsel %vm272, %v437, 0
      %v517 = vsel %vm272, %v438, 0
      %v520 = vsel %vm272, %v439, 0
      %v523 = vsel %vm272, %v440, 0
      %v526 = vsel %vm272, %v441, 0
      %v529 = vsel %vm272, %v442, 0
      %v532 = vsel %vm272, %v443, 0
      %v535 = vsel %vm272, %v444, 0
      %v538 = vsel %vm272, %v445, 0
      %v541 = vsel %vm272, %v446, 0
      %v544 = vsel %vm272, %v447, 0
      %vm546 = vcmask 1043456
      %v548 = vsel %vm546, %v449, 0
      %550 = vmatpush.msra.mxu0 0.0
      %551 = vmatpush.msra.mxu0 0.0
      %552 = vmatpush.msra.mxu0 0.0
      %553 = vmatpush.msra.mxu0 0.0
      %554 = vmatpush.msra.mxu0 0.0
      %555 = vmatpush.msra.mxu0 0.0
      %556 = vmatpush.msra.mxu0 0.0
      %557 = vmatpush.msra.mxu0 0.0
      %558 = vmatpush.msra.mxu0 0.0
      %559 = vmatpush.msra.mxu0 0.0
      %560 = vmatpush.msra.mxu0 0.0
      %561 = vmatpush.msra.mxu0 0.0
      %562 = vmatpush.msra.mxu0 0.0
      %563 = vmatpush.msra.mxu0 0.0
      %564 = vmatpush.msra.mxu0 0.0
      %565 = vmatpush.msra.mxu0 %v548
      %566 = vmatmul.f32.gmra.mxu0 %v451
      %v567 = vpop.f32.mrf.mxu0
      %v568 = vadd.f32 0.0, %v567
      %569 = vmatmul.f32.gmra.mxu0 %v454
      %v570 = vpop.f32.mrf.mxu0
      %v571 = vadd.f32 0.0, %v570
      %572 = vmatmul.f32.gmra.mxu0 %v457
      %v573 = vpop.f32.mrf.mxu0
      %v574 = vadd.f32 0.0, %v573
      %575 = vmatmul.f32.gmra.mxu0 %v460
      %v576 = vpop.f32.mrf.mxu0
      %v577 = vadd.f32 0.0, %v576
      %578 = vmatmul.f32.gmra.mxu0 %v463
      %v579 = vpop.f32.mrf.mxu0
      %v580 = vadd.f32 0.0, %v579
      %581 = vmatmul.f32.gmra.mxu0 %v466
      %v582 = vpop.f32.mrf.mxu0
      %v583 = vadd.f32 0.0, %v582
      %584 = vmatmul.f32.gmra.mxu0 %v469
      %v585 = vpop.f32.mrf.mxu0
      %v586 = vadd.f32 0.0, %v585
      %587 = vmatmul.f32.gmra.mxu0 %v472
      %v588 = vpop.f32.mrf.mxu0
      %v589 = vadd.f32 0.0, %v588
      %590 = vmatmul.f32.gmra.mxu0 %v475
      %v591 = vpop.f32.mrf.mxu0
      %v592 = vadd.f32 0.0, %v591
      %593 = vmatmul.f32.gmra.mxu0 %v478
      %v594 = vpop.f32.mrf.mxu0
      %v595 = vadd.f32 0.0, %v594
      %596 = vmatmul.f32.gmra.mxu0 %v481
      %v597 = vpop.f32.mrf.mxu0
      %v598 = vadd.f32 0.0, %v597
      %599 = vmatmul.f32.gmra.mxu0 %v484
      %v600 = vpop.f32.mrf.mxu0
      %v601 = vadd.f32 0.0, %v600
      %602 = vmatmul.f32.gmra.mxu0 %v487
      %v603 = vpop.f32.mrf.mxu0
      %v604 = vadd.f32 0.0, %v603
      %605 = vmatmul.f32.gmra.mxu0 %v490
      %v606 = vpop.f32.mrf.mxu0
      %v607 = vadd.f32 0.0, %v606
      %608 = vmatmul.f32.gmra.mxu0 %v493
      %v609 = vpop.f32.mrf.mxu0
      %v610 = vadd.f32 0.0, %v609
      %611 = vmatmul.f32.gmra.mxu0 %v496
      %v612 = vpop.f32.mrf.mxu0
      %v613 = vadd.f32 0.0, %v612
      %614 = vmatmul.f32.gmra.mxu0 %v499
      %v615 = vpop.f32.mrf.mxu0
      %v616 = vadd.f32 0.0, %v615
      %617 = vmatmul.f32.gmra.mxu0 %v502
      %v618 = vpop.f32.mrf.mxu0
      %v619 = vadd.f32 0.0, %v618
      %620 = vmatmul.f32.gmra.mxu0 %v505
      %v621 = vpop.f32.mrf.mxu0
      %v622 = vadd.f32 0.0, %v621
      %623 = vmatmul.f32.gmra.mxu0 %v508
      %v624 = vpop.f32.mrf.mxu0
      %v625 = vadd.f32 0.0, %v624
      %626 = vmatmul.f32.gmra.mxu0 %v511
      %v627 = vpop.f32.mrf.mxu0
      %v628 = vadd.f32 0.0, %v627
      %629 = vmatmul.f32.gmra.mxu0 %v514
      %v630 = vpop.f32.mrf.mxu0
      %v631 = vadd.f32 0.0, %v630
      %632 = vmatmul.f32.gmra.mxu0 %v517
      %v633 = vpop.f32.mrf.mxu0
      %v634 = vadd.f32 0.0, %v633
      %635 = vmatmul.f32.gmra.mxu0 %v520
      %v636 = vpop.f32.mrf.mxu0
      %v637 = vadd.f32 0.0, %v636
      %638 = vmatmul.f32.gmra.mxu0 %v523
      %v639 = vpop.f32.mrf.mxu0
      %v640 = vadd.f32 0.0, %v639
      %641 = vmatmul.f32.gmra.mxu0 %v526
      %v642 = vpop.f32.mrf.mxu0
      %v643 = vadd.f32 0.0, %v642
      %644 = vmatmul.f32.gmra.mxu0 %v529
      %v645 = vpop.f32.mrf.mxu0
      %v646 = vadd.f32 0.0, %v645
      %647 = vmatmul.f32.gmra.mxu0 %v532
      %v648 = vpop.f32.mrf.mxu0
      %v649 = vadd.f32 0.0, %v648
      %650 = vmatmul.f32.gmra.mxu0 %v535
      %v651 = vpop.f32.mrf.mxu0
      %v652 = vadd.f32 0.0, %v651
      %653 = vmatmul.f32.gmra.mxu0 %v538
      %v654 = vpop.f32.mrf.mxu0
      %v655 = vadd.f32 0.0, %v654
      %656 = vmatmul.f32.gmra.mxu0 %v541
      %v657 = vpop.f32.mrf.mxu0
      %v658 = vadd.f32 0.0, %v657
      %659 = vmatmul.f32.gmra.mxu0 %v544
      %v660 = vpop.f32.mrf.mxu0
      %v661 = vadd.f32 0.0, %v660
      %662 = vdwg.mxu0
      %v664 = vsel %vm272, %v383, 0
      %v667 = vsel %vm272, %v384, 0
      %v670 = vsel %vm272, %v385, 0
      %v673 = vsel %vm272, %v386, 0
      %v676 = vsel %vm272, %v387, 0
      %v679 = vsel %vm272, %v388, 0
      %v682 = vsel %vm272, %v389, 0
      %v685 = vsel %vm272, %v390, 0
      %v688 = vsel %vm272, %v391, 0
      %v691 = vsel %vm272, %v392, 0
      %v694 = vsel %vm272, %v393, 0
      %v697 = vsel %vm272, %v394, 0
      %v700 = vsel %vm272, %v395, 0
      %v703 = vsel %vm272, %v396, 0
      %v706 = vsel %vm272, %v397, 0
      %v709 = vsel %vm272, %v398, 0
      %v712 = vsel %vm272, %v399, 0
      %v715 = vsel %vm272, %v400, 0
      %v718 = vsel %vm272, %v401, 0
      %v721 = vsel %vm272, %v402, 0
      %v724 = vsel %vm272, %v403, 0
      %v727 = vsel %vm272, %v404, 0
      %v730 = vsel %vm272, %v405, 0
      %v733 = vsel %vm272, %v406, 0
      %v736 = vsel %vm272, %v407, 0
      %v739 = vsel %vm272, %v408, 0
      %v742 = vsel %vm272, %v409, 0
      %v745 = vsel %vm272, %v410, 0
      %v748 = vsel %vm272, %v411, 0
      %v751 = vsel %vm272, %v412, 0
      %v754 = vsel %vm272, %v413, 0
      %v757 = vsel %vm272, %v414, 0
      %v760 = vsel %vm546, %v415, 0
      %762 = vmatpush.msra.mxu0 0.0
      %763 = vmatpush.msra.mxu0 0.0
      %764 = vmatpush.msra.mxu0 0.0
      %765 = vmatpush.msra.mxu0 0.0
      %766 = vmatpush.msra.mxu0 0.0
      %767 = vmatpush.msra.mxu0 0.0
      %768 = vmatpush.msra.mxu0 0.0
      %769 = vmatpush.msra.mxu0 0.0
      %770 = vmatpush.msra.mxu0 0.0
      %771 = vmatpush.msra.mxu0 0.0
      %772 = vmatpush.msra.mxu0 0.0
      %773 = vmatpush.msra.mxu0 0.0
      %774 = vmatpush.msra.mxu0 0.0
      %775 = vmatpush.msra.mxu0 0.0
      %776 = vmatpush.msra.mxu0 0.0
      %777 = vmatpush.msra.mxu0 %v760
      %778 = vmatmul.f32.gmra.mxu0 %v664
      %v779 = vpop.f32.mrf.mxu0
      %v780 = vadd.f32 %v568, %v779
      %781 = vmatmul.f32.gmra.mxu0 %v667
      %v782 = vpop.f32.mrf.mxu0
      %v783 = vadd.f32 %v571, %v782
      %784 = vmatmul.f32.gmra.mxu0 %v670
      %v785 = vpop.f32.mrf.mxu0
      %v786 = vadd.f32 %v574, %v785
      %787 = vmatmul.f32.gmra.mxu0 %v673
      %v788 = vpop.f32.mrf.mxu0
      %v789 = vadd.f32 %v577, %v788
      %790 = vmatmul.f32.gmra.mxu0 %v676
      %v791 = vpop.f32.mrf.mxu0
      %v792 = vadd.f32 %v580, %v791
      %793 = vmatmul.f32.gmra.mxu0 %v679
      %v794 = vpop.f32.mrf.mxu0
      %v795 = vadd.f32 %v583, %v794
      %796 = vmatmul.f32.gmra.mxu0 %v682
      %v797 = vpop.f32.mrf.mxu0
      %v798 = vadd.f32 %v586, %v797
      %799 = vmatmul.f32.gmra.mxu0 %v685
      %v800 = vpop.f32.mrf.mxu0
      %v801 = vadd.f32 %v589, %v800
      %802 = vmatmul.f32.gmra.mxu0 %v688
      %v803 = vpop.f32.mrf.mxu0
      %v804 = vadd.f32 %v592, %v803
      %805 = vmatmul.f32.gmra.mxu0 %v691
      %v806 = vpop.f32.mrf.mxu0
      %v807 = vadd.f32 %v595, %v806
      %808 = vmatmul.f32.gmra.mxu0 %v694
      %v809 = vpop.f32.mrf.mxu0
      %v810 = vadd.f32 %v598, %v809
      %811 = vmatmul.f32.gmra.mxu0 %v697
      %v812 = vpop.f32.mrf.mxu0
      %v813 = vadd.f32 %v601, %v812
      %814 = vmatmul.f32.gmra.mxu0 %v700
      %v815 = vpop.f32.mrf.mxu0
      %v816 = vadd.f32 %v604, %v815
      %817 = vmatmul.f32.gmra.mxu0 %v703
      %v818 = vpop.f32.mrf.mxu0
      %v819 = vadd.f32 %v607, %v818
      %820 = vmatmul.f32.gmra.mxu0 %v706
      %v821 = vpop.f32.mrf.mxu0
      %v822 = vadd.f32 %v610, %v821
      %823 = vmatmul.f32.gmra.mxu0 %v709
      %v824 = vpop.f32.mrf.mxu0
      %v825 = vadd.f32 %v613, %v824
      %826 = vmatmul.f32.gmra.mxu0 %v712
      %v827 = vpop.f32.mrf.mxu0
      %v828 = vadd.f32 %v616, %v827
      %829 = vmatmul.f32.gmra.mxu0 %v715
      %v830 = vpop.f32.mrf.mxu0
      %v831 = vadd.f32 %v619, %v830
      %832 = vmatmul.f32.gmra.mxu0 %v718
      %v833 = vpop.f32.mrf.mxu0
      %v834 = vadd.f32 %v622, %v833
      %835 = vmatmul.f32.gmra.mxu0 %v721
      %v836 = vpop.f32.mrf.mxu0
      %v837 = vadd.f32 %v625, %v836
      %838 = vmatmul.f32.gmra.mxu0 %v724
      %v839 = vpop.f32.mrf.mxu0
      %v840 = vadd.f32 %v628, %v839
      %841 = vmatmul.f32.gmra.mxu0 %v727
      %v842 = vpop.f32.mrf.mxu0
      %v843 = vadd.f32 %v631, %v842
      %844 = vmatmul.f32.gmra.mxu0 %v730
      %v845 = vpop.f32.mrf.mxu0
      %v846 = vadd.f32 %v634, %v845
      %847 = vmatmul.f32.gmra.mxu0 %v733
      %v848 = vpop.f32.mrf.mxu0
      %v849 = vadd.f32 %v637, %v848
      %850 = vmatmul.f32.gmra.mxu0 %v736
      %v851 = vpop.f32.mrf.mxu0
      %v852 = vadd.f32 %v640, %v851
      %853 = vmatmul.f32.gmra.mxu0 %v739
      %v854 = vpop.f32.mrf.mxu0
      %v855 = vadd.f32 %v643, %v854
      %856 = vmatmul.f32.gmra.mxu0 %v742
      %v857 = vpop.f32.mrf.mxu0
      %v858 = vadd.f32 %v646, %v857
      %859 = vmatmul.f32.gmra.mxu0 %v745
      %v860 = vpop.f32.mrf.mxu0
      %v861 = vadd.f32 %v649, %v860
      %862 = vmatmul.f32.gmra.mxu0 %v748
      %v863 = vpop.f32.mrf.mxu0
      %v864 = vadd.f32 %v652, %v863
      %865 = vmatmul.f32.gmra.mxu0 %v751
      %v866 = vpop.f32.mrf.mxu0
      %v867 = vadd.f32 %v655, %v866
      %868 = vmatmul.f32.gmra.mxu0 %v754
      %v869 = vpop.f32.mrf.mxu0
      %v870 = vadd.f32 %v658, %v869
      %871 = vmatmul.f32.gmra.mxu0 %v757
      %v872 = vpop.f32.mrf.mxu0
      %v873 = vadd.f32 %v661, %v872
      %874 = vdwg.mxu0
      %v875 = vld [vmem:[#allocation2 + $0x2] sm:$0xff]
      %v876 = vld [vmem:[#allocation2 + $0xa] sm:$0xff]
      %v877 = vld [vmem:[#allocation2 + $0x1a] sm:$0xff]
      %v878 = vld [vmem:[#allocation2 + $0x22] sm:$0xff]
      %v879 = vld [vmem:[#allocation2 + $0x32] sm:$0xff]
      %v880 = vld [vmem:[#allocation2 + $0x3a] sm:$0xff]
      %v881 = vld [vmem:[#allocation2 + $0x4a] sm:$0xff]
      %v882 = vld [vmem:[#allocation2 + $0x52] sm:$0xff]
      %v883 = vld [vmem:[#allocation2 + $0x62] sm:$0xff]
      %v884 = vld [vmem:[#allocation2 + $0x6a] sm:$0xff]
      %v885 = vld [vmem:[#allocation2 + $0x7a] sm:$0xff]
      %v886 = vld [vmem:[#allocation2 + $0x82] sm:$0xff]
      %v887 = vld [vmem:[#allocation2 + $0x92] sm:$0xff]
      %v888 = vld [vmem:[#allocation2 + $0x9a] sm:$0xff]
      %v889 = vld [vmem:[#allocation2 + $0xaa] sm:$0xff]
      %v890 = vld [vmem:[#allocation2 + $0xb2] sm:$0xff]
      %v891 = vld [vmem:[#allocation2 + $0xc2] sm:$0xff]
      %v892 = vld [vmem:[#allocation2 + $0xca] sm:$0xff]
      %v893 = vld [vmem:[#allocation2 + $0xda] sm:$0xff]
      %v894 = vld [vmem:[#allocation2 + $0xe2] sm:$0xff]
      %v895 = vld [vmem:[#allocation2 + $0xf2] sm:$0xff]
      %v896 = vld [vmem:[#allocation2 + $0xfa] sm:$0xff]
      %v897 = vld [vmem:[#allocation2 + $0x10a] sm:$0xff]
      %v898 = vld [vmem:[#allocation2 + $0x112] sm:$0xff]
      %v899 = vld [vmem:[#allocation2 + $0x122] sm:$0xff]
      %v900 = vld [vmem:[#allocation2 + $0x12a] sm:$0xff]
      %v901 = vld [vmem:[#allocation2 + $0x13a] sm:$0xff]
      %v902 = vld [vmem:[#allocation2 + $0x142] sm:$0xff]
      %v903 = vld [vmem:[#allocation2 + $0x152] sm:$0xff]
      %v904 = vld [vmem:[#allocation2 + $0x15a] sm:$0xff]
      %v905 = vld [vmem:[#allocation2 + $0x16a] sm:$0xff]
      %v906 = vld [vmem:[#allocation2 + $0x172] sm:$0xff]
      %s907 = scalar_lea.vmem %s1, 8
      %v908 = vld [vmem:[%s907] sm:$0xf]
      %v910 = vsel %vm272, %v875, 0
      %v913 = vsel %vm272, %v876, 0
      %v916 = vsel %vm272, %v877, 0
      %v919 = vsel %vm272, %v878, 0
      %v922 = vsel %vm272, %v879, 0
      %v925 = vsel %vm272, %v880, 0
      %v928 = vsel %vm272, %v881, 0
      %v931 = vsel %vm272, %v882, 0
      %v934 = vsel %vm272, %v883, 0
      %v937 = vsel %vm272, %v884, 0
      %v940 = vsel %vm272, %v885, 0
      %v943 = vsel %vm272, %v886, 0
      %v946 = vsel %vm272, %v887, 0
      %v949 = vsel %vm272, %v888, 0
      %v952 = vsel %vm272, %v889, 0
      %v955 = vsel %vm272, %v890, 0
      %v958 = vsel %vm272, %v891, 0
      %v961 = vsel %vm272, %v892, 0
      %v964 = vsel %vm272, %v893, 0
      %v967 = vsel %vm272, %v894, 0
      %v970 = vsel %vm272, %v895, 0
      %v973 = vsel %vm272, %v896, 0
      %v976 = vsel %vm272, %v897, 0
      %v979 = vsel %vm272, %v898, 0
      %v982 = vsel %vm272, %v899, 0
      %v985 = vsel %vm272, %v900, 0
      %v988 = vsel %vm272, %v901, 0
      %v991 = vsel %vm272, %v902, 0
      %v994 = vsel %vm272, %v903, 0
      %v997 = vsel %vm272, %v904, 0
      %v1000 = vsel %vm272, %v905, 0
      %v1003 = vsel %vm272, %v906, 0
      %v1006 = vsel %vm546, %v908, 0
      %1008 = vmatpush.msra.mxu0 0.0
      %1009 = vmatpush.msra.mxu0 0.0
      %1010 = vmatpush.msra.mxu0 0.0
      %1011 = vmatpush.msra.mxu0 0.0
      %1012 = vmatpush.msra.mxu0 0.0
      %1013 = vmatpush.msra.mxu0 0.0
      %1014 = vmatpush.msra.mxu0 0.0
      %1015 = vmatpush.msra.mxu0 0.0
      %1016 = vmatpush.msra.mxu0 0.0
      %1017 = vmatpush.msra.mxu0 0.0
      %1018 = vmatpush.msra.mxu0 0.0
      %1019 = vmatpush.msra.mxu0 0.0
      %1020 = vmatpush.msra.mxu0 0.0
      %1021 = vmatpush.msra.mxu0 0.0
      %1022 = vmatpush.msra.mxu0 0.0
      %1023 = vmatpush.msra.mxu0 %v1006
      %1024 = vmatmul.f32.gmra.mxu0 %v910
      %v1025 = vpop.f32.mrf.mxu0
      %v1026 = vadd.f32 0.0, %v1025
      %1027 = vmatmul.f32.gmra.mxu0 %v913
      %v1028 = vpop.f32.mrf.mxu0
      %v1029 = vadd.f32 0.0, %v1028
      %1030 = vmatmul.f32.gmra.mxu0 %v916
      %v1031 = vpop.f32.mrf.mxu0
      %v1032 = vadd.f32 0.0, %v1031
      %1033 = vmatmul.f32.gmra.mxu0 %v919
      %v1034 = vpop.f32.mrf.mxu0
      %v1035 = vadd.f32 0.0, %v1034
      %1036 = vmatmul.f32.gmra.mxu0 %v922
      %v1037 = vpop.f32.mrf.mxu0
      %v1038 = vadd.f32 0.0, %v1037
      %1039 = vmatmul.f32.gmra.mxu0 %v925
      %v1040 = vpop.f32.mrf.mxu0
      %v1041 = vadd.f32 0.0, %v1040
      %1042 = vmatmul.f32.gmra.mxu0 %v928
      %v1043 = vpop.f32.mrf.mxu0
      %v1044 = vadd.f32 0.0, %v1043
      %1045 = vmatmul.f32.gmra.mxu0 %v931
      %v1046 = vpop.f32.mrf.mxu0
      %v1047 = vadd.f32 0.0, %v1046
      %1048 = vmatmul.f32.gmra.mxu0 %v934
      %v1049 = vpop.f32.mrf.mxu0
      %v1050 = vadd.f32 0.0, %v1049
      %1051 = vmatmul.f32.gmra.mxu0 %v937
      %v1052 = vpop.f32.mrf.mxu0
      %v1053 = vadd.f32 0.0, %v1052
      %1054 = vmatmul.f32.gmra.mxu0 %v940
      %v1055 = vpop.f32.mrf.mxu0
      %v1056 = vadd.f32 0.0, %v1055
      %1057 = vmatmul.f32.gmra.mxu0 %v943
      %v1058 = vpop.f32.mrf.mxu0
      %v1059 = vadd.f32 0.0, %v1058
      %1060 = vmatmul.f32.gmra.mxu0 %v946
      %v1061 = vpop.f32.mrf.mxu0
      %v1062 = vadd.f32 0.0, %v1061
      %1063 = vmatmul.f32.gmra.mxu0 %v949
      %v1064 = vpop.f32.mrf.mxu0
      %v1065 = vadd.f32 0.0, %v1064
      %1066 = vmatmul.f32.gmra.mxu0 %v952
      %v1067 = vpop.f32.mrf.mxu0
      %v1068 = vadd.f32 0.0, %v1067
      %1069 = vmatmul.f32.gmra.mxu0 %v955
      %v1070 = vpop.f32.mrf.mxu0
      %v1071 = vadd.f32 0.0, %v1070
      %1072 = vmatmul.f32.gmra.mxu0 %v958
      %v1073 = vpop.f32.mrf.mxu0
      %v1074 = vadd.f32 0.0, %v1073
      %1075 = vmatmul.f32.gmra.mxu0 %v961
      %v1076 = vpop.f32.mrf.mxu0
      %v1077 = vadd.f32 0.0, %v1076
      %1078 = vmatmul.f32.gmra.mxu0 %v964
      %v1079 = vpop.f32.mrf.mxu0
      %v1080 = vadd.f32 0.0, %v1079
      %1081 = vmatmul.f32.gmra.mxu0 %v967
      %v1082 = vpop.f32.mrf.mxu0
      %v1083 = vadd.f32 0.0, %v1082
      %1084 = vmatmul.f32.gmra.mxu0 %v970
      %v1085 = vpop.f32.mrf.mxu0
      %v1086 = vadd.f32 0.0, %v1085
      %1087 = vmatmul.f32.gmra.mxu0 %v973
      %v1088 = vpop.f32.mrf.mxu0
      %v1089 = vadd.f32 0.0, %v1088
      %1090 = vmatmul.f32.gmra.mxu0 %v976
      %v1091 = vpop.f32.mrf.mxu0
      %v1092 = vadd.f32 0.0, %v1091
      %1093 = vmatmul.f32.gmra.mxu0 %v979
      %v1094 = vpop.f32.mrf.mxu0
      %v1095 = vadd.f32 0.0, %v1094
      %1096 = vmatmul.f32.gmra.mxu0 %v982
      %v1097 = vpop.f32.mrf.mxu0
      %v1098 = vadd.f32 0.0, %v1097
      %1099 = vmatmul.f32.gmra.mxu0 %v985
      %v1100 = vpop.f32.mrf.mxu0
      %v1101 = vadd.f32 0.0, %v1100
      %1102 = vmatmul.f32.gmra.mxu0 %v988
      %v1103 = vpop.f32.mrf.mxu0
      %v1104 = vadd.f32 0.0, %v1103
      %1105 = vmatmul.f32.gmra.mxu0 %v991
      %v1106 = vpop.f32.mrf.mxu0
      %v1107 = vadd.f32 0.0, %v1106
      %1108 = vmatmul.f32.gmra.mxu0 %v994
      %v1109 = vpop.f32.mrf.mxu0
      %v1110 = vadd.f32 0.0, %v1109
      %1111 = vmatmul.f32.gmra.mxu0 %v997
      %v1112 = vpop.f32.mrf.mxu0
      %v1113 = vadd.f32 0.0, %v1112
      %1114 = vmatmul.f32.gmra.mxu0 %v1000
      %v1115 = vpop.f32.mrf.mxu0
      %v1116 = vadd.f32 0.0, %v1115
      %1117 = vmatmul.f32.gmra.mxu0 %v1003
      %v1118 = vpop.f32.mrf.mxu0
      %v1119 = vadd.f32 0.0, %v1118
      %1120 = vdwg.mxu0
      %v1121 = vadd.f32 %v780, %v1026
      %v1122 = vadd.f32 %v783, %v1029
      %v1123 = vadd.f32 %v786, %v1032
      %v1124 = vadd.f32 %v789, %v1035
      %v1125 = vadd.f32 %v792, %v1038
      %v1126 = vadd.f32 %v795, %v1041
      %v1127 = vadd.f32 %v798, %v1044
      %v1128 = vadd.f32 %v801, %v1047
      %v1129 = vadd.f32 %v804, %v1050
      %v1130 = vadd.f32 %v807, %v1053
      %v1131 = vadd.f32 %v810, %v1056
      %v1132 = vadd.f32 %v813, %v1059
      %v1133 = vadd.f32 %v816, %v1062
      %v1134 = vadd.f32 %v819, %v1065
      %v1135 = vadd.f32 %v822, %v1068
      %v1136 = vadd.f32 %v825, %v1071
      %v1137 = vadd.f32 %v828, %v1074
      %v1138 = vadd.f32 %v831, %v1077
      %v1139 = vadd.f32 %v834, %v1080
      %v1140 = vadd.f32 %v837, %v1083
      %v1141 = vadd.f32 %v840, %v1086
      %v1142 = vadd.f32 %v843, %v1089
      %v1143 = vadd.f32 %v846, %v1092
      %v1144 = vadd.f32 %v849, %v1095
      %v1145 = vadd.f32 %v852, %v1098
      %v1146 = vadd.f32 %v855, %v1101
      %v1147 = vadd.f32 %v858, %v1104
      %v1148 = vadd.f32 %v861, %v1107
      %v1149 = vadd.f32 %v864, %v1110
      %v1150 = vadd.f32 %v867, %v1113
      %v1151 = vadd.f32 %v870, %v1116
      %v1152 = vadd.f32 %v873, %v1119
      %v1153 = vld [vmem:[%s350] sm:$0xff]
      %v1154 = vld [vmem:[%s350 + $0x8] sm:$0xff]
      %v1155 = vld [vmem:[%s350 + $0x18] sm:$0xff]
      %v1156 = vld [vmem:[%s350 + $0x20] sm:$0xff]
      %v1157 = vld [vmem:[%s350 + $0x30] sm:$0xff]
      %v1158 = vld [vmem:[%s350 + $0x38] sm:$0xff]
      %v1159 = vld [vmem:[%s350 + $0x48] sm:$0xff]
      %v1160 = vld [vmem:[%s350 + $0x50] sm:$0xff]
      %v1161 = vld [vmem:[%s350 + $0x60] sm:$0xff]
      %v1162 = vld [vmem:[%s350 + $0x68] sm:$0xff]
      %v1163 = vld [vmem:[%s350 + $0x78] sm:$0xff]
      %v1164 = vld [vmem:[%s350 + $0x80] sm:$0xff]
      %v1165 = vld [vmem:[%s350 + $0x90] sm:$0xff]
      %v1166 = vld [vmem:[%s350 + $0x98] sm:$0xff]
      %v1167 = vld [vmem:[%s350 + $0xa8] sm:$0xff]
      %v1168 = vld [vmem:[%s350 + $0xb0] sm:$0xff]
      %v1169 = vld [vmem:[%s350 + $0xc0] sm:$0xff]
      %v1170 = vld [vmem:[%s350 + $0xc8] sm:$0xff]
      %v1171 = vld [vmem:[%s350 + $0xd8] sm:$0xff]
      %v1172 = vld [vmem:[%s350 + $0xe0] sm:$0xff]
      %v1173 = vld [vmem:[%s350 + $0xf0] sm:$0xff]
      %v1174 = vld [vmem:[%s350 + $0xf8] sm:$0xff]
      %v1175 = vld [vmem:[%s350 + $0x108] sm:$0xff]
      %v1176 = vld [vmem:[%s350 + $0x110] sm:$0xff]
      %v1177 = vld [vmem:[%s350 + $0x120] sm:$0xff]
      %v1178 = vld [vmem:[%s350 + $0x128] sm:$0xff]
      %v1179 = vld [vmem:[%s350 + $0x138] sm:$0xff]
      %v1180 = vld [vmem:[%s350 + $0x140] sm:$0xff]
      %v1181 = vld [vmem:[%s350 + $0x150] sm:$0xff]
      %v1182 = vld [vmem:[%s350 + $0x158] sm:$0xff]
      %v1183 = vld [vmem:[%s350 + $0x168] sm:$0xff]
      %v1184 = vld [vmem:[%s350 + $0x170] sm:$0xff]
      %s1185 = scalar_lea.vmem %s1, 12
      %v1186 = vld [vmem:[%s1185] sm:$0xf]
      %v1188 = vsel %vm272, %v1153, 0
      %v1191 = vsel %vm272, %v1154, 0
      %v1194 = vsel %vm272, %v1155, 0
      %v1197 = vsel %vm272, %v1156, 0
      %v1200 = vsel %vm272, %v1157, 0
      %v1203 = vsel %vm272, %v1158, 0
      %v1206 = vsel %vm272, %v1159, 0
      %v1209 = vsel %vm272, %v1160, 0
      %v1212 = vsel %vm272, %v1161, 0
      %v1215 = vsel %vm272, %v1162, 0
      %v1218 = vsel %vm272, %v1163, 0
      %v1221 = vsel %vm272, %v1164, 0
      %v1224 = vsel %vm272, %v1165, 0
      %v1227 = vsel %vm272, %v1166, 0
      %v1230 = vsel %vm272, %v1167, 0
      %v1233 = vsel %vm272, %v1168, 0
      %v1236 = vsel %vm272, %v1169, 0
      %v1239 = vsel %vm272, %v1170, 0
      %v1242 = vsel %vm272, %v1171, 0
      %v1245 = vsel %vm272, %v1172, 0
      %v1248 = vsel %vm272, %v1173, 0
      %v1251 = vsel %vm272, %v1174, 0
      %v1254 = vsel %vm272, %v1175, 0
      %v1257 = vsel %vm272, %v1176, 0
      %v1260 = vsel %vm272, %v1177, 0
      %v1263 = vsel %vm272, %v1178, 0
      %v1266 = vsel %vm272, %v1179, 0
      %v1269 = vsel %vm272, %v1180, 0
      %v1272 = vsel %vm272, %v1181, 0
      %v1275 = vsel %vm272, %v1182, 0
      %v1278 = vsel %vm272, %v1183, 0
      %v1281 = vsel %vm272, %v1184, 0
      %v1284 = vsel %vm546, %v1186, 0
      %1286 = vmatpush.msra.mxu0 0.0
      %1287 = vmatpush.msra.mxu0 0.0
      %1288 = vmatpush.msra.mxu0 0.0
      %1289 = vmatpush.msra.mxu0 0.0
      %1290 = vmatpush.msra.mxu0 0.0
      %1291 = vmatpush.msra.mxu0 0.0
      %1292 = vmatpush.msra.mxu0 0.0
      %1293 = vmatpush.msra.mxu0 0.0
      %1294 = vmatpush.msra.mxu0 0.0
      %1295 = vmatpush.msra.mxu0 0.0
      %1296 = vmatpush.msra.mxu0 0.0
      %1297 = vmatpush.msra.mxu0 0.0
      %1298 = vmatpush.msra.mxu0 0.0
      %1299 = vmatpush.msra.mxu0 0.0
      %1300 = vmatpush.msra.mxu0 0.0
      %1301 = vmatpush.msra.mxu0 %v1284
      %1302 = vmatmul.f32.gmra.mxu0 %v1188
      %v1303 = vpop.f32.mrf.mxu0
      %v1304 = vadd.f32 0.0, %v1303
      %1305 = vmatmul.f32.gmra.mxu0 %v1191
      %v1306 = vpop.f32.mrf.mxu0
      %v1307 = vadd.f32 0.0, %v1306
      %1308 = vmatmul.f32.gmra.mxu0 %v1194
      %v1309 = vpop.f32.mrf.mxu0
      %v1310 = vadd.f32 0.0, %v1309
      %1311 = vmatmul.f32.gmra.mxu0 %v1197
      %v1312 = vpop.f32.mrf.mxu0
      %v1313 = vadd.f32 0.0, %v1312
      %1314 = vmatmul.f32.gmra.mxu0 %v1200
      %v1315 = vpop.f32.mrf.mxu0
      %v1316 = vadd.f32 0.0, %v1315
      %1317 = vmatmul.f32.gmra.mxu0 %v1203
      %v1318 = vpop.f32.mrf.mxu0
      %v1319 = vadd.f32 0.0, %v1318
      %1320 = vmatmul.f32.gmra.mxu0 %v1206
      %v1321 = vpop.f32.mrf.mxu0
      %v1322 = vadd.f32 0.0, %v1321
      %1323 = vmatmul.f32.gmra.mxu0 %v1209
      %v1324 = vpop.f32.mrf.mxu0
      %v1325 = vadd.f32 0.0, %v1324
      %1326 = vmatmul.f32.gmra.mxu0 %v1212
      %v1327 = vpop.f32.mrf.mxu0
      %v1328 = vadd.f32 0.0, %v1327
      %1329 = vmatmul.f32.gmra.mxu0 %v1215
      %v1330 = vpop.f32.mrf.mxu0
      %v1331 = vadd.f32 0.0, %v1330
      %1332 = vmatmul.f32.gmra.mxu0 %v1218
      %v1333 = vpop.f32.mrf.mxu0
      %v1334 = vadd.f32 0.0, %v1333
      %1335 = vmatmul.f32.gmra.mxu0 %v1221
      %v1336 = vpop.f32.mrf.mxu0
      %v1337 = vadd.f32 0.0, %v1336
      %1338 = vmatmul.f32.gmra.mxu0 %v1224
      %v1339 = vpop.f32.mrf.mxu0
      %v1340 = vadd.f32 0.0, %v1339
      %1341 = vmatmul.f32.gmra.mxu0 %v1227
      %v1342 = vpop.f32.mrf.mxu0
      %v1343 = vadd.f32 0.0, %v1342
      %1344 = vmatmul.f32.gmra.mxu0 %v1230
      %v1345 = vpop.f32.mrf.mxu0
      %v1346 = vadd.f32 0.0, %v1345
      %1347 = vmatmul.f32.gmra.mxu0 %v1233
      %v1348 = vpop.f32.mrf.mxu0
      %v1349 = vadd.f32 0.0, %v1348
      %1350 = vmatmul.f32.gmra.mxu0 %v1236
      %v1351 = vpop.f32.mrf.mxu0
      %v1352 = vadd.f32 0.0, %v1351
      %1353 = vmatmul.f32.gmra.mxu0 %v1239
      %v1354 = vpop.f32.mrf.mxu0
      %v1355 = vadd.f32 0.0, %v1354
      %1356 = vmatmul.f32.gmra.mxu0 %v1242
      %v1357 = vpop.f32.mrf.mxu0
      %v1358 = vadd.f32 0.0, %v1357
      %1359 = vmatmul.f32.gmra.mxu0 %v1245
      %v1360 = vpop.f32.mrf.mxu0
      %v1361 = vadd.f32 0.0, %v1360
      %1362 = vmatmul.f32.gmra.mxu0 %v1248
      %v1363 = vpop.f32.mrf.mxu0
      %v1364 = vadd.f32 0.0, %v1363
      %1365 = vmatmul.f32.gmra.mxu0 %v1251
      %v1366 = vpop.f32.mrf.mxu0
      %v1367 = vadd.f32 0.0, %v1366
      %1368 = vmatmul.f32.gmra.mxu0 %v1254
      %v1369 = vpop.f32.mrf.mxu0
      %v1370 = vadd.f32 0.0, %v1369
      %1371 = vmatmul.f32.gmra.mxu0 %v1257
      %v1372 = vpop.f32.mrf.mxu0
      %v1373 = vadd.f32 0.0, %v1372
      %1374 = vmatmul.f32.gmra.mxu0 %v1260
      %v1375 = vpop.f32.mrf.mxu0
      %v1376 = vadd.f32 0.0, %v1375
      %1377 = vmatmul.f32.gmra.mxu0 %v1263
      %v1378 = vpop.f32.mrf.mxu0
      %v1379 = vadd.f32 0.0, %v1378
      %1380 = vmatmul.f32.gmra.mxu0 %v1266
      %v1381 = vpop.f32.mrf.mxu0
      %v1382 = vadd.f32 0.0, %v1381
      %1383 = vmatmul.f32.gmra.mxu0 %v1269
      %v1384 = vpop.f32.mrf.mxu0
      %v1385 = vadd.f32 0.0, %v1384
      %1386 = vmatmul.f32.gmra.mxu0 %v1272
      %v1387 = vpop.f32.mrf.mxu0
      %v1388 = vadd.f32 0.0, %v1387
      %1389 = vmatmul.f32.gmra.mxu0 %v1275
      %v1390 = vpop.f32.mrf.mxu0
      %v1391 = vadd.f32 0.0, %v1390
      %1392 = vmatmul.f32.gmra.mxu0 %v1278
      %v1393 = vpop.f32.mrf.mxu0
      %v1394 = vadd.f32 0.0, %v1393
      %1395 = vmatmul.f32.gmra.mxu0 %v1281
      %v1396 = vpop.f32.mrf.mxu0
      %v1397 = vadd.f32 0.0, %v1396
      %1398 = vdwg.mxu0
      %v1399 = vadd.f32 %v1121, %v1304
      %v1400 = vadd.f32 %v1122, %v1307
      %v1401 = vadd.f32 %v1123, %v1310
      %v1402 = vadd.f32 %v1124, %v1313
      %v1403 = vadd.f32 %v1125, %v1316
      %v1404 = vadd.f32 %v1126, %v1319
      %v1405 = vadd.f32 %v1127, %v1322
      %v1406 = vadd.f32 %v1128, %v1325
      %v1407 = vadd.f32 %v1129, %v1328
      %v1408 = vadd.f32 %v1130, %v1331
      %v1409 = vadd.f32 %v1131, %v1334
      %v1410 = vadd.f32 %v1132, %v1337
      %v1411 = vadd.f32 %v1133, %v1340
      %v1412 = vadd.f32 %v1134, %v1343
      %v1413 = vadd.f32 %v1135, %v1346
      %v1414 = vadd.f32 %v1136, %v1349
      %v1415 = vadd.f32 %v1137, %v1352
      %v1416 = vadd.f32 %v1138, %v1355
      %v1417 = vadd.f32 %v1139, %v1358
      %v1418 = vadd.f32 %v1140, %v1361
      %v1419 = vadd.f32 %v1141, %v1364
      %v1420 = vadd.f32 %v1142, %v1367
      %v1421 = vadd.f32 %v1143, %v1370
      %v1422 = vadd.f32 %v1144, %v1373
      %v1423 = vadd.f32 %v1145, %v1376
      %v1424 = vadd.f32 %v1146, %v1379
      %v1425 = vadd.f32 %v1147, %v1382
      %v1426 = vadd.f32 %v1148, %v1385
      %v1427 = vadd.f32 %v1149, %v1388
      %v1428 = vadd.f32 %v1150, %v1391
      %v1429 = vadd.f32 %v1151, %v1394
      %v1430 = vadd.f32 %v1152, %v1397
      %v1431 = vld [vmem:[%s350 + $0x1] sm:$0xff]
      %v1432 = vld [vmem:[%s350 + $0x9] sm:$0xff]
      %v1433 = vld [vmem:[%s350 + $0x19] sm:$0xff]
      %v1434 = vld [vmem:[%s350 + $0x21] sm:$0xff]
      %v1435 = vld [vmem:[%s350 + $0x31] sm:$0xff]
      %v1436 = vld [vmem:[%s350 + $0x39] sm:$0xff]
      %v1437 = vld [vmem:[%s350 + $0x49] sm:$0xff]
      %v1438 = vld [vmem:[%s350 + $0x51] sm:$0xff]
      %v1439 = vld [vmem:[%s350 + $0x61] sm:$0xff]
      %v1440 = vld [vmem:[%s350 + $0x69] sm:$0xff]
      %v1441 = vld [vmem:[%s350 + $0x79] sm:$0xff]
      %v1442 = vld [vmem:[%s350 + $0x81] sm:$0xff]
      %v1443 = vld [vmem:[%s350 + $0x91] sm:$0xff]
      %v1444 = vld [vmem:[%s350 + $0x99] sm:$0xff]
      %v1445 = vld [vmem:[%s350 + $0xa9] sm:$0xff]
      %v1446 = vld [vmem:[%s350 + $0xb1] sm:$0xff]
      %v1447 = vld [vmem:[%s350 + $0xc1] sm:$0xff]
      %v1448 = vld [vmem:[%s350 + $0xc9] sm:$0xff]
      %v1449 = vld [vmem:[%s350 + $0xd9] sm:$0xff]
      %v1450 = vld [vmem:[%s350 + $0xe1] sm:$0xff]
      %v1451 = vld [vmem:[%s350 + $0xf1] sm:$0xff]
      %v1452 = vld [vmem:[%s350 + $0xf9] sm:$0xff]
      %v1453 = vld [vmem:[%s350 + $0x109] sm:$0xff]
      %v1454 = vld [vmem:[%s350 + $0x111] sm:$0xff]
      %v1455 = vld [vmem:[%s350 + $0x121] sm:$0xff]
      %v1456 = vld [vmem:[%s350 + $0x129] sm:$0xff]
      %v1457 = vld [vmem:[%s350 + $0x139] sm:$0xff]
      %v1458 = vld [vmem:[%s350 + $0x141] sm:$0xff]
      %v1459 = vld [vmem:[%s350 + $0x151] sm:$0xff]
      %v1460 = vld [vmem:[%s350 + $0x159] sm:$0xff]
      %v1461 = vld [vmem:[%s350 + $0x169] sm:$0xff]
      %v1462 = vld [vmem:[%s350 + $0x171] sm:$0xff]
      %s1463 = scalar_lea.vmem %s1, 16
      %v1464 = vld [vmem:[%s1463] sm:$0xf]
      %v1466 = vsel %vm272, %v1431, 0
      %v1469 = vsel %vm272, %v1432, 0
      %v1472 = vsel %vm272, %v1433, 0
      %v1475 = vsel %vm272, %v1434, 0
      %v1478 = vsel %vm272, %v1435, 0
      %v1481 = vsel %vm272, %v1436, 0
      %v1484 = vsel %vm272, %v1437, 0
      %v1487 = vsel %vm272, %v1438, 0
      %v1490 = vsel %vm272, %v1439, 0
      %v1493 = vsel %vm272, %v1440, 0
      %v1496 = vsel %vm272, %v1441, 0
      %v1499 = vsel %vm272, %v1442, 0
      %v1502 = vsel %vm272, %v1443, 0
      %v1505 = vsel %vm272, %v1444, 0
      %v1508 = vsel %vm272, %v1445, 0
      %v1511 = vsel %vm272, %v1446, 0
      %v1514 = vsel %vm272, %v1447, 0
      %v1517 = vsel %vm272, %v1448, 0
      %v1520 = vsel %vm272, %v1449, 0
      %v1523 = vsel %vm272, %v1450, 0
      %v1526 = vsel %vm272, %v1451, 0
      %v1529 = vsel %vm272, %v1452, 0
      %v1532 = vsel %vm272, %v1453, 0
      %v1535 = vsel %vm272, %v1454, 0
      %v1538 = vsel %vm272, %v1455, 0
      %v1541 = vsel %vm272, %v1456, 0
      %v1544 = vsel %vm272, %v1457, 0
      %v1547 = vsel %vm272, %v1458, 0
      %v1550 = vsel %vm272, %v1459, 0
      %v1553 = vsel %vm272, %v1460, 0
      %v1556 = vsel %vm272, %v1461, 0
      %v1559 = vsel %vm272, %v1462, 0
      %v1562 = vsel %vm546, %v1464, 0
      %1564 = vmatpush.msra.mxu0 0.0
      %1565 = vmatpush.msra.mxu0 0.0
      %1566 = vmatpush.msra.mxu0 0.0
      %1567 = vmatpush.msra.mxu0 0.0
      %1568 = vmatpush.msra.mxu0 0.0
      %1569 = vmatpush.msra.mxu0 0.0
      %1570 = vmatpush.msra.mxu0 0.0
      %1571 = vmatpush.msra.mxu0 0.0
      %1572 = vmatpush.msra.mxu0 0.0
      %1573 = vmatpush.msra.mxu0 0.0
      %1574 = vmatpush.msra.mxu0 0.0
      %1575 = vmatpush.msra.mxu0 0.0
      %1576 = vmatpush.msra.mxu0 0.0
      %1577 = vmatpush.msra.mxu0 0.0
      %1578 = vmatpush.msra.mxu0 0.0
      %1579 = vmatpush.msra.mxu0 %v1562
      %1580 = vmatmul.f32.gmra.mxu0 %v1466
      %v1581 = vpop.f32.mrf.mxu0
      %v1582 = vadd.f32 0.0, %v1581
      %1583 = vmatmul.f32.gmra.mxu0 %v1469
      %v1584 = vpop.f32.mrf.mxu0
      %v1585 = vadd.f32 0.0, %v1584
      %1586 = vmatmul.f32.gmra.mxu0 %v1472
      %v1587 = vpop.f32.mrf.mxu0
      %v1588 = vadd.f32 0.0, %v1587
      %1589 = vmatmul.f32.gmra.mxu0 %v1475
      %v1590 = vpop.f32.mrf.mxu0
      %v1591 = vadd.f32 0.0, %v1590
      %1592 = vmatmul.f32.gmra.mxu0 %v1478
      %v1593 = vpop.f32.mrf.mxu0
      %v1594 = vadd.f32 0.0, %v1593
      %1595 = vmatmul.f32.gmra.mxu0 %v1481
      %v1596 = vpop.f32.mrf.mxu0
      %v1597 = vadd.f32 0.0, %v1596
      %1598 = vmatmul.f32.gmra.mxu0 %v1484
      %v1599 = vpop.f32.mrf.mxu0
      %v1600 = vadd.f32 0.0, %v1599
      %1601 = vmatmul.f32.gmra.mxu0 %v1487
      %v1602 = vpop.f32.mrf.mxu0
      %v1603 = vadd.f32 0.0, %v1602
      %1604 = vmatmul.f32.gmra.mxu0 %v1490
      %v1605 = vpop.f32.mrf.mxu0
      %v1606 = vadd.f32 0.0, %v1605
      %1607 = vmatmul.f32.gmra.mxu0 %v1493
      %v1608 = vpop.f32.mrf.mxu0
      %v1609 = vadd.f32 0.0, %v1608
      %1610 = vmatmul.f32.gmra.mxu0 %v1496
      %v1611 = vpop.f32.mrf.mxu0
      %v1612 = vadd.f32 0.0, %v1611
      %1613 = vmatmul.f32.gmra.mxu0 %v1499
      %v1614 = vpop.f32.mrf.mxu0
      %v1615 = vadd.f32 0.0, %v1614
      %1616 = vmatmul.f32.gmra.mxu0 %v1502
      %v1617 = vpop.f32.mrf.mxu0
      %v1618 = vadd.f32 0.0, %v1617
      %1619 = vmatmul.f32.gmra.mxu0 %v1505
      %v1620 = vpop.f32.mrf.mxu0
      %v1621 = vadd.f32 0.0, %v1620
      %1622 = vmatmul.f32.gmra.mxu0 %v1508
      %v1623 = vpop.f32.mrf.mxu0
      %v1624 = vadd.f32 0.0, %v1623
      %1625 = vmatmul.f32.gmra.mxu0 %v1511
      %v1626 = vpop.f32.mrf.mxu0
      %v1627 = vadd.f32 0.0, %v1626
      %1628 = vmatmul.f32.gmra.mxu0 %v1514
      %v1629 = vpop.f32.mrf.mxu0
      %v1630 = vadd.f32 0.0, %v1629
      %1631 = vmatmul.f32.gmra.mxu0 %v1517
      %v1632 = vpop.f32.mrf.mxu0
      %v1633 = vadd.f32 0.0, %v1632
      %1634 = vmatmul.f32.gmra.mxu0 %v1520
      %v1635 = vpop.f32.mrf.mxu0
      %v1636 = vadd.f32 0.0, %v1635
      %1637 = vmatmul.f32.gmra.mxu0 %v1523
      %v1638 = vpop.f32.mrf.mxu0
      %v1639 = vadd.f32 0.0, %v1638
      %1640 = vmatmul.f32.gmra.mxu0 %v1526
      %v1641 = vpop.f32.mrf.mxu0
      %v1642 = vadd.f32 0.0, %v1641
      %1643 = vmatmul.f32.gmra.mxu0 %v1529
      %v1644 = vpop.f32.mrf.mxu0
      %v1645 = vadd.f32 0.0, %v1644
      %1646 = vmatmul.f32.gmra.mxu0 %v1532
      %v1647 = vpop.f32.mrf.mxu0
      %v1648 = vadd.f32 0.0, %v1647
      %1649 = vmatmul.f32.gmra.mxu0 %v1535
      %v1650 = vpop.f32.mrf.mxu0
      %v1651 = vadd.f32 0.0, %v1650
      %1652 = vmatmul.f32.gmra.mxu0 %v1538
      %v1653 = vpop.f32.mrf.mxu0
      %v1654 = vadd.f32 0.0, %v1653
      %1655 = vmatmul.f32.gmra.mxu0 %v1541
      %v1656 = vpop.f32.mrf.mxu0
      %v1657 = vadd.f32 0.0, %v1656
      %1658 = vmatmul.f32.gmra.mxu0 %v1544
      %v1659 = vpop.f32.mrf.mxu0
      %v1660 = vadd.f32 0.0, %v1659
      %1661 = vmatmul.f32.gmra.mxu0 %v1547
      %v1662 = vpop.f32.mrf.mxu0
      %v1663 = vadd.f32 0.0, %v1662
      %1664 = vmatmul.f32.gmra.mxu0 %v1550
      %v1665 = vpop.f32.mrf.mxu0
      %v1666 = vadd.f32 0.0, %v1665
      %1667 = vmatmul.f32.gmra.mxu0 %v1553
      %v1668 = vpop.f32.mrf.mxu0
      %v1669 = vadd.f32 0.0, %v1668
      %1670 = vmatmul.f32.gmra.mxu0 %v1556
      %v1671 = vpop.f32.mrf.mxu0
      %v1672 = vadd.f32 0.0, %v1671
      %1673 = vmatmul.f32.gmra.mxu0 %v1559
      %v1674 = vpop.f32.mrf.mxu0
      %v1675 = vadd.f32 0.0, %v1674
      %1676 = vdwg.mxu0
      %v1677 = vadd.f32 %v1399, %v1582
      %v1678 = vadd.f32 %v1400, %v1585
      %v1679 = vadd.f32 %v1401, %v1588
      %v1680 = vadd.f32 %v1402, %v1591
      %v1681 = vadd.f32 %v1403, %v1594
      %v1682 = vadd.f32 %v1404, %v1597
      %v1683 = vadd.f32 %v1405, %v1600
      %v1684 = vadd.f32 %v1406, %v1603
      %v1685 = vadd.f32 %v1407, %v1606
      %v1686 = vadd.f32 %v1408, %v1609
      %v1687 = vadd.f32 %v1409, %v1612
      %v1688 = vadd.f32 %v1410, %v1615
      %v1689 = vadd.f32 %v1411, %v1618
      %v1690 = vadd.f32 %v1412, %v1621
      %v1691 = vadd.f32 %v1413, %v1624
      %v1692 = vadd.f32 %v1414, %v1627
      %v1693 = vadd.f32 %v1415, %v1630
      %v1694 = vadd.f32 %v1416, %v1633
      %v1695 = vadd.f32 %v1417, %v1636
      %v1696 = vadd.f32 %v1418, %v1639
      %v1697 = vadd.f32 %v1419, %v1642
      %v1698 = vadd.f32 %v1420, %v1645
      %v1699 = vadd.f32 %v1421, %v1648
      %v1700 = vadd.f32 %v1422, %v1651
      %v1701 = vadd.f32 %v1423, %v1654
      %v1702 = vadd.f32 %v1424, %v1657
      %v1703 = vadd.f32 %v1425, %v1660
      %v1704 = vadd.f32 %v1426, %v1663
      %v1705 = vadd.f32 %v1427, %v1666
      %v1706 = vadd.f32 %v1428, %v1669
      %v1707 = vadd.f32 %v1429, %v1672
      %v1708 = vadd.f32 %v1430, %v1675
      %v1709 = vld [vmem:[%s350 + $0x2] sm:$0xff]
      %v1710 = vld [vmem:[%s350 + $0xa] sm:$0xff]
      %v1711 = vld [vmem:[%s350 + $0x1a] sm:$0xff]
      %v1712 = vld [vmem:[%s350 + $0x22] sm:$0xff]
      %v1713 = vld [vmem:[%s350 + $0x32] sm:$0xff]
      %v1714 = vld [vmem:[%s350 + $0x3a] sm:$0xff]
      %v1715 = vld [vmem:[%s350 + $0x4a] sm:$0xff]
      %v1716 = vld [vmem:[%s350 + $0x52] sm:$0xff]
      %v1717 = vld [vmem:[%s350 + $0x62] sm:$0xff]
      %v1718 = vld [vmem:[%s350 + $0x6a] sm:$0xff]
      %v1719 = vld [vmem:[%s350 + $0x7a] sm:$0xff]
      %v1720 = vld [vmem:[%s350 + $0x82] sm:$0xff]
      %v1721 = vld [vmem:[%s350 + $0x92] sm:$0xff]
      %v1722 = vld [vmem:[%s350 + $0x9a] sm:$0xff]
      %v1723 = vld [vmem:[%s350 + $0xaa] sm:$0xff]
      %v1724 = vld [vmem:[%s350 + $0xb2] sm:$0xff]
      %v1725 = vld [vmem:[%s350 + $0xc2] sm:$0xff]
      %v1726 = vld [vmem:[%s350 + $0xca] sm:$0xff]
      %v1727 = vld [vmem:[%s350 + $0xda] sm:$0xff]
      %v1728 = vld [vmem:[%s350 + $0xe2] sm:$0xff]
      %v1729 = vld [vmem:[%s350 + $0xf2] sm:$0xff]
      %v1730 = vld [vmem:[%s350 + $0xfa] sm:$0xff]
      %v1731 = vld [vmem:[%s350 + $0x10a] sm:$0xff]
      %v1732 = vld [vmem:[%s350 + $0x112] sm:$0xff]
      %v1733 = vld [vmem:[%s350 + $0x122] sm:$0xff]
      %v1734 = vld [vmem:[%s350 + $0x12a] sm:$0xff]
      %v1735 = vld [vmem:[%s350 + $0x13a] sm:$0xff]
      %v1736 = vld [vmem:[%s350 + $0x142] sm:$0xff]
      %v1737 = vld [vmem:[%s350 + $0x152] sm:$0xff]
      %v1738 = vld [vmem:[%s350 + $0x15a] sm:$0xff]
      %v1739 = vld [vmem:[%s350 + $0x16a] sm:$0xff]
      %v1740 = vld [vmem:[%s350 + $0x172] sm:$0xff]
      %s1741 = scalar_lea.vmem %s1, 20
      %v1742 = vld [vmem:[%s1741] sm:$0xf]
      %v1744 = vsel %vm272, %v1709, 0
      %v1747 = vsel %vm272, %v1710, 0
      %v1750 = vsel %vm272, %v1711, 0
      %v1753 = vsel %vm272, %v1712, 0
      %v1756 = vsel %vm272, %v1713, 0
      %v1759 = vsel %vm272, %v1714, 0
      %v1762 = vsel %vm272, %v1715, 0
      %v1765 = vsel %vm272, %v1716, 0
      %v1768 = vsel %vm272, %v1717, 0
      %v1771 = vsel %vm272, %v1718, 0
      %v1774 = vsel %vm272, %v1719, 0
      %v1777 = vsel %vm272, %v1720, 0
      %v1780 = vsel %vm272, %v1721, 0
      %v1783 = vsel %vm272, %v1722, 0
      %v1786 = vsel %vm272, %v1723, 0
      %v1789 = vsel %vm272, %v1724, 0
      %v1792 = vsel %vm272, %v1725, 0
      %v1795 = vsel %vm272, %v1726, 0
      %v1798 = vsel %vm272, %v1727, 0
      %v1801 = vsel %vm272, %v1728, 0
      %v1804 = vsel %vm272, %v1729, 0
      %v1807 = vsel %vm272, %v1730, 0
      %v1810 = vsel %vm272, %v1731, 0
      %v1813 = vsel %vm272, %v1732, 0
      %v1816 = vsel %vm272, %v1733, 0
      %v1819 = vsel %vm272, %v1734, 0
      %v1822 = vsel %vm272, %v1735, 0
      %v1825 = vsel %vm272, %v1736, 0
      %v1828 = vsel %vm272, %v1737, 0
      %v1831 = vsel %vm272, %v1738, 0
      %v1834 = vsel %vm272, %v1739, 0
      %v1837 = vsel %vm272, %v1740, 0
      %v1840 = vsel %vm546, %v1742, 0
      %1842 = vmatpush.msra.mxu0 0.0
      %1843 = vmatpush.msra.mxu0 0.0
      %1844 = vmatpush.msra.mxu0 0.0
      %1845 = vmatpush.msra.mxu0 0.0
      %1846 = vmatpush.msra.mxu0 0.0
      %1847 = vmatpush.msra.mxu0 0.0
      %1848 = vmatpush.msra.mxu0 0.0
      %1849 = vmatpush.msra.mxu0 0.0
      %1850 = vmatpush.msra.mxu0 0.0
      %1851 = vmatpush.msra.mxu0 0.0
      %1852 = vmatpush.msra.mxu0 0.0
      %1853 = vmatpush.msra.mxu0 0.0
      %1854 = vmatpush.msra.mxu0 0.0
      %1855 = vmatpush.msra.mxu0 0.0
      %1856 = vmatpush.msra.mxu0 0.0
      %1857 = vmatpush.msra.mxu0 %v1840
      %1858 = vmatmul.f32.gmra.mxu0 %v1744
      %v1859 = vpop.f32.mrf.mxu0
      %v1860 = vadd.f32 0.0, %v1859
      %1861 = vmatmul.f32.gmra.mxu0 %v1747
      %v1862 = vpop.f32.mrf.mxu0
      %v1863 = vadd.f32 0.0, %v1862
      %1864 = vmatmul.f32.gmra.mxu0 %v1750
      %v1865 = vpop.f32.mrf.mxu0
      %v1866 = vadd.f32 0.0, %v1865
      %1867 = vmatmul.f32.gmra.mxu0 %v1753
      %v1868 = vpop.f32.mrf.mxu0
      %v1869 = vadd.f32 0.0, %v1868
      %1870 = vmatmul.f32.gmra.mxu0 %v1756
      %v1871 = vpop.f32.mrf.mxu0
      %v1872 = vadd.f32 0.0, %v1871
      %1873 = vmatmul.f32.gmra.mxu0 %v1759
      %v1874 = vpop.f32.mrf.mxu0
      %v1875 = vadd.f32 0.0, %v1874
      %1876 = vmatmul.f32.gmra.mxu0 %v1762
      %v1877 = vpop.f32.mrf.mxu0
      %v1878 = vadd.f32 0.0, %v1877
      %1879 = vmatmul.f32.gmra.mxu0 %v1765
      %v1880 = vpop.f32.mrf.mxu0
      %v1881 = vadd.f32 0.0, %v1880
      %1882 = vmatmul.f32.gmra.mxu0 %v1768
      %v1883 = vpop.f32.mrf.mxu0
      %v1884 = vadd.f32 0.0, %v1883
      %1885 = vmatmul.f32.gmra.mxu0 %v1771
      %v1886 = vpop.f32.mrf.mxu0
      %v1887 = vadd.f32 0.0, %v1886
      %1888 = vmatmul.f32.gmra.mxu0 %v1774
      %v1889 = vpop.f32.mrf.mxu0
      %v1890 = vadd.f32 0.0, %v1889
      %1891 = vmatmul.f32.gmra.mxu0 %v1777
      %v1892 = vpop.f32.mrf.mxu0
      %v1893 = vadd.f32 0.0, %v1892
      %1894 = vmatmul.f32.gmra.mxu0 %v1780
      %v1895 = vpop.f32.mrf.mxu0
      %v1896 = vadd.f32 0.0, %v1895
      %1897 = vmatmul.f32.gmra.mxu0 %v1783
      %v1898 = vpop.f32.mrf.mxu0
      %v1899 = vadd.f32 0.0, %v1898
      %1900 = vmatmul.f32.gmra.mxu0 %v1786
      %v1901 = vpop.f32.mrf.mxu0
      %v1902 = vadd.f32 0.0, %v1901
      %1903 = vmatmul.f32.gmra.mxu0 %v1789
      %v1904 = vpop.f32.mrf.mxu0
      %v1905 = vadd.f32 0.0, %v1904
      %1906 = vmatmul.f32.gmra.mxu0 %v1792
      %v1907 = vpop.f32.mrf.mxu0
      %v1908 = vadd.f32 0.0, %v1907
      %1909 = vmatmul.f32.gmra.mxu0 %v1795
      %v1910 = vpop.f32.mrf.mxu0
      %v1911 = vadd.f32 0.0, %v1910
      %1912 = vmatmul.f32.gmra.mxu0 %v1798
      %v1913 = vpop.f32.mrf.mxu0
      %v1914 = vadd.f32 0.0, %v1913
      %1915 = vmatmul.f32.gmra.mxu0 %v1801
      %v1916 = vpop.f32.mrf.mxu0
      %v1917 = vadd.f32 0.0, %v1916
      %1918 = vmatmul.f32.gmra.mxu0 %v1804
      %v1919 = vpop.f32.mrf.mxu0
      %v1920 = vadd.f32 0.0, %v1919
      %1921 = vmatmul.f32.gmra.mxu0 %v1807
      %v1922 = vpop.f32.mrf.mxu0
      %v1923 = vadd.f32 0.0, %v1922
      %1924 = vmatmul.f32.gmra.mxu0 %v1810
      %v1925 = vpop.f32.mrf.mxu0
      %v1926 = vadd.f32 0.0, %v1925
      %1927 = vmatmul.f32.gmra.mxu0 %v1813
      %v1928 = vpop.f32.mrf.mxu0
      %v1929 = vadd.f32 0.0, %v1928
      %1930 = vmatmul.f32.gmra.mxu0 %v1816
      %v1931 = vpop.f32.mrf.mxu0
      %v1932 = vadd.f32 0.0, %v1931
      %1933 = vmatmul.f32.gmra.mxu0 %v1819
      %v1934 = vpop.f32.mrf.mxu0
      %v1935 = vadd.f32 0.0, %v1934
      %1936 = vmatmul.f32.gmra.mxu0 %v1822
      %v1937 = vpop.f32.mrf.mxu0
      %v1938 = vadd.f32 0.0, %v1937
      %1939 = vmatmul.f32.gmra.mxu0 %v1825
      %v1940 = vpop.f32.mrf.mxu0
      %v1941 = vadd.f32 0.0, %v1940
      %1942 = vmatmul.f32.gmra.mxu0 %v1828
      %v1943 = vpop.f32.mrf.mxu0
      %v1944 = vadd.f32 0.0, %v1943
      %1945 = vmatmul.f32.gmra.mxu0 %v1831
      %v1946 = vpop.f32.mrf.mxu0
      %v1947 = vadd.f32 0.0, %v1946
      %1948 = vmatmul.f32.gmra.mxu0 %v1834
      %v1949 = vpop.f32.mrf.mxu0
      %v1950 = vadd.f32 0.0, %v1949
      %1951 = vmatmul.f32.gmra.mxu0 %v1837
      %v1952 = vpop.f32.mrf.mxu0
      %v1953 = vadd.f32 0.0, %v1952
      %1954 = vdwg.mxu0
      %v1955 = vadd.f32 %v1677, %v1860
      %v1956 = vadd.f32 %v1678, %v1863
      %v1957 = vadd.f32 %v1679, %v1866
      %v1958 = vadd.f32 %v1680, %v1869
      %v1959 = vadd.f32 %v1681, %v1872
      %v1960 = vadd.f32 %v1682, %v1875
      %v1961 = vadd.f32 %v1683, %v1878
      %v1962 = vadd.f32 %v1684, %v1881
      %v1963 = vadd.f32 %v1685, %v1884
      %v1964 = vadd.f32 %v1686, %v1887
      %v1965 = vadd.f32 %v1687, %v1890
      %v1966 = vadd.f32 %v1688, %v1893
      %v1967 = vadd.f32 %v1689, %v1896
      %v1968 = vadd.f32 %v1690, %v1899
      %v1969 = vadd.f32 %v1691, %v1902
      %v1970 = vadd.f32 %v1692, %v1905
      %v1971 = vadd.f32 %v1693, %v1908
      %v1972 = vadd.f32 %v1694, %v1911
      %v1973 = vadd.f32 %v1695, %v1914
      %v1974 = vadd.f32 %v1696, %v1917
      %v1975 = vadd.f32 %v1697, %v1920
      %v1976 = vadd.f32 %v1698, %v1923
      %v1977 = vadd.f32 %v1699, %v1926
      %v1978 = vadd.f32 %v1700, %v1929
      %v1979 = vadd.f32 %v1701, %v1932
      %v1980 = vadd.f32 %v1702, %v1935
      %v1981 = vadd.f32 %v1703, %v1938
      %v1982 = vadd.f32 %v1704, %v1941
      %v1983 = vadd.f32 %v1705, %v1944
      %v1984 = vadd.f32 %v1706, %v1947
      %v1985 = vadd.f32 %v1707, %v1950
      %v1986 = vadd.f32 %v1708, %v1953
      %s1987 = scalar_lea.vmem [#allocation2], 48
      %v1988 = vld [vmem:[%s1987] sm:$0xff]
      %v1989 = vld [vmem:[%s1987 + $0x8] sm:$0xff]
      %v1990 = vld [vmem:[%s1987 + $0x18] sm:$0xff]
      %v1991 = vld [vmem:[%s1987 + $0x20] sm:$0xff]
      %v1992 = vld [vmem:[%s1987 + $0x30] sm:$0xff]
      %v1993 = vld [vmem:[%s1987 + $0x38] sm:$0xff]
      %v1994 = vld [vmem:[%s1987 + $0x48] sm:$0xff]
      %v1995 = vld [vmem:[%s1987 + $0x50] sm:$0xff]
      %v1996 = vld [vmem:[%s1987 + $0x60] sm:$0xff]
      %v1997 = vld [vmem:[%s1987 + $0x68] sm:$0xff]
      %v1998 = vld [vmem:[%s1987 + $0x78] sm:$0xff]
      %v1999 = vld [vmem:[%s1987 + $0x80] sm:$0xff]
      %v2000 = vld [vmem:[%s1987 + $0x90] sm:$0xff]
      %v2001 = vld [vmem:[%s1987 + $0x98] sm:$0xff]
      %v2002 = vld [vmem:[%s1987 + $0xa8] sm:$0xff]
      %v2003 = vld [vmem:[%s1987 + $0xb0] sm:$0xff]
      %v2004 = vld [vmem:[%s1987 + $0xc0] sm:$0xff]
      %v2005 = vld [vmem:[%s1987 + $0xc8] sm:$0xff]
      %v2006 = vld [vmem:[%s1987 + $0xd8] sm:$0xff]
      %v2007 = vld [vmem:[%s1987 + $0xe0] sm:$0xff]
      %v2008 = vld [vmem:[%s1987 + $0xf0] sm:$0xff]
      %v2009 = vld [vmem:[%s1987 + $0xf8] sm:$0xff]
      %v2010 = vld [vmem:[%s1987 + $0x108] sm:$0xff]
      %v2011 = vld [vmem:[%s1987 + $0x110] sm:$0xff]
      %v2012 = vld [vmem:[%s1987 + $0x120] sm:$0xff]
      %v2013 = vld [vmem:[%s1987 + $0x128] sm:$0xff]
      %v2014 = vld [vmem:[%s1987 + $0x138] sm:$0xff]
      %v2015 = vld [vmem:[%s1987 + $0x140] sm:$0xff]
      %v2016 = vld [vmem:[%s1987 + $0x150] sm:$0xff]
      %v2017 = vld [vmem:[%s1987 + $0x158] sm:$0xff]
      %v2018 = vld [vmem:[%s1987 + $0x168] sm:$0xff]
      %v2019 = vld [vmem:[%s1987 + $0x170] sm:$0xff]
      %s2020 = scalar_lea.vmem %s1, 24
      %v2021 = vld [vmem:[%s2020] sm:$0xf]
      %v2023 = vsel %vm272, %v1988, 0
      %v2026 = vsel %vm272, %v1989, 0
      %v2029 = vsel %vm272, %v1990, 0
      %v2032 = vsel %vm272, %v1991, 0
      %v2035 = vsel %vm272, %v1992, 0
      %v2038 = vsel %vm272, %v1993, 0
      %v2041 = vsel %vm272, %v1994, 0
      %v2044 = vsel %vm272, %v1995, 0
      %v2047 = vsel %vm272, %v1996, 0
      %v2050 = vsel %vm272, %v1997, 0
      %v2053 = vsel %vm272, %v1998, 0
      %v2056 = vsel %vm272, %v1999, 0
      %v2059 = vsel %vm272, %v2000, 0
      %v2062 = vsel %vm272, %v2001, 0
      %v2065 = vsel %vm272, %v2002, 0
      %v2068 = vsel %vm272, %v2003, 0
      %v2071 = vsel %vm272, %v2004, 0
      %v2074 = vsel %vm272, %v2005, 0
      %v2077 = vsel %vm272, %v2006, 0
      %v2080 = vsel %vm272, %v2007, 0
      %v2083 = vsel %vm272, %v2008, 0
      %v2086 = vsel %vm272, %v2009, 0
      %v2089 = vsel %vm272, %v2010, 0
      %v2092 = vsel %vm272, %v2011, 0
      %v2095 = vsel %vm272, %v2012, 0
      %v2098 = vsel %vm272, %v2013, 0
      %v2101 = vsel %vm272, %v2014, 0
      %v2104 = vsel %vm272, %v2015, 0
      %v2107 = vsel %vm272, %v2016, 0
      %v2110 = vsel %vm272, %v2017, 0
      %v2113 = vsel %vm272, %v2018, 0
      %v2116 = vsel %vm272, %v2019, 0
      %v2119 = vsel %vm546, %v2021, 0
      %2121 = vmatpush.msra.mxu0 0.0
      %2122 = vmatpush.msra.mxu0 0.0
      %2123 = vmatpush.msra.mxu0 0.0
      %2124 = vmatpush.msra.mxu0 0.0
      %2125 = vmatpush.msra.mxu0 0.0
      %2126 = vmatpush.msra.mxu0 0.0
      %2127 = vmatpush.msra.mxu0 0.0
      %2128 = vmatpush.msra.mxu0 0.0
      %2129 = vmatpush.msra.mxu0 0.0
      %2130 = vmatpush.msra.mxu0 0.0
      %2131 = vmatpush.msra.mxu0 0.0
      %2132 = vmatpush.msra.mxu0 0.0
      %2133 = vmatpush.msra.mxu0 0.0
      %2134 = vmatpush.msra.mxu0 0.0
      %2135 = vmatpush.msra.mxu0 0.0
      %2136 = vmatpush.msra.mxu0 %v2119
      %2137 = vmatmul.f32.gmra.mxu0 %v2023
      %v2138 = vpop.f32.mrf.mxu0
      %v2139 = vadd.f32 0.0, %v2138
      %2140 = vmatmul.f32.gmra.mxu0 %v2026
      %v2141 = vpop.f32.mrf.mxu0
      %v2142 = vadd.f32 0.0, %v2141
      %2143 = vmatmul.f32.gmra.mxu0 %v2029
      %v2144 = vpop.f32.mrf.mxu0
      %v2145 = vadd.f32 0.0, %v2144
      %2146 = vmatmul.f32.gmra.mxu0 %v2032
      %v2147 = vpop.f32.mrf.mxu0
      %v2148 = vadd.f32 0.0, %v2147
      %2149 = vmatmul.f32.gmra.mxu0 %v2035
      %v2150 = vpop.f32.mrf.mxu0
      %v2151 = vadd.f32 0.0, %v2150
      %2152 = vmatmul.f32.gmra.mxu0 %v2038
      %v2153 = vpop.f32.mrf.mxu0
      %v2154 = vadd.f32 0.0, %v2153
      %2155 = vmatmul.f32.gmra.mxu0 %v2041
      %v2156 = vpop.f32.mrf.mxu0
      %v2157 = vadd.f32 0.0, %v2156
      %2158 = vmatmul.f32.gmra.mxu0 %v2044
      %v2159 = vpop.f32.mrf.mxu0
      %v2160 = vadd.f32 0.0, %v2159
      %2161 = vmatmul.f32.gmra.mxu0 %v2047
      %v2162 = vpop.f32.mrf.mxu0
      %v2163 = vadd.f32 0.0, %v2162
      %2164 = vmatmul.f32.gmra.mxu0 %v2050
      %v2165 = vpop.f32.mrf.mxu0
      %v2166 = vadd.f32 0.0, %v2165
      %2167 = vmatmul.f32.gmra.mxu0 %v2053
      %v2168 = vpop.f32.mrf.mxu0
      %v2169 = vadd.f32 0.0, %v2168
      %2170 = vmatmul.f32.gmra.mxu0 %v2056
      %v2171 = vpop.f32.mrf.mxu0
      %v2172 = vadd.f32 0.0, %v2171
      %2173 = vmatmul.f32.gmra.mxu0 %v2059
      %v2174 = vpop.f32.mrf.mxu0
      %v2175 = vadd.f32 0.0, %v2174
      %2176 = vmatmul.f32.gmra.mxu0 %v2062
      %v2177 = vpop.f32.mrf.mxu0
      %v2178 = vadd.f32 0.0, %v2177
      %2179 = vmatmul.f32.gmra.mxu0 %v2065
      %v2180 = vpop.f32.mrf.mxu0
      %v2181 = vadd.f32 0.0, %v2180
      %2182 = vmatmul.f32.gmra.mxu0 %v2068
      %v2183 = vpop.f32.mrf.mxu0
      %v2184 = vadd.f32 0.0, %v2183
      %2185 = vmatmul.f32.gmra.mxu0 %v2071
      %v2186 = vpop.f32.mrf.mxu0
      %v2187 = vadd.f32 0.0, %v2186
      %2188 = vmatmul.f32.gmra.mxu0 %v2074
      %v2189 = vpop.f32.mrf.mxu0
      %v2190 = vadd.f32 0.0, %v2189
      %2191 = vmatmul.f32.gmra.mxu0 %v2077
      %v2192 = vpop.f32.mrf.mxu0
      %v2193 = vadd.f32 0.0, %v2192
      %2194 = vmatmul.f32.gmra.mxu0 %v2080
      %v2195 = vpop.f32.mrf.mxu0
      %v2196 = vadd.f32 0.0, %v2195
      %2197 = vmatmul.f32.gmra.mxu0 %v2083
      %v2198 = vpop.f32.mrf.mxu0
      %v2199 = vadd.f32 0.0, %v2198
      %2200 = vmatmul.f32.gmra.mxu0 %v2086
      %v2201 = vpop.f32.mrf.mxu0
      %v2202 = vadd.f32 0.0, %v2201
      %2203 = vmatmul.f32.gmra.mxu0 %v2089
      %v2204 = vpop.f32.mrf.mxu0
      %v2205 = vadd.f32 0.0, %v2204
      %2206 = vmatmul.f32.gmra.mxu0 %v2092
      %v2207 = vpop.f32.mrf.mxu0
      %v2208 = vadd.f32 0.0, %v2207
      %2209 = vmatmul.f32.gmra.mxu0 %v2095
      %v2210 = vpop.f32.mrf.mxu0
      %v2211 = vadd.f32 0.0, %v2210
      %2212 = vmatmul.f32.gmra.mxu0 %v2098
      %v2213 = vpop.f32.mrf.mxu0
      %v2214 = vadd.f32 0.0, %v2213
      %2215 = vmatmul.f32.gmra.mxu0 %v2101
      %v2216 = vpop.f32.mrf.mxu0
      %v2217 = vadd.f32 0.0, %v2216
      %2218 = vmatmul.f32.gmra.mxu0 %v2104
      %v2219 = vpop.f32.mrf.mxu0
      %v2220 = vadd.f32 0.0, %v2219
      %2221 = vmatmul.f32.gmra.mxu0 %v2107
      %v2222 = vpop.f32.mrf.mxu0
      %v2223 = vadd.f32 0.0, %v2222
      %2224 = vmatmul.f32.gmra.mxu0 %v2110
      %v2225 = vpop.f32.mrf.mxu0
      %v2226 = vadd.f32 0.0, %v2225
      %2227 = vmatmul.f32.gmra.mxu0 %v2113
      %v2228 = vpop.f32.mrf.mxu0
      %v2229 = vadd.f32 0.0, %v2228
      %2230 = vmatmul.f32.gmra.mxu0 %v2116
      %v2231 = vpop.f32.mrf.mxu0
      %v2232 = vadd.f32 0.0, %v2231
      %2233 = vdwg.mxu0
      %v2234 = vadd.f32 %v1955, %v2139
      %v2235 = vadd.f32 %v1956, %v2142
      %v2236 = vadd.f32 %v1957, %v2145
      %v2237 = vadd.f32 %v1958, %v2148
      %v2238 = vadd.f32 %v1959, %v2151
      %v2239 = vadd.f32 %v1960, %v2154
      %v2240 = vadd.f32 %v1961, %v2157
      %v2241 = vadd.f32 %v1962, %v2160
      %v2242 = vadd.f32 %v1963, %v2163
      %v2243 = vadd.f32 %v1964, %v2166
      %v2244 = vadd.f32 %v1965, %v2169
      %v2245 = vadd.f32 %v1966, %v2172
      %v2246 = vadd.f32 %v1967, %v2175
      %v2247 = vadd.f32 %v1968, %v2178
      %v2248 = vadd.f32 %v1969, %v2181
      %v2249 = vadd.f32 %v1970, %v2184
      %v2250 = vadd.f32 %v1971, %v2187
      %v2251 = vadd.f32 %v1972, %v2190
      %v2252 = vadd.f32 %v1973, %v2193
      %v2253 = vadd.f32 %v1974, %v2196
      %v2254 = vadd.f32 %v1975, %v2199
      %v2255 = vadd.f32 %v1976, %v2202
      %v2256 = vadd.f32 %v1977, %v2205
      %v2257 = vadd.f32 %v1978, %v2208
      %v2258 = vadd.f32 %v1979, %v2211
      %v2259 = vadd.f32 %v1980, %v2214
      %v2260 = vadd.f32 %v1981, %v2217
      %v2261 = vadd.f32 %v1982, %v2220
      %v2262 = vadd.f32 %v1983, %v2223
      %v2263 = vadd.f32 %v1984, %v2226
      %v2264 = vadd.f32 %v1985, %v2229
      %v2265 = vadd.f32 %v1986, %v2232
      %v2266 = vld [vmem:[%s1987 + $0x1] sm:$0xff]
      %v2267 = vld [vmem:[%s1987 + $0x9] sm:$0xff]
      %v2268 = vld [vmem:[%s1987 + $0x19] sm:$0xff]
      %v2269 = vld [vmem:[%s1987 + $0x21] sm:$0xff]
      %v2270 = vld [vmem:[%s1987 + $0x31] sm:$0xff]
      %v2271 = vld [vmem:[%s1987 + $0x39] sm:$0xff]
      %v2272 = vld [vmem:[%s1987 + $0x49] sm:$0xff]
      %v2273 = vld [vmem:[%s1987 + $0x51] sm:$0xff]
      %v2274 = vld [vmem:[%s1987 + $0x61] sm:$0xff]
      %v2275 = vld [vmem:[%s1987 + $0x69] sm:$0xff]
      %v2276 = vld [vmem:[%s1987 + $0x79] sm:$0xff]
      %v2277 = vld [vmem:[%s1987 + $0x81] sm:$0xff]
      %v2278 = vld [vmem:[%s1987 + $0x91] sm:$0xff]
      %v2279 = vld [vmem:[%s1987 + $0x99] sm:$0xff]
      %v2280 = vld [vmem:[%s1987 + $0xa9] sm:$0xff]
      %v2281 = vld [vmem:[%s1987 + $0xb1] sm:$0xff]
      %v2282 = vld [vmem:[%s1987 + $0xc1] sm:$0xff]
      %v2283 = vld [vmem:[%s1987 + $0xc9] sm:$0xff]
      %v2284 = vld [vmem:[%s1987 + $0xd9] sm:$0xff]
      %v2285 = vld [vmem:[%s1987 + $0xe1] sm:$0xff]
      %v2286 = vld [vmem:[%s1987 + $0xf1] sm:$0xff]
      %v2287 = vld [vmem:[%s1987 + $0xf9] sm:$0xff]
      %v2288 = vld [vmem:[%s1987 + $0x109] sm:$0xff]
      %v2289 = vld [vmem:[%s1987 + $0x111] sm:$0xff]
      %v2290 = vld [vmem:[%s1987 + $0x121] sm:$0xff]
      %v2291 = vld [vmem:[%s1987 + $0x129] sm:$0xff]
      %v2292 = vld [vmem:[%s1987 + $0x139] sm:$0xff]
      %v2293 = vld [vmem:[%s1987 + $0x141] sm:$0xff]
      %v2294 = vld [vmem:[%s1987 + $0x151] sm:$0xff]
      %v2295 = vld [vmem:[%s1987 + $0x159] sm:$0xff]
      %v2296 = vld [vmem:[%s1987 + $0x169] sm:$0xff]
      %v2297 = vld [vmem:[%s1987 + $0x171] sm:$0xff]
      %s2298 = scalar_lea.vmem %s1, 28
      %v2299 = vld [vmem:[%s2298] sm:$0xf]
      %v2301 = vsel %vm272, %v2266, 0
      %v2304 = vsel %vm272, %v2267, 0
      %v2307 = vsel %vm272, %v2268, 0
      %v2310 = vsel %vm272, %v2269, 0
      %v2313 = vsel %vm272, %v2270, 0
      %v2316 = vsel %vm272, %v2271, 0
      %v2319 = vsel %vm272, %v2272, 0
      %v2322 = vsel %vm272, %v2273, 0
      %v2325 = vsel %vm272, %v2274, 0
      %v2328 = vsel %vm272, %v2275, 0
      %v2331 = vsel %vm272, %v2276, 0
      %v2334 = vsel %vm272, %v2277, 0
      %v2337 = vsel %vm272, %v2278, 0
      %v2340 = vsel %vm272, %v2279, 0
      %v2343 = vsel %vm272, %v2280, 0
      %v2346 = vsel %vm272, %v2281, 0
      %v2349 = vsel %vm272, %v2282, 0
      %v2352 = vsel %vm272, %v2283, 0
      %v2355 = vsel %vm272, %v2284, 0
      %v2358 = vsel %vm272, %v2285, 0
      %v2361 = vsel %vm272, %v2286, 0
      %v2364 = vsel %vm272, %v2287, 0
      %v2367 = vsel %vm272, %v2288, 0
      %v2370 = vsel %vm272, %v2289, 0
      %v2373 = vsel %vm272, %v2290, 0
      %v2376 = vsel %vm272, %v2291, 0
      %v2379 = vsel %vm272, %v2292, 0
      %v2382 = vsel %vm272, %v2293, 0
      %v2385 = vsel %vm272, %v2294, 0
      %v2388 = vsel %vm272, %v2295, 0
      %v2391 = vsel %vm272, %v2296, 0
      %v2394 = vsel %vm272, %v2297, 0
      %v2397 = vsel %vm546, %v2299, 0
      %2399 = vmatpush.msra.mxu0 0.0
      %2400 = vmatpush.msra.mxu0 0.0
      %2401 = vmatpush.msra.mxu0 0.0
      %2402 = vmatpush.msra.mxu0 0.0
      %2403 = vmatpush.msra.mxu0 0.0
      %2404 = vmatpush.msra.mxu0 0.0
      %2405 = vmatpush.msra.mxu0 0.0
      %2406 = vmatpush.msra.mxu0 0.0
      %2407 = vmatpush.msra.mxu0 0.0
      %2408 = vmatpush.msra.mxu0 0.0
      %2409 = vmatpush.msra.mxu0 0.0
      %2410 = vmatpush.msra.mxu0 0.0
      %2411 = vmatpush.msra.mxu0 0.0
      %2412 = vmatpush.msra.mxu0 0.0
      %2413 = vmatpush.msra.mxu0 0.0
      %2414 = vmatpush.msra.mxu0 %v2397
      %2415 = vmatmul.f32.gmra.mxu0 %v2301
      %v2416 = vpop.f32.mrf.mxu0
      %v2417 = vadd.f32 0.0, %v2416
      %2418 = vmatmul.f32.gmra.mxu0 %v2304
      %v2419 = vpop.f32.mrf.mxu0
      %v2420 = vadd.f32 0.0, %v2419
      %2421 = vmatmul.f32.gmra.mxu0 %v2307
      %v2422 = vpop.f32.mrf.mxu0
      %v2423 = vadd.f32 0.0, %v2422
      %2424 = vmatmul.f32.gmra.mxu0 %v2310
      %v2425 = vpop.f32.mrf.mxu0
      %v2426 = vadd.f32 0.0, %v2425
      %2427 = vmatmul.f32.gmra.mxu0 %v2313
      %v2428 = vpop.f32.mrf.mxu0
      %v2429 = vadd.f32 0.0, %v2428
      %2430 = vmatmul.f32.gmra.mxu0 %v2316
      %v2431 = vpop.f32.mrf.mxu0
      %v2432 = vadd.f32 0.0, %v2431
      %2433 = vmatmul.f32.gmra.mxu0 %v2319
      %v2434 = vpop.f32.mrf.mxu0
      %v2435 = vadd.f32 0.0, %v2434
      %2436 = vmatmul.f32.gmra.mxu0 %v2322
      %v2437 = vpop.f32.mrf.mxu0
      %v2438 = vadd.f32 0.0, %v2437
      %2439 = vmatmul.f32.gmra.mxu0 %v2325
      %v2440 = vpop.f32.mrf.mxu0
      %v2441 = vadd.f32 0.0, %v2440
      %2442 = vmatmul.f32.gmra.mxu0 %v2328
      %v2443 = vpop.f32.mrf.mxu0
      %v2444 = vadd.f32 0.0, %v2443
      %2445 = vmatmul.f32.gmra.mxu0 %v2331
      %v2446 = vpop.f32.mrf.mxu0
      %v2447 = vadd.f32 0.0, %v2446
      %2448 = vmatmul.f32.gmra.mxu0 %v2334
      %v2449 = vpop.f32.mrf.mxu0
      %v2450 = vadd.f32 0.0, %v2449
      %2451 = vmatmul.f32.gmra.mxu0 %v2337
      %v2452 = vpop.f32.mrf.mxu0
      %v2453 = vadd.f32 0.0, %v2452
      %2454 = vmatmul.f32.gmra.mxu0 %v2340
      %v2455 = vpop.f32.mrf.mxu0
      %v2456 = vadd.f32 0.0, %v2455
      %2457 = vmatmul.f32.gmra.mxu0 %v2343
      %v2458 = vpop.f32.mrf.mxu0
      %v2459 = vadd.f32 0.0, %v2458
      %2460 = vmatmul.f32.gmra.mxu0 %v2346
      %v2461 = vpop.f32.mrf.mxu0
      %v2462 = vadd.f32 0.0, %v2461
      %2463 = vmatmul.f32.gmra.mxu0 %v2349
      %v2464 = vpop.f32.mrf.mxu0
      %v2465 = vadd.f32 0.0, %v2464
      %2466 = vmatmul.f32.gmra.mxu0 %v2352
      %v2467 = vpop.f32.mrf.mxu0
      %v2468 = vadd.f32 0.0, %v2467
      %2469 = vmatmul.f32.gmra.mxu0 %v2355
      %v2470 = vpop.f32.mrf.mxu0
      %v2471 = vadd.f32 0.0, %v2470
      %2472 = vmatmul.f32.gmra.mxu0 %v2358
      %v2473 = vpop.f32.mrf.mxu0
      %v2474 = vadd.f32 0.0, %v2473
      %2475 = vmatmul.f32.gmra.mxu0 %v2361
      %v2476 = vpop.f32.mrf.mxu0
      %v2477 = vadd.f32 0.0, %v2476
      %2478 = vmatmul.f32.gmra.mxu0 %v2364
      %v2479 = vpop.f32.mrf.mxu0
      %v2480 = vadd.f32 0.0, %v2479
      %2481 = vmatmul.f32.gmra.mxu0 %v2367
      %v2482 = vpop.f32.mrf.mxu0
      %v2483 = vadd.f32 0.0, %v2482
      %2484 = vmatmul.f32.gmra.mxu0 %v2370
      %v2485 = vpop.f32.mrf.mxu0
      %v2486 = vadd.f32 0.0, %v2485
      %2487 = vmatmul.f32.gmra.mxu0 %v2373
      %v2488 = vpop.f32.mrf.mxu0
      %v2489 = vadd.f32 0.0, %v2488
      %2490 = vmatmul.f32.gmra.mxu0 %v2376
      %v2491 = vpop.f32.mrf.mxu0
      %v2492 = vadd.f32 0.0, %v2491
      %2493 = vmatmul.f32.gmra.mxu0 %v2379
      %v2494 = vpop.f32.mrf.mxu0
      %v2495 = vadd.f32 0.0, %v2494
      %2496 = vmatmul.f32.gmra.mxu0 %v2382
      %v2497 = vpop.f32.mrf.mxu0
      %v2498 = vadd.f32 0.0, %v2497
      %2499 = vmatmul.f32.gmra.mxu0 %v2385
      %v2500 = vpop.f32.mrf.mxu0
      %v2501 = vadd.f32 0.0, %v2500
      %2502 = vmatmul.f32.gmra.mxu0 %v2388
      %v2503 = vpop.f32.mrf.mxu0
      %v2504 = vadd.f32 0.0, %v2503
      %2505 = vmatmul.f32.gmra.mxu0 %v2391
      %v2506 = vpop.f32.mrf.mxu0
      %v2507 = vadd.f32 0.0, %v2506
      %2508 = vmatmul.f32.gmra.mxu0 %v2394
      %v2509 = vpop.f32.mrf.mxu0
      %v2510 = vadd.f32 0.0, %v2509
      %2511 = vdwg.mxu0
      %v2512 = vadd.f32 %v2234, %v2417
      %v2513 = vadd.f32 %v2235, %v2420
      %v2514 = vadd.f32 %v2236, %v2423
      %v2515 = vadd.f32 %v2237, %v2426
      %v2516 = vadd.f32 %v2238, %v2429
      %v2517 = vadd.f32 %v2239, %v2432
      %v2518 = vadd.f32 %v2240, %v2435
      %v2519 = vadd.f32 %v2241, %v2438
      %v2520 = vadd.f32 %v2242, %v2441
      %v2521 = vadd.f32 %v2243, %v2444
      %v2522 = vadd.f32 %v2244, %v2447
      %v2523 = vadd.f32 %v2245, %v2450
      %v2524 = vadd.f32 %v2246, %v2453
      %v2525 = vadd.f32 %v2247, %v2456
      %v2526 = vadd.f32 %v2248, %v2459
      %v2527 = vadd.f32 %v2249, %v2462
      %v2528 = vadd.f32 %v2250, %v2465
      %v2529 = vadd.f32 %v2251, %v2468
      %v2530 = vadd.f32 %v2252, %v2471
      %v2531 = vadd.f32 %v2253, %v2474
      %v2532 = vadd.f32 %v2254, %v2477
      %v2533 = vadd.f32 %v2255, %v2480
      %v2534 = vadd.f32 %v2256, %v2483
      %v2535 = vadd.f32 %v2257, %v2486
      %v2536 = vadd.f32 %v2258, %v2489
      %v2537 = vadd.f32 %v2259, %v2492
      %v2538 = vadd.f32 %v2260, %v2495
      %v2539 = vadd.f32 %v2261, %v2498
      %v2540 = vadd.f32 %v2262, %v2501
      %v2541 = vadd.f32 %v2263, %v2504
      %v2542 = vadd.f32 %v2264, %v2507
      %v2543 = vadd.f32 %v2265, %v2510
      %v2544 = vld [vmem:[%s1987 + $0x2] sm:$0xff]
      %v2545 = vld [vmem:[%s1987 + $0xa] sm:$0xff]
      %v2546 = vld [vmem:[%s1987 + $0x1a] sm:$0xff]
      %v2547 = vld [vmem:[%s1987 + $0x22] sm:$0xff]
      %v2548 = vld [vmem:[%s1987 + $0x32] sm:$0xff]
      %v2549 = vld [vmem:[%s1987 + $0x3a] sm:$0xff]
      %v2550 = vld [vmem:[%s1987 + $0x4a] sm:$0xff]
      %v2551 = vld [vmem:[%s1987 + $0x52] sm:$0xff]
      %v2552 = vld [vmem:[%s1987 + $0x62] sm:$0xff]
      %v2553 = vld [vmem:[%s1987 + $0x6a] sm:$0xff]
      %v2554 = vld [vmem:[%s1987 + $0x7a] sm:$0xff]
      %v2555 = vld [vmem:[%s1987 + $0x82] sm:$0xff]
      %v2556 = vld [vmem:[%s1987 + $0x92] sm:$0xff]
      %v2557 = vld [vmem:[%s1987 + $0x9a] sm:$0xff]
      %v2558 = vld [vmem:[%s1987 + $0xaa] sm:$0xff]
      %v2559 = vld [vmem:[%s1987 + $0xb2] sm:$0xff]
      %v2560 = vld [vmem:[%s1987 + $0xc2] sm:$0xff]
      %v2561 = vld [vmem:[%s1987 + $0xca] sm:$0xff]
      %v2562 = vld [vmem:[%s1987 + $0xda] sm:$0xff]
      %v2563 = vld [vmem:[%s1987 + $0xe2] sm:$0xff]
      %v2564 = vld [vmem:[%s1987 + $0xf2] sm:$0xff]
      %v2565 = vld [vmem:[%s1987 + $0xfa] sm:$0xff]
      %v2566 = vld [vmem:[%s1987 + $0x10a] sm:$0xff]
      %v2567 = vld [vmem:[%s1987 + $0x112] sm:$0xff]
      %v2568 = vld [vmem:[%s1987 + $0x122] sm:$0xff]
      %v2569 = vld [vmem:[%s1987 + $0x12a] sm:$0xff]
      %v2570 = vld [vmem:[%s1987 + $0x13a] sm:$0xff]
      %v2571 = vld [vmem:[%s1987 + $0x142] sm:$0xff]
      %v2572 = vld [vmem:[%s1987 + $0x152] sm:$0xff]
      %v2573 = vld [vmem:[%s1987 + $0x15a] sm:$0xff]
      %v2574 = vld [vmem:[%s1987 + $0x16a] sm:$0xff]
      %v2575 = vld [vmem:[%s1987 + $0x172] sm:$0xff]
      %s2576 = scalar_lea.vmem %s1, 32
      %v2577 = vld [vmem:[%s2576] sm:$0xf]
      %v2579 = vsel %vm272, %v2544, 0
      %v2582 = vsel %vm272, %v2545, 0
      %v2585 = vsel %vm272, %v2546, 0
      %v2588 = vsel %vm272, %v2547, 0
      %v2591 = vsel %vm272, %v2548, 0
      %v2594 = vsel %vm272, %v2549, 0
      %v2597 = vsel %vm272, %v2550, 0
      %v2600 = vsel %vm272, %v2551, 0
      %v2603 = vsel %vm272, %v2552, 0
      %v2606 = vsel %vm272, %v2553, 0
      %v2609 = vsel %vm272, %v2554, 0
      %v2612 = vsel %vm272, %v2555, 0
      %v2615 = vsel %vm272, %v2556, 0
      %v2618 = vsel %vm272, %v2557, 0
      %v2621 = vsel %vm272, %v2558, 0
      %v2624 = vsel %vm272, %v2559, 0
      %v2627 = vsel %vm272, %v2560, 0
      %v2630 = vsel %vm272, %v2561, 0
      %v2633 = vsel %vm272, %v2562, 0
      %v2636 = vsel %vm272, %v2563, 0
      %v2639 = vsel %vm272, %v2564, 0
      %v2642 = vsel %vm272, %v2565, 0
      %v2645 = vsel %vm272, %v2566, 0
      %v2648 = vsel %vm272, %v2567, 0
      %v2651 = vsel %vm272, %v2568, 0
      %v2654 = vsel %vm272, %v2569, 0
      %v2657 = vsel %vm272, %v2570, 0
      %v2660 = vsel %vm272, %v2571, 0
      %v2663 = vsel %vm272, %v2572, 0
      %v2666 = vsel %vm272, %v2573, 0
      %v2669 = vsel %vm272, %v2574, 0
      %v2672 = vsel %vm272, %v2575, 0
      %v2675 = vsel %vm546, %v2577, 0
      %2677 = vmatpush.msra.mxu0 0.0
      %2678 = vmatpush.msra.mxu0 0.0
      %2679 = vmatpush.msra.mxu0 0.0
      %2680 = vmatpush.msra.mxu0 0.0
      %2681 = vmatpush.msra.mxu0 0.0
      %2682 = vmatpush.msra.mxu0 0.0
      %2683 = vmatpush.msra.mxu0 0.0
      %2684 = vmatpush.msra.mxu0 0.0
      %2685 = vmatpush.msra.mxu0 0.0
      %2686 = vmatpush.msra.mxu0 0.0
      %2687 = vmatpush.msra.mxu0 0.0
      %2688 = vmatpush.msra.mxu0 0.0
      %2689 = vmatpush.msra.mxu0 0.0
      %2690 = vmatpush.msra.mxu0 0.0
      %2691 = vmatpush.msra.mxu0 0.0
      %2692 = vmatpush.msra.mxu0 %v2675
      %2693 = vmatmul.f32.gmra.mxu0 %v2579
      %v2694 = vpop.f32.mrf.mxu0
      %v2695 = vadd.f32 0.0, %v2694
      %2696 = vmatmul.f32.gmra.mxu0 %v2582
      %v2697 = vpop.f32.mrf.mxu0
      %v2698 = vadd.f32 0.0, %v2697
      %2699 = vmatmul.f32.gmra.mxu0 %v2585
      %v2700 = vpop.f32.mrf.mxu0
      %v2701 = vadd.f32 0.0, %v2700
      %2702 = vmatmul.f32.gmra.mxu0 %v2588
      %v2703 = vpop.f32.mrf.mxu0
      %v2704 = vadd.f32 0.0, %v2703
      %2705 = vmatmul.f32.gmra.mxu0 %v2591
      %v2706 = vpop.f32.mrf.mxu0
      %v2707 = vadd.f32 0.0, %v2706
      %2708 = vmatmul.f32.gmra.mxu0 %v2594
      %v2709 = vpop.f32.mrf.mxu0
      %v2710 = vadd.f32 0.0, %v2709
      %2711 = vmatmul.f32.gmra.mxu0 %v2597
      %v2712 = vpop.f32.mrf.mxu0
      %v2713 = vadd.f32 0.0, %v2712
      %2714 = vmatmul.f32.gmra.mxu0 %v2600
      %v2715 = vpop.f32.mrf.mxu0
      %v2716 = vadd.f32 0.0, %v2715
      %2717 = vmatmul.f32.gmra.mxu0 %v2603
      %v2718 = vpop.f32.mrf.mxu0
      %v2719 = vadd.f32 0.0, %v2718
      %2720 = vmatmul.f32.gmra.mxu0 %v2606
      %v2721 = vpop.f32.mrf.mxu0
      %v2722 = vadd.f32 0.0, %v2721
      %2723 = vmatmul.f32.gmra.mxu0 %v2609
      %v2724 = vpop.f32.mrf.mxu0
      %v2725 = vadd.f32 0.0, %v2724
      %2726 = vmatmul.f32.gmra.mxu0 %v2612
      %v2727 = vpop.f32.mrf.mxu0
      %v2728 = vadd.f32 0.0, %v2727
      %2729 = vmatmul.f32.gmra.mxu0 %v2615
      %v2730 = vpop.f32.mrf.mxu0
      %v2731 = vadd.f32 0.0, %v2730
      %2732 = vmatmul.f32.gmra.mxu0 %v2618
      %v2733 = vpop.f32.mrf.mxu0
      %v2734 = vadd.f32 0.0, %v2733
      %2735 = vmatmul.f32.gmra.mxu0 %v2621
      %v2736 = vpop.f32.mrf.mxu0
      %v2737 = vadd.f32 0.0, %v2736
      %2738 = vmatmul.f32.gmra.mxu0 %v2624
      %v2739 = vpop.f32.mrf.mxu0
      %v2740 = vadd.f32 0.0, %v2739
      %2741 = vmatmul.f32.gmra.mxu0 %v2627
      %v2742 = vpop.f32.mrf.mxu0
      %v2743 = vadd.f32 0.0, %v2742
      %2744 = vmatmul.f32.gmra.mxu0 %v2630
      %v2745 = vpop.f32.mrf.mxu0
      %v2746 = vadd.f32 0.0, %v2745
      %2747 = vmatmul.f32.gmra.mxu0 %v2633
      %v2748 = vpop.f32.mrf.mxu0
      %v2749 = vadd.f32 0.0, %v2748
      %2750 = vmatmul.f32.gmra.mxu0 %v2636
      %v2751 = vpop.f32.mrf.mxu0
      %v2752 = vadd.f32 0.0, %v2751
      %2753 = vmatmul.f32.gmra.mxu0 %v2639
      %v2754 = vpop.f32.mrf.mxu0
      %v2755 = vadd.f32 0.0, %v2754
      %2756 = vmatmul.f32.gmra.mxu0 %v2642
      %v2757 = vpop.f32.mrf.mxu0
      %v2758 = vadd.f32 0.0, %v2757
      %2759 = vmatmul.f32.gmra.mxu0 %v2645
      %v2760 = vpop.f32.mrf.mxu0
      %v2761 = vadd.f32 0.0, %v2760
      %2762 = vmatmul.f32.gmra.mxu0 %v2648
      %v2763 = vpop.f32.mrf.mxu0
      %v2764 = vadd.f32 0.0, %v2763
      %2765 = vmatmul.f32.gmra.mxu0 %v2651
      %v2766 = vpop.f32.mrf.mxu0
      %v2767 = vadd.f32 0.0, %v2766
      %2768 = vmatmul.f32.gmra.mxu0 %v2654
      %v2769 = vpop.f32.mrf.mxu0
      %v2770 = vadd.f32 0.0, %v2769
      %2771 = vmatmul.f32.gmra.mxu0 %v2657
      %v2772 = vpop.f32.mrf.mxu0
      %v2773 = vadd.f32 0.0, %v2772
      %2774 = vmatmul.f32.gmra.mxu0 %v2660
      %v2775 = vpop.f32.mrf.mxu0
      %v2776 = vadd.f32 0.0, %v2775
      %2777 = vmatmul.f32.gmra.mxu0 %v2663
      %v2778 = vpop.f32.mrf.mxu0
      %v2779 = vadd.f32 0.0, %v2778
      %2780 = vmatmul.f32.gmra.mxu0 %v2666
      %v2781 = vpop.f32.mrf.mxu0
      %v2782 = vadd.f32 0.0, %v2781
      %2783 = vmatmul.f32.gmra.mxu0 %v2669
      %v2784 = vpop.f32.mrf.mxu0
      %v2785 = vadd.f32 0.0, %v2784
      %2786 = vmatmul.f32.gmra.mxu0 %v2672
      %v2787 = vpop.f32.mrf.mxu0
      %v2788 = vadd.f32 0.0, %v2787
      %2789 = vdwg.mxu0
      %v2790 = vadd.f32 %v2512, %v2695
      %v2791 = vadd.f32 %v2513, %v2698
      %v2792 = vadd.f32 %v2514, %v2701
      %v2793 = vadd.f32 %v2515, %v2704
      %v2794 = vadd.f32 %v2516, %v2707
      %v2795 = vadd.f32 %v2517, %v2710
      %v2796 = vadd.f32 %v2518, %v2713
      %v2797 = vadd.f32 %v2519, %v2716
      %v2798 = vadd.f32 %v2520, %v2719
      %v2799 = vadd.f32 %v2521, %v2722
      %v2800 = vadd.f32 %v2522, %v2725
      %v2801 = vadd.f32 %v2523, %v2728
      %v2802 = vadd.f32 %v2524, %v2731
      %v2803 = vadd.f32 %v2525, %v2734
      %v2804 = vadd.f32 %v2526, %v2737
      %v2805 = vadd.f32 %v2527, %v2740
      %v2806 = vadd.f32 %v2528, %v2743
      %v2807 = vadd.f32 %v2529, %v2746
      %v2808 = vadd.f32 %v2530, %v2749
      %v2809 = vadd.f32 %v2531, %v2752
      %v2810 = vadd.f32 %v2532, %v2755
      %v2811 = vadd.f32 %v2533, %v2758
      %v2812 = vadd.f32 %v2534, %v2761
      %v2813 = vadd.f32 %v2535, %v2764
      %v2814 = vadd.f32 %v2536, %v2767
      %v2815 = vadd.f32 %v2537, %v2770
      %v2816 = vadd.f32 %v2538, %v2773
      %v2817 = vadd.f32 %v2539, %v2776
      %v2818 = vadd.f32 %v2540, %v2779
      %v2819 = vadd.f32 %v2541, %v2782
      %v2820 = vadd.f32 %v2542, %v2785
      %v2821 = vadd.f32 %v2543, %v2788
      %v2822 = vld [vmem:[%s2] sm:$0x1]
      %v2824 = vperm.slane %v2822, 0
      %v2826 = vadd.f32 %v2790, %v2824
      %v2827 = vadd.f32 %v2791, %v2824
      %v2828 = vadd.f32 %v2792, %v2824
      %v2829 = vadd.f32 %v2793, %v2824
      %v2830 = vadd.f32 %v2794, %v2824
      %v2831 = vadd.f32 %v2795, %v2824
      %v2832 = vadd.f32 %v2796, %v2824
      %v2833 = vadd.f32 %v2797, %v2824
      %v2834 = vadd.f32 %v2798, %v2824
      %v2835 = vadd.f32 %v2799, %v2824
      %v2836 = vadd.f32 %v2800, %v2824
      %v2837 = vadd.f32 %v2801, %v2824
      %v2838 = vadd.f32 %v2802, %v2824
      %v2839 = vadd.f32 %v2803, %v2824
      %v2840 = vadd.f32 %v2804, %v2824
      %v2841 = vadd.f32 %v2805, %v2824
      %v2842 = vadd.f32 %v2806, %v2824
      %v2843 = vadd.f32 %v2807, %v2824
      %v2844 = vadd.f32 %v2808, %v2824
      %v2845 = vadd.f32 %v2809, %v2824
      %v2846 = vadd.f32 %v2810, %v2824
      %v2847 = vadd.f32 %v2811, %v2824
      %v2848 = vadd.f32 %v2812, %v2824
      %v2849 = vadd.f32 %v2813, %v2824
      %v2850 = vadd.f32 %v2814, %v2824
      %v2851 = vadd.f32 %v2815, %v2824
      %v2852 = vadd.f32 %v2816, %v2824
      %v2853 = vadd.f32 %v2817, %v2824
      %v2854 = vadd.f32 %v2818, %v2824
      %v2855 = vadd.f32 %v2819, %v2824
      %v2856 = vadd.f32 %v2820, %v2824
      %v2857 = vadd.f32 %v2821, %v2824
      %v2858 = vmax.f32 %v2826, 0.0
      %v2859 = vmax.f32 %v2827, 0.0
      %v2860 = vmax.f32 %v2828, 0.0
      %v2861 = vmax.f32 %v2829, 0.0
      %v2862 = vmax.f32 %v2830, 0.0
      %v2863 = vmax.f32 %v2831, 0.0
      %v2864 = vmax.f32 %v2832, 0.0
      %v2865 = vmax.f32 %v2833, 0.0
      %v2866 = vmax.f32 %v2834, 0.0
      %v2867 = vmax.f32 %v2835, 0.0
      %v2868 = vmax.f32 %v2836, 0.0
      %v2869 = vmax.f32 %v2837, 0.0
      %v2870 = vmax.f32 %v2838, 0.0
      %v2871 = vmax.f32 %v2839, 0.0
      %v2872 = vmax.f32 %v2840, 0.0
      %v2873 = vmax.f32 %v2841, 0.0
      %v2874 = vmax.f32 %v2842, 0.0
      %v2875 = vmax.f32 %v2843, 0.0
      %v2876 = vmax.f32 %v2844, 0.0
      %v2877 = vmax.f32 %v2845, 0.0
      %v2878 = vmax.f32 %v2846, 0.0
      %v2879 = vmax.f32 %v2847, 0.0
      %v2880 = vmax.f32 %v2848, 0.0
      %v2881 = vmax.f32 %v2849, 0.0
      %v2882 = vmax.f32 %v2850, 0.0
      %v2883 = vmax.f32 %v2851, 0.0
      %v2884 = vmax.f32 %v2852, 0.0
      %v2885 = vmax.f32 %v2853, 0.0
      %v2886 = vmax.f32 %v2854, 0.0
      %v2887 = vmax.f32 %v2855, 0.0
      %v2888 = vmax.f32 %v2856, 0.0
      %v2889 = vmax.f32 %v2857, 0.0
      %2890 = vst.msk [vmem:[#allocation3] sm:$0xff] %vm272, 0.0
      %2891 = vst.msk [vmem:[#allocation3 + $0x8] sm:$0xff] %vm272, 0.0
      %2892 = vst.msk [vmem:[#allocation3 + $0x10] sm:$0x3] %vm275, 0.0
      %s2893 = scalar_lea.vmem [#allocation3], 408
      %2894 = vst.msk [vmem:[%s2893] sm:$0xff] %vm272, 0.0
      %2895 = vst.msk [vmem:[%s2893 + $0x8] sm:$0xff] %vm272, 0.0
      %2896 = vst.msk [vmem:[%s2893 + $0x10] sm:$0x3] %vm275, 0.0
      %2897 = vst.msk [vmem:[#allocation3] sm:$0x1] %vm281, 0.0
      %2898 = vst.msk [vmem:[#allocation3 + $0x18] sm:$0x1] %vm281, 0.0
      %2899 = vst.msk [vmem:[#allocation3 + $0x30] sm:$0x1] %vm281, 0.0
      %2900 = vst.msk [vmem:[#allocation3 + $0x48] sm:$0x1] %vm281, 0.0
      %2901 = vst.msk [vmem:[#allocation3 + $0x60] sm:$0x1] %vm281, 0.0
      %2902 = vst.msk [vmem:[#allocation3 + $0x78] sm:$0x1] %vm281, 0.0
      %2903 = vst.msk [vmem:[#allocation3 + $0x90] sm:$0x1] %vm281, 0.0
      %2904 = vst.msk [vmem:[#allocation3 + $0xa8] sm:$0x1] %vm281, 0.0
      %2905 = vst.msk [vmem:[#allocation3 + $0xc0] sm:$0x1] %vm281, 0.0
      %2906 = vst.msk [vmem:[#allocation3 + $0xd8] sm:$0x1] %vm281, 0.0
      %2907 = vst.msk [vmem:[#allocation3 + $0xf0] sm:$0x1] %vm281, 0.0
      %2908 = vst.msk [vmem:[#allocation3 + $0x108] sm:$0x1] %vm281, 0.0
      %2909 = vst.msk [vmem:[#allocation3 + $0x120] sm:$0x1] %vm281, 0.0
      %2910 = vst.msk [vmem:[#allocation3 + $0x138] sm:$0x1] %vm281, 0.0
      %2911 = vst.msk [vmem:[#allocation3 + $0x150] sm:$0x1] %vm281, 0.0
      %2912 = vst.msk [vmem:[#allocation3 + $0x168] sm:$0x1] %vm281, 0.0
      %2913 = vst.msk [vmem:[#allocation3 + $0x180] sm:$0x1] %vm281, 0.0
      %2914 = vst.msk [vmem:[#allocation3 + $0x198] sm:$0x1] %vm281, 0.0
      %2915 = vst.msk [vmem:[#allocation3 + $0x11] sm:$0x1] %vm281, 0.0
      %2916 = vst.msk [vmem:[#allocation3 + $0x29] sm:$0x1] %vm281, 0.0
      %2917 = vst.msk [vmem:[#allocation3 + $0x41] sm:$0x1] %vm281, 0.0
      %2918 = vst.msk [vmem:[#allocation3 + $0x59] sm:$0x1] %vm281, 0.0
      %2919 = vst.msk [vmem:[#allocation3 + $0x71] sm:$0x1] %vm281, 0.0
      %2920 = vst.msk [vmem:[#allocation3 + $0x89] sm:$0x1] %vm281, 0.0
      %2921 = vst.msk [vmem:[#allocation3 + $0xa1] sm:$0x1] %vm281, 0.0
      %2922 = vst.msk [vmem:[#allocation3 + $0xb9] sm:$0x1] %vm281, 0.0
      %2923 = vst.msk [vmem:[#allocation3 + $0xd1] sm:$0x1] %vm281, 0.0
      %2924 = vst.msk [vmem:[#allocation3 + $0xe9] sm:$0x1] %vm281, 0.0
      %2925 = vst.msk [vmem:[#allocation3 + $0x101] sm:$0x1] %vm281, 0.0
      %2926 = vst.msk [vmem:[#allocation3 + $0x119] sm:$0x1] %vm281, 0.0
      %2927 = vst.msk [vmem:[#allocation3 + $0x131] sm:$0x1] %vm281, 0.0
      %2928 = vst.msk [vmem:[#allocation3 + $0x149] sm:$0x1] %vm281, 0.0
      %2929 = vst.msk [vmem:[#allocation3 + $0x161] sm:$0x1] %vm281, 0.0
      %2930 = vst.msk [vmem:[#allocation3 + $0x179] sm:$0x1] %vm281, 0.0
      %2931 = vst.msk [vmem:[#allocation3 + $0x191] sm:$0x1] %vm281, 0.0
      %2932 = vst.msk [vmem:[#allocation3 + $0x1a9] sm:$0x1] %vm281, 0.0
      %s2933 = scalar_lea.vmem [#allocation3], 24
      %2934 = vst.msk [vmem:[%s2933 + $0x1] sm:$0xff] %vm272, %v2858
      %2935 = vst.msk [vmem:[%s2933 + $0x9] sm:$0xff] %vm272, %v2859
      %2936 = vst.msk [vmem:[%s2933 + $0x19] sm:$0xff] %vm272, %v2860
      %2937 = vst.msk [vmem:[%s2933 + $0x21] sm:$0xff] %vm272, %v2861
      %2938 = vst.msk [vmem:[%s2933 + $0x31] sm:$0xff] %vm272, %v2862
      %2939 = vst.msk [vmem:[%s2933 + $0x39] sm:$0xff] %vm272, %v2863
      %2940 = vst.msk [vmem:[%s2933 + $0x49] sm:$0xff] %vm272, %v2864
      %2941 = vst.msk [vmem:[%s2933 + $0x51] sm:$0xff] %vm272, %v2865
      %2942 = vst.msk [vmem:[%s2933 + $0x61] sm:$0xff] %vm272, %v2866
      %2943 = vst.msk [vmem:[%s2933 + $0x69] sm:$0xff] %vm272, %v2867
      %2944 = vst.msk [vmem:[%s2933 + $0x79] sm:$0xff] %vm272, %v2868
      %2945 = vst.msk [vmem:[%s2933 + $0x81] sm:$0xff] %vm272, %v2869
      %2946 = vst.msk [vmem:[%s2933 + $0x91] sm:$0xff] %vm272, %v2870
      %2947 = vst.msk [vmem:[%s2933 + $0x99] sm:$0xff] %vm272, %v2871
      %2948 = vst.msk [vmem:[%s2933 + $0xa9] sm:$0xff] %vm272, %v2872
      %2949 = vst.msk [vmem:[%s2933 + $0xb1] sm:$0xff] %vm272, %v2873
      %2950 = vst.msk [vmem:[%s2933 + $0xc1] sm:$0xff] %vm272, %v2874
      %2951 = vst.msk [vmem:[%s2933 + $0xc9] sm:$0xff] %vm272, %v2875
      %2952 = vst.msk [vmem:[%s2933 + $0xd9] sm:$0xff] %vm272, %v2876
      %2953 = vst.msk [vmem:[%s2933 + $0xe1] sm:$0xff] %vm272, %v2877
      %2954 = vst.msk [vmem:[%s2933 + $0xf1] sm:$0xff] %vm272, %v2878
      %2955 = vst.msk [vmem:[%s2933 + $0xf9] sm:$0xff] %vm272, %v2879
      %2956 = vst.msk [vmem:[%s2933 + $0x109] sm:$0xff] %vm272, %v2880
      %2957 = vst.msk [vmem:[%s2933 + $0x111] sm:$0xff] %vm272, %v2881
      %2958 = vst.msk [vmem:[%s2933 + $0x121] sm:$0xff] %vm272, %v2882
      %2959 = vst.msk [vmem:[%s2933 + $0x129] sm:$0xff] %vm272, %v2883
      %2960 = vst.msk [vmem:[%s2933 + $0x139] sm:$0xff] %vm272, %v2884
      %2961 = vst.msk [vmem:[%s2933 + $0x141] sm:$0xff] %vm272, %v2885
      %2962 = vst.msk [vmem:[%s2933 + $0x151] sm:$0xff] %vm272, %v2886
      %2963 = vst.msk [vmem:[%s2933 + $0x159] sm:$0xff] %vm272, %v2887
      %2964 = vst.msk [vmem:[%s2933 + $0x169] sm:$0xff] %vm272, %v2888
      %2965 = vst.msk [vmem:[%s2933 + $0x171] sm:$0xff] %vm272, %v2889
      %v2966 = vld [vmem:[#allocation3] sm:$0xff]
      %v2967 = vld [vmem:[#allocation3 + $0x8] sm:$0xff]
      %v2968 = vld [vmem:[#allocation3 + $0x18] sm:$0xff]
      %v2969 = vld [vmem:[#allocation3 + $0x20] sm:$0xff]
      %v2970 = vld [vmem:[#allocation3 + $0x30] sm:$0xff]
      %v2971 = vld [vmem:[#allocation3 + $0x38] sm:$0xff]
      %v2972 = vld [vmem:[#allocation3 + $0x48] sm:$0xff]
      %v2973 = vld [vmem:[#allocation3 + $0x50] sm:$0xff]
      %v2974 = vld [vmem:[#allocation3 + $0x60] sm:$0xff]
      %v2975 = vld [vmem:[#allocation3 + $0x68] sm:$0xff]
      %v2976 = vld [vmem:[#allocation3 + $0x78] sm:$0xff]
      %v2977 = vld [vmem:[#allocation3 + $0x80] sm:$0xff]
      %v2978 = vld [vmem:[#allocation3 + $0x90] sm:$0xff]
      %v2979 = vld [vmem:[#allocation3 + $0x98] sm:$0xff]
      %v2980 = vld [vmem:[#allocation3 + $0xa8] sm:$0xff]
      %v2981 = vld [vmem:[#allocation3 + $0xb0] sm:$0xff]
      %v2982 = vld [vmem:[#allocation3 + $0xc0] sm:$0xff]
      %v2983 = vld [vmem:[#allocation3 + $0xc8] sm:$0xff]
      %v2984 = vld [vmem:[#allocation3 + $0xd8] sm:$0xff]
      %v2985 = vld [vmem:[#allocation3 + $0xe0] sm:$0xff]
      %v2986 = vld [vmem:[#allocation3 + $0xf0] sm:$0xff]
      %v2987 = vld [vmem:[#allocation3 + $0xf8] sm:$0xff]
      %v2988 = vld [vmem:[#allocation3 + $0x108] sm:$0xff]
      %v2989 = vld [vmem:[#allocation3 + $0x110] sm:$0xff]
      %v2990 = vld [vmem:[#allocation3 + $0x120] sm:$0xff]
      %v2991 = vld [vmem:[#allocation3 + $0x128] sm:$0xff]
      %v2992 = vld [vmem:[#allocation3 + $0x138] sm:$0xff]
      %v2993 = vld [vmem:[#allocation3 + $0x140] sm:$0xff]
      %v2994 = vld [vmem:[#allocation3 + $0x150] sm:$0xff]
      %v2995 = vld [vmem:[#allocation3 + $0x158] sm:$0xff]
      %v2996 = vld [vmem:[#allocation3 + $0x168] sm:$0xff]
      %v2997 = vld [vmem:[#allocation3 + $0x170] sm:$0xff]
      %v2998 = vld [vmem:[%s3] sm:$0xf]
      %v2999 = vld [vmem:[#allocation3 + $0x1] sm:$0xff]
      %v3000 = vld [vmem:[#allocation3 + $0x9] sm:$0xff]
      %v3001 = vld [vmem:[#allocation3 + $0x19] sm:$0xff]
      %v3002 = vld [vmem:[#allocation3 + $0x21] sm:$0xff]
      %v3003 = vld [vmem:[#allocation3 + $0x31] sm:$0xff]
      %v3004 = vld [vmem:[#allocation3 + $0x39] sm:$0xff]
      %v3005 = vld [vmem:[#allocation3 + $0x49] sm:$0xff]
      %v3006 = vld [vmem:[#allocation3 + $0x51] sm:$0xff]
      %v3007 = vld [vmem:[#allocation3 + $0x61] sm:$0xff]
      %v3008 = vld [vmem:[#allocation3 + $0x69] sm:$0xff]
      %v3009 = vld [vmem:[#allocation3 + $0x79] sm:$0xff]
      %v3010 = vld [vmem:[#allocation3 + $0x81] sm:$0xff]
      %v3011 = vld [vmem:[#allocation3 + $0x91] sm:$0xff]
      %v3012 = vld [vmem:[#allocation3 + $0x99] sm:$0xff]
      %v3013 = vld [vmem:[#allocation3 + $0xa9] sm:$0xff]
      %v3014 = vld [vmem:[#allocation3 + $0xb1] sm:$0xff]
      %v3015 = vld [vmem:[#allocation3 + $0xc1] sm:$0xff]
      %v3016 = vld [vmem:[#allocation3 + $0xc9] sm:$0xff]
      %v3017 = vld [vmem:[#allocation3 + $0xd9] sm:$0xff]
      %v3018 = vld [vmem:[#allocation3 + $0xe1] sm:$0xff]
      %v3019 = vld [vmem:[#allocation3 + $0xf1] sm:$0xff]
      %v3020 = vld [vmem:[#allocation3 + $0xf9] sm:$0xff]
      %v3021 = vld [vmem:[#allocation3 + $0x109] sm:$0xff]
      %v3022 = vld [vmem:[#allocation3 + $0x111] sm:$0xff]
      %v3023 = vld [vmem:[#allocation3 + $0x121] sm:$0xff]
      %v3024 = vld [vmem:[#allocation3 + $0x129] sm:$0xff]
      %v3025 = vld [vmem:[#allocation3 + $0x139] sm:$0xff]
      %v3026 = vld [vmem:[#allocation3 + $0x141] sm:$0xff]
      %v3027 = vld [vmem:[#allocation3 + $0x151] sm:$0xff]
      %v3028 = vld [vmem:[#allocation3 + $0x159] sm:$0xff]
      %v3029 = vld [vmem:[#allocation3 + $0x169] sm:$0xff]
      %v3030 = vld [vmem:[#allocation3 + $0x171] sm:$0xff]
      %s3031 = scalar_lea.vmem %s3, 4
      %v3032 = vld [vmem:[%s3031] sm:$0xf]
      %v3034 = vsel %vm272, %v2999, 0
      %v3037 = vsel %vm272, %v3000, 0
      %v3040 = vsel %vm272, %v3001, 0
      %v3043 = vsel %vm272, %v3002, 0
      %v3046 = vsel %vm272, %v3003, 0
      %v3049 = vsel %vm272, %v3004, 0
      %v3052 = vsel %vm272, %v3005, 0
      %v3055 = vsel %vm272, %v3006, 0
      %v3058 = vsel %vm272, %v3007, 0
      %v3061 = vsel %vm272, %v3008, 0
      %v3064 = vsel %vm272, %v3009, 0
      %v3067 = vsel %vm272, %v3010, 0
      %v3070 = vsel %vm272, %v3011, 0
      %v3073 = vsel %vm272, %v3012, 0
      %v3076 = vsel %vm272, %v3013, 0
      %v3079 = vsel %vm272, %v3014, 0
      %v3082 = vsel %vm272, %v3015, 0
      %v3085 = vsel %vm272, %v3016, 0
      %v3088 = vsel %vm272, %v3017, 0
      %v3091 = vsel %vm272, %v3018, 0
      %v3094 = vsel %vm272, %v3019, 0
      %v3097 = vsel %vm272, %v3020, 0
      %v3100 = vsel %vm272, %v3021, 0
      %v3103 = vsel %vm272, %v3022, 0
      %v3106 = vsel %vm272, %v3023, 0
      %v3109 = vsel %vm272, %v3024, 0
      %v3112 = vsel %vm272, %v3025, 0
      %v3115 = vsel %vm272, %v3026, 0
      %v3118 = vsel %vm272, %v3027, 0
      %v3121 = vsel %vm272, %v3028, 0
      %v3124 = vsel %vm272, %v3029, 0
      %v3127 = vsel %vm272, %v3030, 0
      %v3130 = vsel %vm546, %v3032, 0
      %3132 = vmatpush.msra.mxu0 0.0
      %3133 = vmatpush.msra.mxu0 0.0
      %3134 = vmatpush.msra.mxu0 0.0
      %3135 = vmatpush.msra.mxu0 0.0
      %3136 = vmatpush.msra.mxu0 0.0
      %3137 = vmatpush.msra.mxu0 0.0
      %3138 = vmatpush.msra.mxu0 0.0
      %3139 = vmatpush.msra.mxu0 0.0
      %3140 = vmatpush.msra.mxu0 0.0
      %3141 = vmatpush.msra.mxu0 0.0
      %3142 = vmatpush.msra.mxu0 0.0
      %3143 = vmatpush.msra.mxu0 0.0
      %3144 = vmatpush.msra.mxu0 0.0
      %3145 = vmatpush.msra.mxu0 0.0
      %3146 = vmatpush.msra.mxu0 0.0
      %3147 = vmatpush.msra.mxu0 %v3130
      %3148 = vmatmul.f32.gmra.mxu0 %v3034
      %v3149 = vpop.f32.mrf.mxu0
      %v3150 = vadd.f32 0.0, %v3149
      %3151 = vmatmul.f32.gmra.mxu0 %v3037
      %v3152 = vpop.f32.mrf.mxu0
      %v3153 = vadd.f32 0.0, %v3152
      %3154 = vmatmul.f32.gmra.mxu0 %v3040
      %v3155 = vpop.f32.mrf.mxu0
      %v3156 = vadd.f32 0.0, %v3155
      %3157 = vmatmul.f32.gmra.mxu0 %v3043
      %v3158 = vpop.f32.mrf.mxu0
      %v3159 = vadd.f32 0.0, %v3158
      %3160 = vmatmul.f32.gmra.mxu0 %v3046
      %v3161 = vpop.f32.mrf.mxu0
      %v3162 = vadd.f32 0.0, %v3161
      %3163 = vmatmul.f32.gmra.mxu0 %v3049
      %v3164 = vpop.f32.mrf.mxu0
      %v3165 = vadd.f32 0.0, %v3164
      %3166 = vmatmul.f32.gmra.mxu0 %v3052
      %v3167 = vpop.f32.mrf.mxu0
      %v3168 = vadd.f32 0.0, %v3167
      %3169 = vmatmul.f32.gmra.mxu0 %v3055
      %v3170 = vpop.f32.mrf.mxu0
      %v3171 = vadd.f32 0.0, %v3170
      %3172 = vmatmul.f32.gmra.mxu0 %v3058
      %v3173 = vpop.f32.mrf.mxu0
      %v3174 = vadd.f32 0.0, %v3173
      %3175 = vmatmul.f32.gmra.mxu0 %v3061
      %v3176 = vpop.f32.mrf.mxu0
      %v3177 = vadd.f32 0.0, %v3176
      %3178 = vmatmul.f32.gmra.mxu0 %v3064
      %v3179 = vpop.f32.mrf.mxu0
      %v3180 = vadd.f32 0.0, %v3179
      %3181 = vmatmul.f32.gmra.mxu0 %v3067
      %v3182 = vpop.f32.mrf.mxu0
      %v3183 = vadd.f32 0.0, %v3182
      %3184 = vmatmul.f32.gmra.mxu0 %v3070
      %v3185 = vpop.f32.mrf.mxu0
      %v3186 = vadd.f32 0.0, %v3185
      %3187 = vmatmul.f32.gmra.mxu0 %v3073
      %v3188 = vpop.f32.mrf.mxu0
      %v3189 = vadd.f32 0.0, %v3188
      %3190 = vmatmul.f32.gmra.mxu0 %v3076
      %v3191 = vpop.f32.mrf.mxu0
      %v3192 = vadd.f32 0.0, %v3191
      %3193 = vmatmul.f32.gmra.mxu0 %v3079
      %v3194 = vpop.f32.mrf.mxu0
      %v3195 = vadd.f32 0.0, %v3194
      %3196 = vmatmul.f32.gmra.mxu0 %v3082
      %v3197 = vpop.f32.mrf.mxu0
      %v3198 = vadd.f32 0.0, %v3197
      %3199 = vmatmul.f32.gmra.mxu0 %v3085
      %v3200 = vpop.f32.mrf.mxu0
      %v3201 = vadd.f32 0.0, %v3200
      %3202 = vmatmul.f32.gmra.mxu0 %v3088
      %v3203 = vpop.f32.mrf.mxu0
      %v3204 = vadd.f32 0.0, %v3203
      %3205 = vmatmul.f32.gmra.mxu0 %v3091
      %v3206 = vpop.f32.mrf.mxu0
      %v3207 = vadd.f32 0.0, %v3206
      %3208 = vmatmul.f32.gmra.mxu0 %v3094
      %v3209 = vpop.f32.mrf.mxu0
      %v3210 = vadd.f32 0.0, %v3209
      %3211 = vmatmul.f32.gmra.mxu0 %v3097
      %v3212 = vpop.f32.mrf.mxu0
      %v3213 = vadd.f32 0.0, %v3212
      %3214 = vmatmul.f32.gmra.mxu0 %v3100
      %v3215 = vpop.f32.mrf.mxu0
      %v3216 = vadd.f32 0.0, %v3215
      %3217 = vmatmul.f32.gmra.mxu0 %v3103
      %v3218 = vpop.f32.mrf.mxu0
      %v3219 = vadd.f32 0.0, %v3218
      %3220 = vmatmul.f32.gmra.mxu0 %v3106
      %v3221 = vpop.f32.mrf.mxu0
      %v3222 = vadd.f32 0.0, %v3221
      %3223 = vmatmul.f32.gmra.mxu0 %v3109
      %v3224 = vpop.f32.mrf.mxu0
      %v3225 = vadd.f32 0.0, %v3224
      %3226 = vmatmul.f32.gmra.mxu0 %v3112
      %v3227 = vpop.f32.mrf.mxu0
      %v3228 = vadd.f32 0.0, %v3227
      %3229 = vmatmul.f32.gmra.mxu0 %v3115
      %v3230 = vpop.f32.mrf.mxu0
      %v3231 = vadd.f32 0.0, %v3230
      %3232 = vmatmul.f32.gmra.mxu0 %v3118
      %v3233 = vpop.f32.mrf.mxu0
      %v3234 = vadd.f32 0.0, %v3233
      %3235 = vmatmul.f32.gmra.mxu0 %v3121
      %v3236 = vpop.f32.mrf.mxu0
      %v3237 = vadd.f32 0.0, %v3236
      %3238 = vmatmul.f32.gmra.mxu0 %v3124
      %v3239 = vpop.f32.mrf.mxu0
      %v3240 = vadd.f32 0.0, %v3239
      %3241 = vmatmul.f32.gmra.mxu0 %v3127
      %v3242 = vpop.f32.mrf.mxu0
      %v3243 = vadd.f32 0.0, %v3242
      %3244 = vdwg.mxu0
      %v3246 = vsel %vm272, %v2966, 0
      %v3249 = vsel %vm272, %v2967, 0
      %v3252 = vsel %vm272, %v2968, 0
      %v3255 = vsel %vm272, %v2969, 0
      %v3258 = vsel %vm272, %v2970, 0
      %v3261 = vsel %vm272, %v2971, 0
      %v3264 = vsel %vm272, %v2972, 0
      %v3267 = vsel %vm272, %v2973, 0
      %v3270 = vsel %vm272, %v2974, 0
      %v3273 = vsel %vm272, %v2975, 0
      %v3276 = vsel %vm272, %v2976, 0
      %v3279 = vsel %vm272, %v2977, 0
      %v3282 = vsel %vm272, %v2978, 0
      %v3285 = vsel %vm272, %v2979, 0
      %v3288 = vsel %vm272, %v2980, 0
      %v3291 = vsel %vm272, %v2981, 0
      %v3294 = vsel %vm272, %v2982, 0
      %v3297 = vsel %vm272, %v2983, 0
      %v3300 = vsel %vm272, %v2984, 0
      %v3303 = vsel %vm272, %v2985, 0
      %v3306 = vsel %vm272, %v2986, 0
      %v3309 = vsel %vm272, %v2987, 0
      %v3312 = vsel %vm272, %v2988, 0
      %v3315 = vsel %vm272, %v2989, 0
      %v3318 = vsel %vm272, %v2990, 0
      %v3321 = vsel %vm272, %v2991, 0
      %v3324 = vsel %vm272, %v2992, 0
      %v3327 = vsel %vm272, %v2993, 0
      %v3330 = vsel %vm272, %v2994, 0
      %v3333 = vsel %vm272, %v2995, 0
      %v3336 = vsel %vm272, %v2996, 0
      %v3339 = vsel %vm272, %v2997, 0
      %v3342 = vsel %vm546, %v2998, 0
      %3344 = vmatpush.msra.mxu0 0.0
      %3345 = vmatpush.msra.mxu0 0.0
      %3346 = vmatpush.msra.mxu0 0.0
      %3347 = vmatpush.msra.mxu0 0.0
      %3348 = vmatpush.msra.mxu0 0.0
      %3349 = vmatpush.msra.mxu0 0.0
      %3350 = vmatpush.msra.mxu0 0.0
      %3351 = vmatpush.msra.mxu0 0.0
      %3352 = vmatpush.msra.mxu0 0.0
      %3353 = vmatpush.msra.mxu0 0.0
      %3354 = vmatpush.msra.mxu0 0.0
      %3355 = vmatpush.msra.mxu0 0.0
      %3356 = vmatpush.msra.mxu0 0.0
      %3357 = vmatpush.msra.mxu0 0.0
      %3358 = vmatpush.msra.mxu0 0.0
      %3359 = vmatpush.msra.mxu0 %v3342
      %3360 = vmatmul.f32.gmra.mxu0 %v3246
      %v3361 = vpop.f32.mrf.mxu0
      %v3362 = vadd.f32 %v3150, %v3361
      %3363 = vmatmul.f32.gmra.mxu0 %v3249
      %v3364 = vpop.f32.mrf.mxu0
      %v3365 = vadd.f32 %v3153, %v3364
      %3366 = vmatmul.f32.gmra.mxu0 %v3252
      %v3367 = vpop.f32.mrf.mxu0
      %v3368 = vadd.f32 %v3156, %v3367
      %3369 = vmatmul.f32.gmra.mxu0 %v3255
      %v3370 = vpop.f32.mrf.mxu0
      %v3371 = vadd.f32 %v3159, %v3370
      %3372 = vmatmul.f32.gmra.mxu0 %v3258
      %v3373 = vpop.f32.mrf.mxu0
      %v3374 = vadd.f32 %v3162, %v3373
      %3375 = vmatmul.f32.gmra.mxu0 %v3261
      %v3376 = vpop.f32.mrf.mxu0
      %v3377 = vadd.f32 %v3165, %v3376
      %3378 = vmatmul.f32.gmra.mxu0 %v3264
      %v3379 = vpop.f32.mrf.mxu0
      %v3380 = vadd.f32 %v3168, %v3379
      %3381 = vmatmul.f32.gmra.mxu0 %v3267
      %v3382 = vpop.f32.mrf.mxu0
      %v3383 = vadd.f32 %v3171, %v3382
      %3384 = vmatmul.f32.gmra.mxu0 %v3270
      %v3385 = vpop.f32.mrf.mxu0
      %v3386 = vadd.f32 %v3174, %v3385
      %3387 = vmatmul.f32.gmra.mxu0 %v3273
      %v3388 = vpop.f32.mrf.mxu0
      %v3389 = vadd.f32 %v3177, %v3388
      %3390 = vmatmul.f32.gmra.mxu0 %v3276
      %v3391 = vpop.f32.mrf.mxu0
      %v3392 = vadd.f32 %v3180, %v3391
      %3393 = vmatmul.f32.gmra.mxu0 %v3279
      %v3394 = vpop.f32.mrf.mxu0
      %v3395 = vadd.f32 %v3183, %v3394
      %3396 = vmatmul.f32.gmra.mxu0 %v3282
      %v3397 = vpop.f32.mrf.mxu0
      %v3398 = vadd.f32 %v3186, %v3397
      %3399 = vmatmul.f32.gmra.mxu0 %v3285
      %v3400 = vpop.f32.mrf.mxu0
      %v3401 = vadd.f32 %v3189, %v3400
      %3402 = vmatmul.f32.gmra.mxu0 %v3288
      %v3403 = vpop.f32.mrf.mxu0
      %v3404 = vadd.f32 %v3192, %v3403
      %3405 = vmatmul.f32.gmra.mxu0 %v3291
      %v3406 = vpop.f32.mrf.mxu0
      %v3407 = vadd.f32 %v3195, %v3406
      %3408 = vmatmul.f32.gmra.mxu0 %v3294
      %v3409 = vpop.f32.mrf.mxu0
      %v3410 = vadd.f32 %v3198, %v3409
      %3411 = vmatmul.f32.gmra.mxu0 %v3297
      %v3412 = vpop.f32.mrf.mxu0
      %v3413 = vadd.f32 %v3201, %v3412
      %3414 = vmatmul.f32.gmra.mxu0 %v3300
      %v3415 = vpop.f32.mrf.mxu0
      %v3416 = vadd.f32 %v3204, %v3415
      %3417 = vmatmul.f32.gmra.mxu0 %v3303
      %v3418 = vpop.f32.mrf.mxu0
      %v3419 = vadd.f32 %v3207, %v3418
      %3420 = vmatmul.f32.gmra.mxu0 %v3306
      %v3421 = vpop.f32.mrf.mxu0
      %v3422 = vadd.f32 %v3210, %v3421
      %3423 = vmatmul.f32.gmra.mxu0 %v3309
      %v3424 = vpop.f32.mrf.mxu0
      %v3425 = vadd.f32 %v3213, %v3424
      %3426 = vmatmul.f32.gmra.mxu0 %v3312
      %v3427 = vpop.f32.mrf.mxu0
      %v3428 = vadd.f32 %v3216, %v3427
      %3429 = vmatmul.f32.gmra.mxu0 %v3315
      %v3430 = vpop.f32.mrf.mxu0
      %v3431 = vadd.f32 %v3219, %v3430
      %3432 = vmatmul.f32.gmra.mxu0 %v3318
      %v3433 = vpop.f32.mrf.mxu0
      %v3434 = vadd.f32 %v3222, %v3433
      %3435 = vmatmul.f32.gmra.mxu0 %v3321
      %v3436 = vpop.f32.mrf.mxu0
      %v3437 = vadd.f32 %v3225, %v3436
      %3438 = vmatmul.f32.gmra.mxu0 %v3324
      %v3439 = vpop.f32.mrf.mxu0
      %v3440 = vadd.f32 %v3228, %v3439
      %3441 = vmatmul.f32.gmra.mxu0 %v3327
      %v3442 = vpop.f32.mrf.mxu0
      %v3443 = vadd.f32 %v3231, %v3442
      %3444 = vmatmul.f32.gmra.mxu0 %v3330
      %v3445 = vpop.f32.mrf.mxu0
      %v3446 = vadd.f32 %v3234, %v3445
      %3447 = vmatmul.f32.gmra.mxu0 %v3333
      %v3448 = vpop.f32.mrf.mxu0
      %v3449 = vadd.f32 %v3237, %v3448
      %3450 = vmatmul.f32.gmra.mxu0 %v3336
      %v3451 = vpop.f32.mrf.mxu0
      %v3452 = vadd.f32 %v3240, %v3451
      %3453 = vmatmul.f32.gmra.mxu0 %v3339
      %v3454 = vpop.f32.mrf.mxu0
      %v3455 = vadd.f32 %v3243, %v3454
      %3456 = vdwg.mxu0
      %v3457 = vld [vmem:[#allocation3 + $0x2] sm:$0xff]
      %v3458 = vld [vmem:[#allocation3 + $0xa] sm:$0xff]
      %v3459 = vld [vmem:[#allocation3 + $0x1a] sm:$0xff]
      %v3460 = vld [vmem:[#allocation3 + $0x22] sm:$0xff]
      %v3461 = vld [vmem:[#allocation3 + $0x32] sm:$0xff]
      %v3462 = vld [vmem:[#allocation3 + $0x3a] sm:$0xff]
      %v3463 = vld [vmem:[#allocation3 + $0x4a] sm:$0xff]
      %v3464 = vld [vmem:[#allocation3 + $0x52] sm:$0xff]
      %v3465 = vld [vmem:[#allocation3 + $0x62] sm:$0xff]
      %v3466 = vld [vmem:[#allocation3 + $0x6a] sm:$0xff]
      %v3467 = vld [vmem:[#allocation3 + $0x7a] sm:$0xff]
      %v3468 = vld [vmem:[#allocation3 + $0x82] sm:$0xff]
      %v3469 = vld [vmem:[#allocation3 + $0x92] sm:$0xff]
      %v3470 = vld [vmem:[#allocation3 + $0x9a] sm:$0xff]
      %v3471 = vld [vmem:[#allocation3 + $0xaa] sm:$0xff]
      %v3472 = vld [vmem:[#allocation3 + $0xb2] sm:$0xff]
      %v3473 = vld [vmem:[#allocation3 + $0xc2] sm:$0xff]
      %v3474 = vld [vmem:[#allocation3 + $0xca] sm:$0xff]
      %v3475 = vld [vmem:[#allocation3 + $0xda] sm:$0xff]
      %v3476 = vld [vmem:[#allocation3 + $0xe2] sm:$0xff]
      %v3477 = vld [vmem:[#allocation3 + $0xf2] sm:$0xff]
      %v3478 = vld [vmem:[#allocation3 + $0xfa] sm:$0xff]
      %v3479 = vld [vmem:[#allocation3 + $0x10a] sm:$0xff]
      %v3480 = vld [vmem:[#allocation3 + $0x112] sm:$0xff]
      %v3481 = vld [vmem:[#allocation3 + $0x122] sm:$0xff]
      %v3482 = vld [vmem:[#allocation3 + $0x12a] sm:$0xff]
      %v3483 = vld [vmem:[#allocation3 + $0x13a] sm:$0xff]
      %v3484 = vld [vmem:[#allocation3 + $0x142] sm:$0xff]
      %v3485 = vld [vmem:[#allocation3 + $0x152] sm:$0xff]
      %v3486 = vld [vmem:[#allocation3 + $0x15a] sm:$0xff]
      %v3487 = vld [vmem:[#allocation3 + $0x16a] sm:$0xff]
      %v3488 = vld [vmem:[#allocation3 + $0x172] sm:$0xff]
      %s3489 = scalar_lea.vmem %s3, 8
      %v3490 = vld [vmem:[%s3489] sm:$0xf]
      %v3492 = vsel %vm272, %v3457, 0
      %v3495 = vsel %vm272, %v3458, 0
      %v3498 = vsel %vm272, %v3459, 0
      %v3501 = vsel %vm272, %v3460, 0
      %v3504 = vsel %vm272, %v3461, 0
      %v3507 = vsel %vm272, %v3462, 0
      %v3510 = vsel %vm272, %v3463, 0
      %v3513 = vsel %vm272, %v3464, 0
      %v3516 = vsel %vm272, %v3465, 0
      %v3519 = vsel %vm272, %v3466, 0
      %v3522 = vsel %vm272, %v3467, 0
      %v3525 = vsel %vm272, %v3468, 0
      %v3528 = vsel %vm272, %v3469, 0
      %v3531 = vsel %vm272, %v3470, 0
      %v3534 = vsel %vm272, %v3471, 0
      %v3537 = vsel %vm272, %v3472, 0
      %v3540 = vsel %vm272, %v3473, 0
      %v3543 = vsel %vm272, %v3474, 0
      %v3546 = vsel %vm272, %v3475, 0
      %v3549 = vsel %vm272, %v3476, 0
      %v3552 = vsel %vm272, %v3477, 0
      %v3555 = vsel %vm272, %v3478, 0
      %v3558 = vsel %vm272, %v3479, 0
      %v3561 = vsel %vm272, %v3480, 0
      %v3564 = vsel %vm272, %v3481, 0
      %v3567 = vsel %vm272, %v3482, 0
      %v3570 = vsel %vm272, %v3483, 0
      %v3573 = vsel %vm272, %v3484, 0
      %v3576 = vsel %vm272, %v3485, 0
      %v3579 = vsel %vm272, %v3486, 0
      %v3582 = vsel %vm272, %v3487, 0
      %v3585 = vsel %vm272, %v3488, 0
      %v3588 = vsel %vm546, %v3490, 0
      %3590 = vmatpush.msra.mxu0 0.0
      %3591 = vmatpush.msra.mxu0 0.0
      %3592 = vmatpush.msra.mxu0 0.0
      %3593 = vmatpush.msra.mxu0 0.0
      %3594 = vmatpush.msra.mxu0 0.0
      %3595 = vmatpush.msra.mxu0 0.0
      %3596 = vmatpush.msra.mxu0 0.0
      %3597 = vmatpush.msra.mxu0 0.0
      %3598 = vmatpush.msra.mxu0 0.0
      %3599 = vmatpush.msra.mxu0 0.0
      %3600 = vmatpush.msra.mxu0 0.0
      %3601 = vmatpush.msra.mxu0 0.0
      %3602 = vmatpush.msra.mxu0 0.0
      %3603 = vmatpush.msra.mxu0 0.0
      %3604 = vmatpush.msra.mxu0 0.0
      %3605 = vmatpush.msra.mxu0 %v3588
      %3606 = vmatmul.f32.gmra.mxu0 %v3492
      %v3607 = vpop.f32.mrf.mxu0
      %v3608 = vadd.f32 0.0, %v3607
      %3609 = vmatmul.f32.gmra.mxu0 %v3495
      %v3610 = vpop.f32.mrf.mxu0
      %v3611 = vadd.f32 0.0, %v3610
      %3612 = vmatmul.f32.gmra.mxu0 %v3498
      %v3613 = vpop.f32.mrf.mxu0
      %v3614 = vadd.f32 0.0, %v3613
      %3615 = vmatmul.f32.gmra.mxu0 %v3501
      %v3616 = vpop.f32.mrf.mxu0
      %v3617 = vadd.f32 0.0, %v3616
      %3618 = vmatmul.f32.gmra.mxu0 %v3504
      %v3619 = vpop.f32.mrf.mxu0
      %v3620 = vadd.f32 0.0, %v3619
      %3621 = vmatmul.f32.gmra.mxu0 %v3507
      %v3622 = vpop.f32.mrf.mxu0
      %v3623 = vadd.f32 0.0, %v3622
      %3624 = vmatmul.f32.gmra.mxu0 %v3510
      %v3625 = vpop.f32.mrf.mxu0
      %v3626 = vadd.f32 0.0, %v3625
      %3627 = vmatmul.f32.gmra.mxu0 %v3513
      %v3628 = vpop.f32.mrf.mxu0
      %v3629 = vadd.f32 0.0, %v3628
      %3630 = vmatmul.f32.gmra.mxu0 %v3516
      %v3631 = vpop.f32.mrf.mxu0
      %v3632 = vadd.f32 0.0, %v3631
      %3633 = vmatmul.f32.gmra.mxu0 %v3519
      %v3634 = vpop.f32.mrf.mxu0
      %v3635 = vadd.f32 0.0, %v3634
      %3636 = vmatmul.f32.gmra.mxu0 %v3522
      %v3637 = vpop.f32.mrf.mxu0
      %v3638 = vadd.f32 0.0, %v3637
      %3639 = vmatmul.f32.gmra.mxu0 %v3525
      %v3640 = vpop.f32.mrf.mxu0
      %v3641 = vadd.f32 0.0, %v3640
      %3642 = vmatmul.f32.gmra.mxu0 %v3528
      %v3643 = vpop.f32.mrf.mxu0
      %v3644 = vadd.f32 0.0, %v3643
      %3645 = vmatmul.f32.gmra.mxu0 %v3531
      %v3646 = vpop.f32.mrf.mxu0
      %v3647 = vadd.f32 0.0, %v3646
      %3648 = vmatmul.f32.gmra.mxu0 %v3534
      %v3649 = vpop.f32.mrf.mxu0
      %v3650 = vadd.f32 0.0, %v3649
      %3651 = vmatmul.f32.gmra.mxu0 %v3537
      %v3652 = vpop.f32.mrf.mxu0
      %v3653 = vadd.f32 0.0, %v3652
      %3654 = vmatmul.f32.gmra.mxu0 %v3540
      %v3655 = vpop.f32.mrf.mxu0
      %v3656 = vadd.f32 0.0, %v3655
      %3657 = vmatmul.f32.gmra.mxu0 %v3543
      %v3658 = vpop.f32.mrf.mxu0
      %v3659 = vadd.f32 0.0, %v3658
      %3660 = vmatmul.f32.gmra.mxu0 %v3546
      %v3661 = vpop.f32.mrf.mxu0
      %v3662 = vadd.f32 0.0, %v3661
      %3663 = vmatmul.f32.gmra.mxu0 %v3549
      %v3664 = vpop.f32.mrf.mxu0
      %v3665 = vadd.f32 0.0, %v3664
      %3666 = vmatmul.f32.gmra.mxu0 %v3552
      %v3667 = vpop.f32.mrf.mxu0
      %v3668 = vadd.f32 0.0, %v3667
      %3669 = vmatmul.f32.gmra.mxu0 %v3555
      %v3670 = vpop.f32.mrf.mxu0
      %v3671 = vadd.f32 0.0, %v3670
      %3672 = vmatmul.f32.gmra.mxu0 %v3558
      %v3673 = vpop.f32.mrf.mxu0
      %v3674 = vadd.f32 0.0, %v3673
      %3675 = vmatmul.f32.gmra.mxu0 %v3561
      %v3676 = vpop.f32.mrf.mxu0
      %v3677 = vadd.f32 0.0, %v3676
      %3678 = vmatmul.f32.gmra.mxu0 %v3564
      %v3679 = vpop.f32.mrf.mxu0
      %v3680 = vadd.f32 0.0, %v3679
      %3681 = vmatmul.f32.gmra.mxu0 %v3567
      %v3682 = vpop.f32.mrf.mxu0
      %v3683 = vadd.f32 0.0, %v3682
      %3684 = vmatmul.f32.gmra.mxu0 %v3570
      %v3685 = vpop.f32.mrf.mxu0
      %v3686 = vadd.f32 0.0, %v3685
      %3687 = vmatmul.f32.gmra.mxu0 %v3573
      %v3688 = vpop.f32.mrf.mxu0
      %v3689 = vadd.f32 0.0, %v3688
      %3690 = vmatmul.f32.gmra.mxu0 %v3576
      %v3691 = vpop.f32.mrf.mxu0
      %v3692 = vadd.f32 0.0, %v3691
      %3693 = vmatmul.f32.gmra.mxu0 %v3579
      %v3694 = vpop.f32.mrf.mxu0
      %v3695 = vadd.f32 0.0, %v3694
      %3696 = vmatmul.f32.gmra.mxu0 %v3582
      %v3697 = vpop.f32.mrf.mxu0
      %v3698 = vadd.f32 0.0, %v3697
      %3699 = vmatmul.f32.gmra.mxu0 %v3585
      %v3700 = vpop.f32.mrf.mxu0
      %v3701 = vadd.f32 0.0, %v3700
      %3702 = vdwg.mxu0
      %v3703 = vadd.f32 %v3362, %v3608
      %v3704 = vadd.f32 %v3365, %v3611
      %v3705 = vadd.f32 %v3368, %v3614
      %v3706 = vadd.f32 %v3371, %v3617
      %v3707 = vadd.f32 %v3374, %v3620
      %v3708 = vadd.f32 %v3377, %v3623
      %v3709 = vadd.f32 %v3380, %v3626
      %v3710 = vadd.f32 %v3383, %v3629
      %v3711 = vadd.f32 %v3386, %v3632
      %v3712 = vadd.f32 %v3389, %v3635
      %v3713 = vadd.f32 %v3392, %v3638
      %v3714 = vadd.f32 %v3395, %v3641
      %v3715 = vadd.f32 %v3398, %v3644
      %v3716 = vadd.f32 %v3401, %v3647
      %v3717 = vadd.f32 %v3404, %v3650
      %v3718 = vadd.f32 %v3407, %v3653
      %v3719 = vadd.f32 %v3410, %v3656
      %v3720 = vadd.f32 %v3413, %v3659
      %v3721 = vadd.f32 %v3416, %v3662
      %v3722 = vadd.f32 %v3419, %v3665
      %v3723 = vadd.f32 %v3422, %v3668
      %v3724 = vadd.f32 %v3425, %v3671
      %v3725 = vadd.f32 %v3428, %v3674
      %v3726 = vadd.f32 %v3431, %v3677
      %v3727 = vadd.f32 %v3434, %v3680
      %v3728 = vadd.f32 %v3437, %v3683
      %v3729 = vadd.f32 %v3440, %v3686
      %v3730 = vadd.f32 %v3443, %v3689
      %v3731 = vadd.f32 %v3446, %v3692
      %v3732 = vadd.f32 %v3449, %v3695
      %v3733 = vadd.f32 %v3452, %v3698
      %v3734 = vadd.f32 %v3455, %v3701
      %v3735 = vld [vmem:[%s2933] sm:$0xff]
      %v3736 = vld [vmem:[%s2933 + $0x8] sm:$0xff]
      %v3737 = vld [vmem:[%s2933 + $0x18] sm:$0xff]
      %v3738 = vld [vmem:[%s2933 + $0x20] sm:$0xff]
      %v3739 = vld [vmem:[%s2933 + $0x30] sm:$0xff]
      %v3740 = vld [vmem:[%s2933 + $0x38] sm:$0xff]
      %v3741 = vld [vmem:[%s2933 + $0x48] sm:$0xff]
      %v3742 = vld [vmem:[%s2933 + $0x50] sm:$0xff]
      %v3743 = vld [vmem:[%s2933 + $0x60] sm:$0xff]
      %v3744 = vld [vmem:[%s2933 + $0x68] sm:$0xff]
      %v3745 = vld [vmem:[%s2933 + $0x78] sm:$0xff]
      %v3746 = vld [vmem:[%s2933 + $0x80] sm:$0xff]
      %v3747 = vld [vmem:[%s2933 + $0x90] sm:$0xff]
      %v3748 = vld [vmem:[%s2933 + $0x98] sm:$0xff]
      %v3749 = vld [vmem:[%s2933 + $0xa8] sm:$0xff]
      %v3750 = vld [vmem:[%s2933 + $0xb0] sm:$0xff]
      %v3751 = vld [vmem:[%s2933 + $0xc0] sm:$0xff]
      %v3752 = vld [vmem:[%s2933 + $0xc8] sm:$0xff]
      %v3753 = vld [vmem:[%s2933 + $0xd8] sm:$0xff]
      %v3754 = vld [vmem:[%s2933 + $0xe0] sm:$0xff]
      %v3755 = vld [vmem:[%s2933 + $0xf0] sm:$0xff]
      %v3756 = vld [vmem:[%s2933 + $0xf8] sm:$0xff]
      %v3757 = vld [vmem:[%s2933 + $0x108] sm:$0xff]
      %v3758 = vld [vmem:[%s2933 + $0x110] sm:$0xff]
      %v3759 = vld [vmem:[%s2933 + $0x120] sm:$0xff]
      %v3760 = vld [vmem:[%s2933 + $0x128] sm:$0xff]
      %v3761 = vld [vmem:[%s2933 + $0x138] sm:$0xff]
      %v3762 = vld [vmem:[%s2933 + $0x140] sm:$0xff]
      %v3763 = vld [vmem:[%s2933 + $0x150] sm:$0xff]
      %v3764 = vld [vmem:[%s2933 + $0x158] sm:$0xff]
      %v3765 = vld [vmem:[%s2933 + $0x168] sm:$0xff]
      %v3766 = vld [vmem:[%s2933 + $0x170] sm:$0xff]
      %s3767 = scalar_lea.vmem %s3, 12
      %v3768 = vld [vmem:[%s3767] sm:$0xf]
      %v3770 = vsel %vm272, %v3735, 0
      %v3773 = vsel %vm272, %v3736, 0
      %v3776 = vsel %vm272, %v3737, 0
      %v3779 = vsel %vm272, %v3738, 0
      %v3782 = vsel %vm272, %v3739, 0
      %v3785 = vsel %vm272, %v3740, 0
      %v3788 = vsel %vm272, %v3741, 0
      %v3791 = vsel %vm272, %v3742, 0
      %v3794 = vsel %vm272, %v3743, 0
      %v3797 = vsel %vm272, %v3744, 0
      %v3800 = vsel %vm272, %v3745, 0
      %v3803 = vsel %vm272, %v3746, 0
      %v3806 = vsel %vm272, %v3747, 0
      %v3809 = vsel %vm272, %v3748, 0
      %v3812 = vsel %vm272, %v3749, 0
      %v3815 = vsel %vm272, %v3750, 0
      %v3818 = vsel %vm272, %v3751, 0
      %v3821 = vsel %vm272, %v3752, 0
      %v3824 = vsel %vm272, %v3753, 0
      %v3827 = vsel %vm272, %v3754, 0
      %v3830 = vsel %vm272, %v3755, 0
      %v3833 = vsel %vm272, %v3756, 0
      %v3836 = vsel %vm272, %v3757, 0
      %v3839 = vsel %vm272, %v3758, 0
      %v3842 = vsel %vm272, %v3759, 0
      %v3845 = vsel %vm272, %v3760, 0
      %v3848 = vsel %vm272, %v3761, 0
      %v3851 = vsel %vm272, %v3762, 0
      %v3854 = vsel %vm272, %v3763, 0
      %v3857 = vsel %vm272, %v3764, 0
      %v3860 = vsel %vm272, %v3765, 0
      %v3863 = vsel %vm272, %v3766, 0
      %v3866 = vsel %vm546, %v3768, 0
      %3868 = vmatpush.msra.mxu0 0.0
      %3869 = vmatpush.msra.mxu0 0.0
      %3870 = vmatpush.msra.mxu0 0.0
      %3871 = vmatpush.msra.mxu0 0.0
      %3872 = vmatpush.msra.mxu0 0.0
      %3873 = vmatpush.msra.mxu0 0.0
      %3874 = vmatpush.msra.mxu0 0.0
      %3875 = vmatpush.msra.mxu0 0.0
      %3876 = vmatpush.msra.mxu0 0.0
      %3877 = vmatpush.msra.mxu0 0.0
      %3878 = vmatpush.msra.mxu0 0.0
      %3879 = vmatpush.msra.mxu0 0.0
      %3880 = vmatpush.msra.mxu0 0.0
      %3881 = vmatpush.msra.mxu0 0.0
      %3882 = vmatpush.msra.mxu0 0.0
      %3883 = vmatpush.msra.mxu0 %v3866
      %3884 = vmatmul.f32.gmra.mxu0 %v3770
      %v3885 = vpop.f32.mrf.mxu0
      %v3886 = vadd.f32 0.0, %v3885
      %3887 = vmatmul.f32.gmra.mxu0 %v3773
      %v3888 = vpop.f32.mrf.mxu0
      %v3889 = vadd.f32 0.0, %v3888
      %3890 = vmatmul.f32.gmra.mxu0 %v3776
      %v3891 = vpop.f32.mrf.mxu0
      %v3892 = vadd.f32 0.0, %v3891
      %3893 = vmatmul.f32.gmra.mxu0 %v3779
      %v3894 = vpop.f32.mrf.mxu0
      %v3895 = vadd.f32 0.0, %v3894
      %3896 = vmatmul.f32.gmra.mxu0 %v3782
      %v3897 = vpop.f32.mrf.mxu0
      %v3898 = vadd.f32 0.0, %v3897
      %3899 = vmatmul.f32.gmra.mxu0 %v3785
      %v3900 = vpop.f32.mrf.mxu0
      %v3901 = vadd.f32 0.0, %v3900
      %3902 = vmatmul.f32.gmra.mxu0 %v3788
      %v3903 = vpop.f32.mrf.mxu0
      %v3904 = vadd.f32 0.0, %v3903
      %3905 = vmatmul.f32.gmra.mxu0 %v3791
      %v3906 = vpop.f32.mrf.mxu0
      %v3907 = vadd.f32 0.0, %v3906
      %3908 = vmatmul.f32.gmra.mxu0 %v3794
      %v3909 = vpop.f32.mrf.mxu0
      %v3910 = vadd.f32 0.0, %v3909
      %3911 = vmatmul.f32.gmra.mxu0 %v3797
      %v3912 = vpop.f32.mrf.mxu0
      %v3913 = vadd.f32 0.0, %v3912
      %3914 = vmatmul.f32.gmra.mxu0 %v3800
      %v3915 = vpop.f32.mrf.mxu0
      %v3916 = vadd.f32 0.0, %v3915
      %3917 = vmatmul.f32.gmra.mxu0 %v3803
      %v3918 = vpop.f32.mrf.mxu0
      %v3919 = vadd.f32 0.0, %v3918
      %3920 = vmatmul.f32.gmra.mxu0 %v3806
      %v3921 = vpop.f32.mrf.mxu0
      %v3922 = vadd.f32 0.0, %v3921
      %3923 = vmatmul.f32.gmra.mxu0 %v3809
      %v3924 = vpop.f32.mrf.mxu0
      %v3925 = vadd.f32 0.0, %v3924
      %3926 = vmatmul.f32.gmra.mxu0 %v3812
      %v3927 = vpop.f32.mrf.mxu0
      %v3928 = vadd.f32 0.0, %v3927
      %3929 = vmatmul.f32.gmra.mxu0 %v3815
      %v3930 = vpop.f32.mrf.mxu0
      %v3931 = vadd.f32 0.0, %v3930
      %3932 = vmatmul.f32.gmra.mxu0 %v3818
      %v3933 = vpop.f32.mrf.mxu0
      %v3934 = vadd.f32 0.0, %v3933
      %3935 = vmatmul.f32.gmra.mxu0 %v3821
      %v3936 = vpop.f32.mrf.mxu0
      %v3937 = vadd.f32 0.0, %v3936
      %3938 = vmatmul.f32.gmra.mxu0 %v3824
      %v3939 = vpop.f32.mrf.mxu0
      %v3940 = vadd.f32 0.0, %v3939
      %3941 = vmatmul.f32.gmra.mxu0 %v3827
      %v3942 = vpop.f32.mrf.mxu0
      %v3943 = vadd.f32 0.0, %v3942
      %3944 = vmatmul.f32.gmra.mxu0 %v3830
      %v3945 = vpop.f32.mrf.mxu0
      %v3946 = vadd.f32 0.0, %v3945
      %3947 = vmatmul.f32.gmra.mxu0 %v3833
      %v3948 = vpop.f32.mrf.mxu0
      %v3949 = vadd.f32 0.0, %v3948
      %3950 = vmatmul.f32.gmra.mxu0 %v3836
      %v3951 = vpop.f32.mrf.mxu0
      %v3952 = vadd.f32 0.0, %v3951
      %3953 = vmatmul.f32.gmra.mxu0 %v3839
      %v3954 = vpop.f32.mrf.mxu0
      %v3955 = vadd.f32 0.0, %v3954
      %3956 = vmatmul.f32.gmra.mxu0 %v3842
      %v3957 = vpop.f32.mrf.mxu0
      %v3958 = vadd.f32 0.0, %v3957
      %3959 = vmatmul.f32.gmra.mxu0 %v3845
      %v3960 = vpop.f32.mrf.mxu0
      %v3961 = vadd.f32 0.0, %v3960
      %3962 = vmatmul.f32.gmra.mxu0 %v3848
      %v3963 = vpop.f32.mrf.mxu0
      %v3964 = vadd.f32 0.0, %v3963
      %3965 = vmatmul.f32.gmra.mxu0 %v3851
      %v3966 = vpop.f32.mrf.mxu0
      %v3967 = vadd.f32 0.0, %v3966
      %3968 = vmatmul.f32.gmra.mxu0 %v3854
      %v3969 = vpop.f32.mrf.mxu0
      %v3970 = vadd.f32 0.0, %v3969
      %3971 = vmatmul.f32.gmra.mxu0 %v3857
      %v3972 = vpop.f32.mrf.mxu0
      %v3973 = vadd.f32 0.0, %v3972
      %3974 = vmatmul.f32.gmra.mxu0 %v3860
      %v3975 = vpop.f32.mrf.mxu0
      %v3976 = vadd.f32 0.0, %v3975
      %3977 = vmatmul.f32.gmra.mxu0 %v3863
      %v3978 = vpop.f32.mrf.mxu0
      %v3979 = vadd.f32 0.0, %v3978
      %3980 = vdwg.mxu0
      %v3981 = vadd.f32 %v3703, %v3886
      %v3982 = vadd.f32 %v3704, %v3889
      %v3983 = vadd.f32 %v3705, %v3892
      %v3984 = vadd.f32 %v3706, %v3895
      %v3985 = vadd.f32 %v3707, %v3898
      %v3986 = vadd.f32 %v3708, %v3901
      %v3987 = vadd.f32 %v3709, %v3904
      %v3988 = vadd.f32 %v3710, %v3907
      %v3989 = vadd.f32 %v3711, %v3910
      %v3990 = vadd.f32 %v3712, %v3913
      %v3991 = vadd.f32 %v3713, %v3916
      %v3992 = vadd.f32 %v3714, %v3919
      %v3993 = vadd.f32 %v3715, %v3922
      %v3994 = vadd.f32 %v3716, %v3925
      %v3995 = vadd.f32 %v3717, %v3928
      %v3996 = vadd.f32 %v3718, %v3931
      %v3997 = vadd.f32 %v3719, %v3934
      %v3998 = vadd.f32 %v3720, %v3937
      %v3999 = vadd.f32 %v3721, %v3940
      %v4000 = vadd.f32 %v3722, %v3943
      %v4001 = vadd.f32 %v3723, %v3946
      %v4002 = vadd.f32 %v3724, %v3949
      %v4003 = vadd.f32 %v3725, %v3952
      %v4004 = vadd.f32 %v3726, %v3955
      %v4005 = vadd.f32 %v3727, %v3958
      %v4006 = vadd.f32 %v3728, %v3961
      %v4007 = vadd.f32 %v3729, %v3964
      %v4008 = vadd.f32 %v3730, %v3967
      %v4009 = vadd.f32 %v3731, %v3970
      %v4010 = vadd.f32 %v3732, %v3973
      %v4011 = vadd.f32 %v3733, %v3976
      %v4012 = vadd.f32 %v3734, %v3979
      %v4013 = vld [vmem:[%s2933 + $0x1] sm:$0xff]
      %v4014 = vld [vmem:[%s2933 + $0x9] sm:$0xff]
      %v4015 = vld [vmem:[%s2933 + $0x19] sm:$0xff]
      %v4016 = vld [vmem:[%s2933 + $0x21] sm:$0xff]
      %v4017 = vld [vmem:[%s2933 + $0x31] sm:$0xff]
      %v4018 = vld [vmem:[%s2933 + $0x39] sm:$0xff]
      %v4019 = vld [vmem:[%s2933 + $0x49] sm:$0xff]
      %v4020 = vld [vmem:[%s2933 + $0x51] sm:$0xff]
      %v4021 = vld [vmem:[%s2933 + $0x61] sm:$0xff]
      %v4022 = vld [vmem:[%s2933 + $0x69] sm:$0xff]
      %v4023 = vld [vmem:[%s2933 + $0x79] sm:$0xff]
      %v4024 = vld [vmem:[%s2933 + $0x81] sm:$0xff]
      %v4025 = vld [vmem:[%s2933 + $0x91] sm:$0xff]
      %v4026 = vld [vmem:[%s2933 + $0x99] sm:$0xff]
      %v4027 = vld [vmem:[%s2933 + $0xa9] sm:$0xff]
      %v4028 = vld [vmem:[%s2933 + $0xb1] sm:$0xff]
      %v4029 = vld [vmem:[%s2933 + $0xc1] sm:$0xff]
      %v4030 = vld [vmem:[%s2933 + $0xc9] sm:$0xff]
      %v4031 = vld [vmem:[%s2933 + $0xd9] sm:$0xff]
      %v4032 = vld [vmem:[%s2933 + $0xe1] sm:$0xff]
      %v4033 = vld [vmem:[%s2933 + $0xf1] sm:$0xff]
      %v4034 = vld [vmem:[%s2933 + $0xf9] sm:$0xff]
      %v4035 = vld [vmem:[%s2933 + $0x109] sm:$0xff]
      %v4036 = vld [vmem:[%s2933 + $0x111] sm:$0xff]
      %v4037 = vld [vmem:[%s2933 + $0x121] sm:$0xff]
      %v4038 = vld [vmem:[%s2933 + $0x129] sm:$0xff]
      %v4039 = vld [vmem:[%s2933 + $0x139] sm:$0xff]
      %v4040 = vld [vmem:[%s2933 + $0x141] sm:$0xff]
      %v4041 = vld [vmem:[%s2933 + $0x151] sm:$0xff]
      %v4042 = vld [vmem:[%s2933 + $0x159] sm:$0xff]
      %v4043 = vld [vmem:[%s2933 + $0x169] sm:$0xff]
      %v4044 = vld [vmem:[%s2933 + $0x171] sm:$0xff]
      %s4045 = scalar_lea.vmem %s3, 16
      %v4046 = vld [vmem:[%s4045] sm:$0xf]
      %v4048 = vsel %vm272, %v4013, 0
      %v4051 = vsel %vm272, %v4014, 0
      %v4054 = vsel %vm272, %v4015, 0
      %v4057 = vsel %vm272, %v4016, 0
      %v4060 = vsel %vm272, %v4017, 0
      %v4063 = vsel %vm272, %v4018, 0
      %v4066 = vsel %vm272, %v4019, 0
      %v4069 = vsel %vm272, %v4020, 0
      %v4072 = vsel %vm272, %v4021, 0
      %v4075 = vsel %vm272, %v4022, 0
      %v4078 = vsel %vm272, %v4023, 0
      %v4081 = vsel %vm272, %v4024, 0
      %v4084 = vsel %vm272, %v4025, 0
      %v4087 = vsel %vm272, %v4026, 0
      %v4090 = vsel %vm272, %v4027, 0
      %v4093 = vsel %vm272, %v4028, 0
      %v4096 = vsel %vm272, %v4029, 0
      %v4099 = vsel %vm272, %v4030, 0
      %v4102 = vsel %vm272, %v4031, 0
      %v4105 = vsel %vm272, %v4032, 0
      %v4108 = vsel %vm272, %v4033, 0
      %v4111 = vsel %vm272, %v4034, 0
      %v4114 = vsel %vm272, %v4035, 0
      %v4117 = vsel %vm272, %v4036, 0
      %v4120 = vsel %vm272, %v4037, 0
      %v4123 = vsel %vm272, %v4038, 0
      %v4126 = vsel %vm272, %v4039, 0
      %v4129 = vsel %vm272, %v4040, 0
      %v4132 = vsel %vm272, %v4041, 0
      %v4135 = vsel %vm272, %v4042, 0
      %v4138 = vsel %vm272, %v4043, 0
      %v4141 = vsel %vm272, %v4044, 0
      %v4144 = vsel %vm546, %v4046, 0
      %4146 = vmatpush.msra.mxu0 0.0
      %4147 = vmatpush.msra.mxu0 0.0
      %4148 = vmatpush.msra.mxu0 0.0
      %4149 = vmatpush.msra.mxu0 0.0
      %4150 = vmatpush.msra.mxu0 0.0
      %4151 = vmatpush.msra.mxu0 0.0
      %4152 = vmatpush.msra.mxu0 0.0
      %4153 = vmatpush.msra.mxu0 0.0
      %4154 = vmatpush.msra.mxu0 0.0
      %4155 = vmatpush.msra.mxu0 0.0
      %4156 = vmatpush.msra.mxu0 0.0
      %4157 = vmatpush.msra.mxu0 0.0
      %4158 = vmatpush.msra.mxu0 0.0
      %4159 = vmatpush.msra.mxu0 0.0
      %4160 = vmatpush.msra.mxu0 0.0
      %4161 = vmatpush.msra.mxu0 %v4144
      %4162 = vmatmul.f32.gmra.mxu0 %v4048
      %v4163 = vpop.f32.mrf.mxu0
      %v4164 = vadd.f32 0.0, %v4163
      %4165 = vmatmul.f32.gmra.mxu0 %v4051
      %v4166 = vpop.f32.mrf.mxu0
      %v4167 = vadd.f32 0.0, %v4166
      %4168 = vmatmul.f32.gmra.mxu0 %v4054
      %v4169 = vpop.f32.mrf.mxu0
      %v4170 = vadd.f32 0.0, %v4169
      %4171 = vmatmul.f32.gmra.mxu0 %v4057
      %v4172 = vpop.f32.mrf.mxu0
      %v4173 = vadd.f32 0.0, %v4172
      %4174 = vmatmul.f32.gmra.mxu0 %v4060
      %v4175 = vpop.f32.mrf.mxu0
      %v4176 = vadd.f32 0.0, %v4175
      %4177 = vmatmul.f32.gmra.mxu0 %v4063
      %v4178 = vpop.f32.mrf.mxu0
      %v4179 = vadd.f32 0.0, %v4178
      %4180 = vmatmul.f32.gmra.mxu0 %v4066
      %v4181 = vpop.f32.mrf.mxu0
      %v4182 = vadd.f32 0.0, %v4181
      %4183 = vmatmul.f32.gmra.mxu0 %v4069
      %v4184 = vpop.f32.mrf.mxu0
      %v4185 = vadd.f32 0.0, %v4184
      %4186 = vmatmul.f32.gmra.mxu0 %v4072
      %v4187 = vpop.f32.mrf.mxu0
      %v4188 = vadd.f32 0.0, %v4187
      %4189 = vmatmul.f32.gmra.mxu0 %v4075
      %v4190 = vpop.f32.mrf.mxu0
      %v4191 = vadd.f32 0.0, %v4190
      %4192 = vmatmul.f32.gmra.mxu0 %v4078
      %v4193 = vpop.f32.mrf.mxu0
      %v4194 = vadd.f32 0.0, %v4193
      %4195 = vmatmul.f32.gmra.mxu0 %v4081
      %v4196 = vpop.f32.mrf.mxu0
      %v4197 = vadd.f32 0.0, %v4196
      %4198 = vmatmul.f32.gmra.mxu0 %v4084
      %v4199 = vpop.f32.mrf.mxu0
      %v4200 = vadd.f32 0.0, %v4199
      %4201 = vmatmul.f32.gmra.mxu0 %v4087
      %v4202 = vpop.f32.mrf.mxu0
      %v4203 = vadd.f32 0.0, %v4202
      %4204 = vmatmul.f32.gmra.mxu0 %v4090
      %v4205 = vpop.f32.mrf.mxu0
      %v4206 = vadd.f32 0.0, %v4205
      %4207 = vmatmul.f32.gmra.mxu0 %v4093
      %v4208 = vpop.f32.mrf.mxu0
      %v4209 = vadd.f32 0.0, %v4208
      %4210 = vmatmul.f32.gmra.mxu0 %v4096
      %v4211 = vpop.f32.mrf.mxu0
      %v4212 = vadd.f32 0.0, %v4211
      %4213 = vmatmul.f32.gmra.mxu0 %v4099
      %v4214 = vpop.f32.mrf.mxu0
      %v4215 = vadd.f32 0.0, %v4214
      %4216 = vmatmul.f32.gmra.mxu0 %v4102
      %v4217 = vpop.f32.mrf.mxu0
      %v4218 = vadd.f32 0.0, %v4217
      %4219 = vmatmul.f32.gmra.mxu0 %v4105
      %v4220 = vpop.f32.mrf.mxu0
      %v4221 = vadd.f32 0.0, %v4220
      %4222 = vmatmul.f32.gmra.mxu0 %v4108
      %v4223 = vpop.f32.mrf.mxu0
      %v4224 = vadd.f32 0.0, %v4223
      %4225 = vmatmul.f32.gmra.mxu0 %v4111
      %v4226 = vpop.f32.mrf.mxu0
      %v4227 = vadd.f32 0.0, %v4226
      %4228 = vmatmul.f32.gmra.mxu0 %v4114
      %v4229 = vpop.f32.mrf.mxu0
      %v4230 = vadd.f32 0.0, %v4229
      %4231 = vmatmul.f32.gmra.mxu0 %v4117
      %v4232 = vpop.f32.mrf.mxu0
      %v4233 = vadd.f32 0.0, %v4232
      %4234 = vmatmul.f32.gmra.mxu0 %v4120
      %v4235 = vpop.f32.mrf.mxu0
      %v4236 = vadd.f32 0.0, %v4235
      %4237 = vmatmul.f32.gmra.mxu0 %v4123
      %v4238 = vpop.f32.mrf.mxu0
      %v4239 = vadd.f32 0.0, %v4238
      %4240 = vmatmul.f32.gmra.mxu0 %v4126
      %v4241 = vpop.f32.mrf.mxu0
      %v4242 = vadd.f32 0.0, %v4241
      %4243 = vmatmul.f32.gmra.mxu0 %v4129
      %v4244 = vpop.f32.mrf.mxu0
      %v4245 = vadd.f32 0.0, %v4244
      %4246 = vmatmul.f32.gmra.mxu0 %v4132
      %v4247 = vpop.f32.mrf.mxu0
      %v4248 = vadd.f32 0.0, %v4247
      %4249 = vmatmul.f32.gmra.mxu0 %v4135
      %v4250 = vpop.f32.mrf.mxu0
      %v4251 = vadd.f32 0.0, %v4250
      %4252 = vmatmul.f32.gmra.mxu0 %v4138
      %v4253 = vpop.f32.mrf.mxu0
      %v4254 = vadd.f32 0.0, %v4253
      %4255 = vmatmul.f32.gmra.mxu0 %v4141
      %v4256 = vpop.f32.mrf.mxu0
      %v4257 = vadd.f32 0.0, %v4256
      %4258 = vdwg.mxu0
      %v4259 = vadd.f32 %v3981, %v4164
      %v4260 = vadd.f32 %v3982, %v4167
      %v4261 = vadd.f32 %v3983, %v4170
      %v4262 = vadd.f32 %v3984, %v4173
      %v4263 = vadd.f32 %v3985, %v4176
      %v4264 = vadd.f32 %v3986, %v4179
      %v4265 = vadd.f32 %v3987, %v4182
      %v4266 = vadd.f32 %v3988, %v4185
      %v4267 = vadd.f32 %v3989, %v4188
      %v4268 = vadd.f32 %v3990, %v4191
      %v4269 = vadd.f32 %v3991, %v4194
      %v4270 = vadd.f32 %v3992, %v4197
      %v4271 = vadd.f32 %v3993, %v4200
      %v4272 = vadd.f32 %v3994, %v4203
      %v4273 = vadd.f32 %v3995, %v4206
      %v4274 = vadd.f32 %v3996, %v4209
      %v4275 = vadd.f32 %v3997, %v4212
      %v4276 = vadd.f32 %v3998, %v4215
      %v4277 = vadd.f32 %v3999, %v4218
      %v4278 = vadd.f32 %v4000, %v4221
      %v4279 = vadd.f32 %v4001, %v4224
      %v4280 = vadd.f32 %v4002, %v4227
      %v4281 = vadd.f32 %v4003, %v4230
      %v4282 = vadd.f32 %v4004, %v4233
      %v4283 = vadd.f32 %v4005, %v4236
      %v4284 = vadd.f32 %v4006, %v4239
      %v4285 = vadd.f32 %v4007, %v4242
      %v4286 = vadd.f32 %v4008, %v4245
      %v4287 = vadd.f32 %v4009, %v4248
      %v4288 = vadd.f32 %v4010, %v4251
      %v4289 = vadd.f32 %v4011, %v4254
      %v4290 = vadd.f32 %v4012, %v4257
      %v4291 = vld [vmem:[%s2933 + $0x2] sm:$0xff]
      %v4292 = vld [vmem:[%s2933 + $0xa] sm:$0xff]
      %v4293 = vld [vmem:[%s2933 + $0x1a] sm:$0xff]
      %v4294 = vld [vmem:[%s2933 + $0x22] sm:$0xff]
      %v4295 = vld [vmem:[%s2933 + $0x32] sm:$0xff]
      %v4296 = vld [vmem:[%s2933 + $0x3a] sm:$0xff]
      %v4297 = vld [vmem:[%s2933 + $0x4a] sm:$0xff]
      %v4298 = vld [vmem:[%s2933 + $0x52] sm:$0xff]
      %v4299 = vld [vmem:[%s2933 + $0x62] sm:$0xff]
      %v4300 = vld [vmem:[%s2933 + $0x6a] sm:$0xff]
      %v4301 = vld [vmem:[%s2933 + $0x7a] sm:$0xff]
      %v4302 = vld [vmem:[%s2933 + $0x82] sm:$0xff]
      %v4303 = vld [vmem:[%s2933 + $0x92] sm:$0xff]
      %v4304 = vld [vmem:[%s2933 + $0x9a] sm:$0xff]
      %v4305 = vld [vmem:[%s2933 + $0xaa] sm:$0xff]
      %v4306 = vld [vmem:[%s2933 + $0xb2] sm:$0xff]
      %v4307 = vld [vmem:[%s2933 + $0xc2] sm:$0xff]
      %v4308 = vld [vmem:[%s2933 + $0xca] sm:$0xff]
      %v4309 = vld [vmem:[%s2933 + $0xda] sm:$0xff]
      %v4310 = vld [vmem:[%s2933 + $0xe2] sm:$0xff]
      %v4311 = vld [vmem:[%s2933 + $0xf2] sm:$0xff]
      %v4312 = vld [vmem:[%s2933 + $0xfa] sm:$0xff]
      %v4313 = vld [vmem:[%s2933 + $0x10a] sm:$0xff]
      %v4314 = vld [vmem:[%s2933 + $0x112] sm:$0xff]
      %v4315 = vld [vmem:[%s2933 + $0x122] sm:$0xff]
      %v4316 = vld [vmem:[%s2933 + $0x12a] sm:$0xff]
      %v4317 = vld [vmem:[%s2933 + $0x13a] sm:$0xff]
      %v4318 = vld [vmem:[%s2933 + $0x142] sm:$0xff]
      %v4319 = vld [vmem:[%s2933 + $0x152] sm:$0xff]
      %v4320 = vld [vmem:[%s2933 + $0x15a] sm:$0xff]
      %v4321 = vld [vmem:[%s2933 + $0x16a] sm:$0xff]
      %v4322 = vld [vmem:[%s2933 + $0x172] sm:$0xff]
      %s4323 = scalar_lea.vmem %s3, 20
      %v4324 = vld [vmem:[%s4323] sm:$0xf]
      %v4326 = vsel %vm272, %v4291, 0
      %v4329 = vsel %vm272, %v4292, 0
      %v4332 = vsel %vm272, %v4293, 0
      %v4335 = vsel %vm272, %v4294, 0
      %v4338 = vsel %vm272, %v4295, 0
      %v4341 = vsel %vm272, %v4296, 0
      %v4344 = vsel %vm272, %v4297, 0
      %v4347 = vsel %vm272, %v4298, 0
      %v4350 = vsel %vm272, %v4299, 0
      %v4353 = vsel %vm272, %v4300, 0
      %v4356 = vsel %vm272, %v4301, 0
      %v4359 = vsel %vm272, %v4302, 0
      %v4362 = vsel %vm272, %v4303, 0
      %v4365 = vsel %vm272, %v4304, 0
      %v4368 = vsel %vm272, %v4305, 0
      %v4371 = vsel %vm272, %v4306, 0
      %v4374 = vsel %vm272, %v4307, 0
      %v4377 = vsel %vm272, %v4308, 0
      %v4380 = vsel %vm272, %v4309, 0
      %v4383 = vsel %vm272, %v4310, 0
      %v4386 = vsel %vm272, %v4311, 0
      %v4389 = vsel %vm272, %v4312, 0
      %v4392 = vsel %vm272, %v4313, 0
      %v4395 = vsel %vm272, %v4314, 0
      %v4398 = vsel %vm272, %v4315, 0
      %v4401 = vsel %vm272, %v4316, 0
      %v4404 = vsel %vm272, %v4317, 0
      %v4407 = vsel %vm272, %v4318, 0
      %v4410 = vsel %vm272, %v4319, 0
      %v4413 = vsel %vm272, %v4320, 0
      %v4416 = vsel %vm272, %v4321, 0
      %v4419 = vsel %vm272, %v4322, 0
      %v4422 = vsel %vm546, %v4324, 0
      %4424 = vmatpush.msra.mxu0 0.0
      %4425 = vmatpush.msra.mxu0 0.0
      %4426 = vmatpush.msra.mxu0 0.0
      %4427 = vmatpush.msra.mxu0 0.0
      %4428 = vmatpush.msra.mxu0 0.0
      %4429 = vmatpush.msra.mxu0 0.0
      %4430 = vmatpush.msra.mxu0 0.0
      %4431 = vmatpush.msra.mxu0 0.0
      %4432 = vmatpush.msra.mxu0 0.0
      %4433 = vmatpush.msra.mxu0 0.0
      %4434 = vmatpush.msra.mxu0 0.0
      %4435 = vmatpush.msra.mxu0 0.0
      %4436 = vmatpush.msra.mxu0 0.0
      %4437 = vmatpush.msra.mxu0 0.0
      %4438 = vmatpush.msra.mxu0 0.0
      %4439 = vmatpush.msra.mxu0 %v4422
      %4440 = vmatmul.f32.gmra.mxu0 %v4326
      %v4441 = vpop.f32.mrf.mxu0
      %v4442 = vadd.f32 0.0, %v4441
      %4443 = vmatmul.f32.gmra.mxu0 %v4329
      %v4444 = vpop.f32.mrf.mxu0
      %v4445 = vadd.f32 0.0, %v4444
      %4446 = vmatmul.f32.gmra.mxu0 %v4332
      %v4447 = vpop.f32.mrf.mxu0
      %v4448 = vadd.f32 0.0, %v4447
      %4449 = vmatmul.f32.gmra.mxu0 %v4335
      %v4450 = vpop.f32.mrf.mxu0
      %v4451 = vadd.f32 0.0, %v4450
      %4452 = vmatmul.f32.gmra.mxu0 %v4338
      %v4453 = vpop.f32.mrf.mxu0
      %v4454 = vadd.f32 0.0, %v4453
      %4455 = vmatmul.f32.gmra.mxu0 %v4341
      %v4456 = vpop.f32.mrf.mxu0
      %v4457 = vadd.f32 0.0, %v4456
      %4458 = vmatmul.f32.gmra.mxu0 %v4344
      %v4459 = vpop.f32.mrf.mxu0
      %v4460 = vadd.f32 0.0, %v4459
      %4461 = vmatmul.f32.gmra.mxu0 %v4347
      %v4462 = vpop.f32.mrf.mxu0
      %v4463 = vadd.f32 0.0, %v4462
      %4464 = vmatmul.f32.gmra.mxu0 %v4350
      %v4465 = vpop.f32.mrf.mxu0
      %v4466 = vadd.f32 0.0, %v4465
      %4467 = vmatmul.f32.gmra.mxu0 %v4353
      %v4468 = vpop.f32.mrf.mxu0
      %v4469 = vadd.f32 0.0, %v4468
      %4470 = vmatmul.f32.gmra.mxu0 %v4356
      %v4471 = vpop.f32.mrf.mxu0
      %v4472 = vadd.f32 0.0, %v4471
      %4473 = vmatmul.f32.gmra.mxu0 %v4359
      %v4474 = vpop.f32.mrf.mxu0
      %v4475 = vadd.f32 0.0, %v4474
      %4476 = vmatmul.f32.gmra.mxu0 %v4362
      %v4477 = vpop.f32.mrf.mxu0
      %v4478 = vadd.f32 0.0, %v4477
      %4479 = vmatmul.f32.gmra.mxu0 %v4365
      %v4480 = vpop.f32.mrf.mxu0
      %v4481 = vadd.f32 0.0, %v4480
      %4482 = vmatmul.f32.gmra.mxu0 %v4368
      %v4483 = vpop.f32.mrf.mxu0
      %v4484 = vadd.f32 0.0, %v4483
      %4485 = vmatmul.f32.gmra.mxu0 %v4371
      %v4486 = vpop.f32.mrf.mxu0
      %v4487 = vadd.f32 0.0, %v4486
      %4488 = vmatmul.f32.gmra.mxu0 %v4374
      %v4489 = vpop.f32.mrf.mxu0
      %v4490 = vadd.f32 0.0, %v4489
      %4491 = vmatmul.f32.gmra.mxu0 %v4377
      %v4492 = vpop.f32.mrf.mxu0
      %v4493 = vadd.f32 0.0, %v4492
      %4494 = vmatmul.f32.gmra.mxu0 %v4380
      %v4495 = vpop.f32.mrf.mxu0
      %v4496 = vadd.f32 0.0, %v4495
      %4497 = vmatmul.f32.gmra.mxu0 %v4383
      %v4498 = vpop.f32.mrf.mxu0
      %v4499 = vadd.f32 0.0, %v4498
      %4500 = vmatmul.f32.gmra.mxu0 %v4386
      %v4501 = vpop.f32.mrf.mxu0
      %v4502 = vadd.f32 0.0, %v4501
      %4503 = vmatmul.f32.gmra.mxu0 %v4389
      %v4504 = vpop.f32.mrf.mxu0
      %v4505 = vadd.f32 0.0, %v4504
      %4506 = vmatmul.f32.gmra.mxu0 %v4392
      %v4507 = vpop.f32.mrf.mxu0
      %v4508 = vadd.f32 0.0, %v4507
      %4509 = vmatmul.f32.gmra.mxu0 %v4395
      %v4510 = vpop.f32.mrf.mxu0
      %v4511 = vadd.f32 0.0, %v4510
      %4512 = vmatmul.f32.gmra.mxu0 %v4398
      %v4513 = vpop.f32.mrf.mxu0
      %v4514 = vadd.f32 0.0, %v4513
      %4515 = vmatmul.f32.gmra.mxu0 %v4401
      %v4516 = vpop.f32.mrf.mxu0
      %v4517 = vadd.f32 0.0, %v4516
      %4518 = vmatmul.f32.gmra.mxu0 %v4404
      %v4519 = vpop.f32.mrf.mxu0
      %v4520 = vadd.f32 0.0, %v4519
      %4521 = vmatmul.f32.gmra.mxu0 %v4407
      %v4522 = vpop.f32.mrf.mxu0
      %v4523 = vadd.f32 0.0, %v4522
      %4524 = vmatmul.f32.gmra.mxu0 %v4410
      %v4525 = vpop.f32.mrf.mxu0
      %v4526 = vadd.f32 0.0, %v4525
      %4527 = vmatmul.f32.gmra.mxu0 %v4413
      %v4528 = vpop.f32.mrf.mxu0
      %v4529 = vadd.f32 0.0, %v4528
      %4530 = vmatmul.f32.gmra.mxu0 %v4416
      %v4531 = vpop.f32.mrf.mxu0
      %v4532 = vadd.f32 0.0, %v4531
      %4533 = vmatmul.f32.gmra.mxu0 %v4419
      %v4534 = vpop.f32.mrf.mxu0
      %v4535 = vadd.f32 0.0, %v4534
      %4536 = vdwg.mxu0
      %v4537 = vadd.f32 %v4259, %v4442
      %v4538 = vadd.f32 %v4260, %v4445
      %v4539 = vadd.f32 %v4261, %v4448
      %v4540 = vadd.f32 %v4262, %v4451
      %v4541 = vadd.f32 %v4263, %v4454
      %v4542 = vadd.f32 %v4264, %v4457
      %v4543 = vadd.f32 %v4265, %v4460
      %v4544 = vadd.f32 %v4266, %v4463
      %v4545 = vadd.f32 %v4267, %v4466
      %v4546 = vadd.f32 %v4268, %v4469
      %v4547 = vadd.f32 %v4269, %v4472
      %v4548 = vadd.f32 %v4270, %v4475
      %v4549 = vadd.f32 %v4271, %v4478
      %v4550 = vadd.f32 %v4272, %v4481
      %v4551 = vadd.f32 %v4273, %v4484
      %v4552 = vadd.f32 %v4274, %v4487
      %v4553 = vadd.f32 %v4275, %v4490
      %v4554 = vadd.f32 %v4276, %v4493
      %v4555 = vadd.f32 %v4277, %v4496
      %v4556 = vadd.f32 %v4278, %v4499
      %v4557 = vadd.f32 %v4279, %v4502
      %v4558 = vadd.f32 %v4280, %v4505
      %v4559 = vadd.f32 %v4281, %v4508
      %v4560 = vadd.f32 %v4282, %v4511
      %v4561 = vadd.f32 %v4283, %v4514
      %v4562 = vadd.f32 %v4284, %v4517
      %v4563 = vadd.f32 %v4285, %v4520
      %v4564 = vadd.f32 %v4286, %v4523
      %v4565 = vadd.f32 %v4287, %v4526
      %v4566 = vadd.f32 %v4288, %v4529
      %v4567 = vadd.f32 %v4289, %v4532
      %v4568 = vadd.f32 %v4290, %v4535
      %s4569 = scalar_lea.vmem [#allocation3], 48
      %v4570 = vld [vmem:[%s4569] sm:$0xff]
      %v4571 = vld [vmem:[%s4569 + $0x8] sm:$0xff]
      %v4572 = vld [vmem:[%s4569 + $0x18] sm:$0xff]
      %v4573 = vld [vmem:[%s4569 + $0x20] sm:$0xff]
      %v4574 = vld [vmem:[%s4569 + $0x30] sm:$0xff]
      %v4575 = vld [vmem:[%s4569 + $0x38] sm:$0xff]
      %v4576 = vld [vmem:[%s4569 + $0x48] sm:$0xff]
      %v4577 = vld [vmem:[%s4569 + $0x50] sm:$0xff]
      %v4578 = vld [vmem:[%s4569 + $0x60] sm:$0xff]
      %v4579 = vld [vmem:[%s4569 + $0x68] sm:$0xff]
      %v4580 = vld [vmem:[%s4569 + $0x78] sm:$0xff]
      %v4581 = vld [vmem:[%s4569 + $0x80] sm:$0xff]
      %v4582 = vld [vmem:[%s4569 + $0x90] sm:$0xff]
      %v4583 = vld [vmem:[%s4569 + $0x98] sm:$0xff]
      %v4584 = vld [vmem:[%s4569 + $0xa8] sm:$0xff]
      %v4585 = vld [vmem:[%s4569 + $0xb0] sm:$0xff]
      %v4586 = vld [vmem:[%s4569 + $0xc0] sm:$0xff]
      %v4587 = vld [vmem:[%s4569 + $0xc8] sm:$0xff]
      %v4588 = vld [vmem:[%s4569 + $0xd8] sm:$0xff]
      %v4589 = vld [vmem:[%s4569 + $0xe0] sm:$0xff]
      %v4590 = vld [vmem:[%s4569 + $0xf0] sm:$0xff]
      %v4591 = vld [vmem:[%s4569 + $0xf8] sm:$0xff]
      %v4592 = vld [vmem:[%s4569 + $0x108] sm:$0xff]
      %v4593 = vld [vmem:[%s4569 + $0x110] sm:$0xff]
      %v4594 = vld [vmem:[%s4569 + $0x120] sm:$0xff]
      %v4595 = vld [vmem:[%s4569 + $0x128] sm:$0xff]
      %v4596 = vld [vmem:[%s4569 + $0x138] sm:$0xff]
      %v4597 = vld [vmem:[%s4569 + $0x140] sm:$0xff]
      %v4598 = vld [vmem:[%s4569 + $0x150] sm:$0xff]
      %v4599 = vld [vmem:[%s4569 + $0x158] sm:$0xff]
      %v4600 = vld [vmem:[%s4569 + $0x168] sm:$0xff]
      %v4601 = vld [vmem:[%s4569 + $0x170] sm:$0xff]
      %s4602 = scalar_lea.vmem %s3, 24
      %v4603 = vld [vmem:[%s4602] sm:$0xf]
      %v4605 = vsel %vm272, %v4570, 0
      %v4608 = vsel %vm272, %v4571, 0
      %v4611 = vsel %vm272, %v4572, 0
      %v4614 = vsel %vm272, %v4573, 0
      %v4617 = vsel %vm272, %v4574, 0
      %v4620 = vsel %vm272, %v4575, 0
      %v4623 = vsel %vm272, %v4576, 0
      %v4626 = vsel %vm272, %v4577, 0
      %v4629 = vsel %vm272, %v4578, 0
      %v4632 = vsel %vm272, %v4579, 0
      %v4635 = vsel %vm272, %v4580, 0
      %v4638 = vsel %vm272, %v4581, 0
      %v4641 = vsel %vm272, %v4582, 0
      %v4644 = vsel %vm272, %v4583, 0
      %v4647 = vsel %vm272, %v4584, 0
      %v4650 = vsel %vm272, %v4585, 0
      %v4653 = vsel %vm272, %v4586, 0
      %v4656 = vsel %vm272, %v4587, 0
      %v4659 = vsel %vm272, %v4588, 0
      %v4662 = vsel %vm272, %v4589, 0
      %v4665 = vsel %vm272, %v4590, 0
      %v4668 = vsel %vm272, %v4591, 0
      %v4671 = vsel %vm272, %v4592, 0
      %v4674 = vsel %vm272, %v4593, 0
      %v4677 = vsel %vm272, %v4594, 0
      %v4680 = vsel %vm272, %v4595, 0
      %v4683 = vsel %vm272, %v4596, 0
      %v4686 = vsel %vm272, %v4597, 0
      %v4689 = vsel %vm272, %v4598, 0
      %v4692 = vsel %vm272, %v4599, 0
      %v4695 = vsel %vm272, %v4600, 0
      %v4698 = vsel %vm272, %v4601, 0
      %v4701 = vsel %vm546, %v4603, 0
      %4703 = vmatpush.msra.mxu0 0.0
      %4704 = vmatpush.msra.mxu0 0.0
      %4705 = vmatpush.msra.mxu0 0.0
      %4706 = vmatpush.msra.mxu0 0.0
      %4707 = vmatpush.msra.mxu0 0.0
      %4708 = vmatpush.msra.mxu0 0.0
      %4709 = vmatpush.msra.mxu0 0.0
      %4710 = vmatpush.msra.mxu0 0.0
      %4711 = vmatpush.msra.mxu0 0.0
      %4712 = vmatpush.msra.mxu0 0.0
      %4713 = vmatpush.msra.mxu0 0.0
      %4714 = vmatpush.msra.mxu0 0.0
      %4715 = vmatpush.msra.mxu0 0.0
      %4716 = vmatpush.msra.mxu0 0.0
      %4717 = vmatpush.msra.mxu0 0.0
      %4718 = vmatpush.msra.mxu0 %v4701
      %4719 = vmatmul.f32.gmra.mxu0 %v4605
      %v4720 = vpop.f32.mrf.mxu0
      %v4721 = vadd.f32 0.0, %v4720
      %4722 = vmatmul.f32.gmra.mxu0 %v4608
      %v4723 = vpop.f32.mrf.mxu0
      %v4724 = vadd.f32 0.0, %v4723
      %4725 = vmatmul.f32.gmra.mxu0 %v4611
      %v4726 = vpop.f32.mrf.mxu0
      %v4727 = vadd.f32 0.0, %v4726
      %4728 = vmatmul.f32.gmra.mxu0 %v4614
      %v4729 = vpop.f32.mrf.mxu0
      %v4730 = vadd.f32 0.0, %v4729
      %4731 = vmatmul.f32.gmra.mxu0 %v4617
      %v4732 = vpop.f32.mrf.mxu0
      %v4733 = vadd.f32 0.0, %v4732
      %4734 = vmatmul.f32.gmra.mxu0 %v4620
      %v4735 = vpop.f32.mrf.mxu0
      %v4736 = vadd.f32 0.0, %v4735
      %4737 = vmatmul.f32.gmra.mxu0 %v4623
      %v4738 = vpop.f32.mrf.mxu0
      %v4739 = vadd.f32 0.0, %v4738
      %4740 = vmatmul.f32.gmra.mxu0 %v4626
      %v4741 = vpop.f32.mrf.mxu0
      %v4742 = vadd.f32 0.0, %v4741
      %4743 = vmatmul.f32.gmra.mxu0 %v4629
      %v4744 = vpop.f32.mrf.mxu0
      %v4745 = vadd.f32 0.0, %v4744
      %4746 = vmatmul.f32.gmra.mxu0 %v4632
      %v4747 = vpop.f32.mrf.mxu0
      %v4748 = vadd.f32 0.0, %v4747
      %4749 = vmatmul.f32.gmra.mxu0 %v4635
      %v4750 = vpop.f32.mrf.mxu0
      %v4751 = vadd.f32 0.0, %v4750
      %4752 = vmatmul.f32.gmra.mxu0 %v4638
      %v4753 = vpop.f32.mrf.mxu0
      %v4754 = vadd.f32 0.0, %v4753
      %4755 = vmatmul.f32.gmra.mxu0 %v4641
      %v4756 = vpop.f32.mrf.mxu0
      %v4757 = vadd.f32 0.0, %v4756
      %4758 = vmatmul.f32.gmra.mxu0 %v4644
      %v4759 = vpop.f32.mrf.mxu0
      %v4760 = vadd.f32 0.0, %v4759
      %4761 = vmatmul.f32.gmra.mxu0 %v4647
      %v4762 = vpop.f32.mrf.mxu0
      %v4763 = vadd.f32 0.0, %v4762
      %4764 = vmatmul.f32.gmra.mxu0 %v4650
      %v4765 = vpop.f32.mrf.mxu0
      %v4766 = vadd.f32 0.0, %v4765
      %4767 = vmatmul.f32.gmra.mxu0 %v4653
      %v4768 = vpop.f32.mrf.mxu0
      %v4769 = vadd.f32 0.0, %v4768
      %4770 = vmatmul.f32.gmra.mxu0 %v4656
      %v4771 = vpop.f32.mrf.mxu0
      %v4772 = vadd.f32 0.0, %v4771
      %4773 = vmatmul.f32.gmra.mxu0 %v4659
      %v4774 = vpop.f32.mrf.mxu0
      %v4775 = vadd.f32 0.0, %v4774
      %4776 = vmatmul.f32.gmra.mxu0 %v4662
      %v4777 = vpop.f32.mrf.mxu0
      %v4778 = vadd.f32 0.0, %v4777
      %4779 = vmatmul.f32.gmra.mxu0 %v4665
      %v4780 = vpop.f32.mrf.mxu0
      %v4781 = vadd.f32 0.0, %v4780
      %4782 = vmatmul.f32.gmra.mxu0 %v4668
      %v4783 = vpop.f32.mrf.mxu0
      %v4784 = vadd.f32 0.0, %v4783
      %4785 = vmatmul.f32.gmra.mxu0 %v4671
      %v4786 = vpop.f32.mrf.mxu0
      %v4787 = vadd.f32 0.0, %v4786
      %4788 = vmatmul.f32.gmra.mxu0 %v4674
      %v4789 = vpop.f32.mrf.mxu0
      %v4790 = vadd.f32 0.0, %v4789
      %4791 = vmatmul.f32.gmra.mxu0 %v4677
      %v4792 = vpop.f32.mrf.mxu0
      %v4793 = vadd.f32 0.0, %v4792
      %4794 = vmatmul.f32.gmra.mxu0 %v4680
      %v4795 = vpop.f32.mrf.mxu0
      %v4796 = vadd.f32 0.0, %v4795
      %4797 = vmatmul.f32.gmra.mxu0 %v4683
      %v4798 = vpop.f32.mrf.mxu0
      %v4799 = vadd.f32 0.0, %v4798
      %4800 = vmatmul.f32.gmra.mxu0 %v4686
      %v4801 = vpop.f32.mrf.mxu0
      %v4802 = vadd.f32 0.0, %v4801
      %4803 = vmatmul.f32.gmra.mxu0 %v4689
      %v4804 = vpop.f32.mrf.mxu0
      %v4805 = vadd.f32 0.0, %v4804
      %4806 = vmatmul.f32.gmra.mxu0 %v4692
      %v4807 = vpop.f32.mrf.mxu0
      %v4808 = vadd.f32 0.0, %v4807
      %4809 = vmatmul.f32.gmra.mxu0 %v4695
      %v4810 = vpop.f32.mrf.mxu0
      %v4811 = vadd.f32 0.0, %v4810
      %4812 = vmatmul.f32.gmra.mxu0 %v4698
      %v4813 = vpop.f32.mrf.mxu0
      %v4814 = vadd.f32 0.0, %v4813
      %4815 = vdwg.mxu0
      %v4816 = vadd.f32 %v4537, %v4721
      %v4817 = vadd.f32 %v4538, %v4724
      %v4818 = vadd.f32 %v4539, %v4727
      %v4819 = vadd.f32 %v4540, %v4730
      %v4820 = vadd.f32 %v4541, %v4733
      %v4821 = vadd.f32 %v4542, %v4736
      %v4822 = vadd.f32 %v4543, %v4739
      %v4823 = vadd.f32 %v4544, %v4742
      %v4824 = vadd.f32 %v4545, %v4745
      %v4825 = vadd.f32 %v4546, %v4748
      %v4826 = vadd.f32 %v4547, %v4751
      %v4827 = vadd.f32 %v4548, %v4754
      %v4828 = vadd.f32 %v4549, %v4757
      %v4829 = vadd.f32 %v4550, %v4760
      %v4830 = vadd.f32 %v4551, %v4763
      %v4831 = vadd.f32 %v4552, %v4766
      %v4832 = vadd.f32 %v4553, %v4769
      %v4833 = vadd.f32 %v4554, %v4772
      %v4834 = vadd.f32 %v4555, %v4775
      %v4835 = vadd.f32 %v4556, %v4778
      %v4836 = vadd.f32 %v4557, %v4781
      %v4837 = vadd.f32 %v4558, %v4784
      %v4838 = vadd.f32 %v4559, %v4787
      %v4839 = vadd.f32 %v4560, %v4790
      %v4840 = vadd.f32 %v4561, %v4793
      %v4841 = vadd.f32 %v4562, %v4796
      %v4842 = vadd.f32 %v4563, %v4799
      %v4843 = vadd.f32 %v4564, %v4802
      %v4844 = vadd.f32 %v4565, %v4805
      %v4845 = vadd.f32 %v4566, %v4808
      %v4846 = vadd.f32 %v4567, %v4811
      %v4847 = vadd.f32 %v4568, %v4814
      %v4848 = vld [vmem:[%s4569 + $0x1] sm:$0xff]
      %v4849 = vld [vmem:[%s4569 + $0x9] sm:$0xff]
      %v4850 = vld [vmem:[%s4569 + $0x19] sm:$0xff]
      %v4851 = vld [vmem:[%s4569 + $0x21] sm:$0xff]
      %v4852 = vld [vmem:[%s4569 + $0x31] sm:$0xff]
      %v4853 = vld [vmem:[%s4569 + $0x39] sm:$0xff]
      %v4854 = vld [vmem:[%s4569 + $0x49] sm:$0xff]
      %v4855 = vld [vmem:[%s4569 + $0x51] sm:$0xff]
      %v4856 = vld [vmem:[%s4569 + $0x61] sm:$0xff]
      %v4857 = vld [vmem:[%s4569 + $0x69] sm:$0xff]
      %v4858 = vld [vmem:[%s4569 + $0x79] sm:$0xff]
      %v4859 = vld [vmem:[%s4569 + $0x81] sm:$0xff]
      %v4860 = vld [vmem:[%s4569 + $0x91] sm:$0xff]
      %v4861 = vld [vmem:[%s4569 + $0x99] sm:$0xff]
      %v4862 = vld [vmem:[%s4569 + $0xa9] sm:$0xff]
      %v4863 = vld [vmem:[%s4569 + $0xb1] sm:$0xff]
      %v4864 = vld [vmem:[%s4569 + $0xc1] sm:$0xff]
      %v4865 = vld [vmem:[%s4569 + $0xc9] sm:$0xff]
      %v4866 = vld [vmem:[%s4569 + $0xd9] sm:$0xff]
      %v4867 = vld [vmem:[%s4569 + $0xe1] sm:$0xff]
      %v4868 = vld [vmem:[%s4569 + $0xf1] sm:$0xff]
      %v4869 = vld [vmem:[%s4569 + $0xf9] sm:$0xff]
      %v4870 = vld [vmem:[%s4569 + $0x109] sm:$0xff]
      %v4871 = vld [vmem:[%s4569 + $0x111] sm:$0xff]
      %v4872 = vld [vmem:[%s4569 + $0x121] sm:$0xff]
      %v4873 = vld [vmem:[%s4569 + $0x129] sm:$0xff]
      %v4874 = vld [vmem:[%s4569 + $0x139] sm:$0xff]
      %v4875 = vld [vmem:[%s4569 + $0x141] sm:$0xff]
      %v4876 = vld [vmem:[%s4569 + $0x151] sm:$0xff]
      %v4877 = vld [vmem:[%s4569 + $0x159] sm:$0xff]
      %v4878 = vld [vmem:[%s4569 + $0x169] sm:$0xff]
      %v4879 = vld [vmem:[%s4569 + $0x171] sm:$0xff]
      %s4880 = scalar_lea.vmem %s3, 28
      %v4881 = vld [vmem:[%s4880] sm:$0xf]
      %v4883 = vsel %vm272, %v4848, 0
      %v4886 = vsel %vm272, %v4849, 0
      %v4889 = vsel %vm272, %v4850, 0
      %v4892 = vsel %vm272, %v4851, 0
      %v4895 = vsel %vm272, %v4852, 0
      %v4898 = vsel %vm272, %v4853, 0
      %v4901 = vsel %vm272, %v4854, 0
      %v4904 = vsel %vm272, %v4855, 0
      %v4907 = vsel %vm272, %v4856, 0
      %v4910 = vsel %vm272, %v4857, 0
      %v4913 = vsel %vm272, %v4858, 0
      %v4916 = vsel %vm272, %v4859, 0
      %v4919 = vsel %vm272, %v4860, 0
      %v4922 = vsel %vm272, %v4861, 0
      %v4925 = vsel %vm272, %v4862, 0
      %v4928 = vsel %vm272, %v4863, 0
      %v4931 = vsel %vm272, %v4864, 0
      %v4934 = vsel %vm272, %v4865, 0
      %v4937 = vsel %vm272, %v4866, 0
      %v4940 = vsel %vm272, %v4867, 0
      %v4943 = vsel %vm272, %v4868, 0
      %v4946 = vsel %vm272, %v4869, 0
      %v4949 = vsel %vm272, %v4870, 0
      %v4952 = vsel %vm272, %v4871, 0
      %v4955 = vsel %vm272, %v4872, 0
      %v4958 = vsel %vm272, %v4873, 0
      %v4961 = vsel %vm272, %v4874, 0
      %v4964 = vsel %vm272, %v4875, 0
      %v4967 = vsel %vm272, %v4876, 0
      %v4970 = vsel %vm272, %v4877, 0
      %v4973 = vsel %vm272, %v4878, 0
      %v4976 = vsel %vm272, %v4879, 0
      %v4979 = vsel %vm546, %v4881, 0
      %4981 = vmatpush.msra.mxu0 0.0
      %4982 = vmatpush.msra.mxu0 0.0
      %4983 = vmatpush.msra.mxu0 0.0
      %4984 = vmatpush.msra.mxu0 0.0
      %4985 = vmatpush.msra.mxu0 0.0
      %4986 = vmatpush.msra.mxu0 0.0
      %4987 = vmatpush.msra.mxu0 0.0
      %4988 = vmatpush.msra.mxu0 0.0
      %4989 = vmatpush.msra.mxu0 0.0
      %4990 = vmatpush.msra.mxu0 0.0
      %4991 = vmatpush.msra.mxu0 0.0
      %4992 = vmatpush.msra.mxu0 0.0
      %4993 = vmatpush.msra.mxu0 0.0
      %4994 = vmatpush.msra.mxu0 0.0
      %4995 = vmatpush.msra.mxu0 0.0
      %4996 = vmatpush.msra.mxu0 %v4979
      %4997 = vmatmul.f32.gmra.mxu0 %v4883
      %v4998 = vpop.f32.mrf.mxu0
      %v4999 = vadd.f32 0.0, %v4998
      %5000 = vmatmul.f32.gmra.mxu0 %v4886
      %v5001 = vpop.f32.mrf.mxu0
      %v5002 = vadd.f32 0.0, %v5001
      %5003 = vmatmul.f32.gmra.mxu0 %v4889
      %v5004 = vpop.f32.mrf.mxu0
      %v5005 = vadd.f32 0.0, %v5004
      %5006 = vmatmul.f32.gmra.mxu0 %v4892
      %v5007 = vpop.f32.mrf.mxu0
      %v5008 = vadd.f32 0.0, %v5007
      %5009 = vmatmul.f32.gmra.mxu0 %v4895
      %v5010 = vpop.f32.mrf.mxu0
      %v5011 = vadd.f32 0.0, %v5010
      %5012 = vmatmul.f32.gmra.mxu0 %v4898
      %v5013 = vpop.f32.mrf.mxu0
      %v5014 = vadd.f32 0.0, %v5013
      %5015 = vmatmul.f32.gmra.mxu0 %v4901
      %v5016 = vpop.f32.mrf.mxu0
      %v5017 = vadd.f32 0.0, %v5016
      %5018 = vmatmul.f32.gmra.mxu0 %v4904
      %v5019 = vpop.f32.mrf.mxu0
      %v5020 = vadd.f32 0.0, %v5019
      %5021 = vmatmul.f32.gmra.mxu0 %v4907
      %v5022 = vpop.f32.mrf.mxu0
      %v5023 = vadd.f32 0.0, %v5022
      %5024 = vmatmul.f32.gmra.mxu0 %v4910
      %v5025 = vpop.f32.mrf.mxu0
      %v5026 = vadd.f32 0.0, %v5025
      %5027 = vmatmul.f32.gmra.mxu0 %v4913
      %v5028 = vpop.f32.mrf.mxu0
      %v5029 = vadd.f32 0.0, %v5028
      %5030 = vmatmul.f32.gmra.mxu0 %v4916
      %v5031 = vpop.f32.mrf.mxu0
      %v5032 = vadd.f32 0.0, %v5031
      %5033 = vmatmul.f32.gmra.mxu0 %v4919
      %v5034 = vpop.f32.mrf.mxu0
      %v5035 = vadd.f32 0.0, %v5034
      %5036 = vmatmul.f32.gmra.mxu0 %v4922
      %v5037 = vpop.f32.mrf.mxu0
      %v5038 = vadd.f32 0.0, %v5037
      %5039 = vmatmul.f32.gmra.mxu0 %v4925
      %v5040 = vpop.f32.mrf.mxu0
      %v5041 = vadd.f32 0.0, %v5040
      %5042 = vmatmul.f32.gmra.mxu0 %v4928
      %v5043 = vpop.f32.mrf.mxu0
      %v5044 = vadd.f32 0.0, %v5043
      %5045 = vmatmul.f32.gmra.mxu0 %v4931
      %v5046 = vpop.f32.mrf.mxu0
      %v5047 = vadd.f32 0.0, %v5046
      %5048 = vmatmul.f32.gmra.mxu0 %v4934
      %v5049 = vpop.f32.mrf.mxu0
      %v5050 = vadd.f32 0.0, %v5049
      %5051 = vmatmul.f32.gmra.mxu0 %v4937
      %v5052 = vpop.f32.mrf.mxu0
      %v5053 = vadd.f32 0.0, %v5052
      %5054 = vmatmul.f32.gmra.mxu0 %v4940
      %v5055 = vpop.f32.mrf.mxu0
      %v5056 = vadd.f32 0.0, %v5055
      %5057 = vmatmul.f32.gmra.mxu0 %v4943
      %v5058 = vpop.f32.mrf.mxu0
      %v5059 = vadd.f32 0.0, %v5058
      %5060 = vmatmul.f32.gmra.mxu0 %v4946
      %v5061 = vpop.f32.mrf.mxu0
      %v5062 = vadd.f32 0.0, %v5061
      %5063 = vmatmul.f32.gmra.mxu0 %v4949
      %v5064 = vpop.f32.mrf.mxu0
      %v5065 = vadd.f32 0.0, %v5064
      %5066 = vmatmul.f32.gmra.mxu0 %v4952
      %v5067 = vpop.f32.mrf.mxu0
      %v5068 = vadd.f32 0.0, %v5067
      %5069 = vmatmul.f32.gmra.mxu0 %v4955
      %v5070 = vpop.f32.mrf.mxu0
      %v5071 = vadd.f32 0.0, %v5070
      %5072 = vmatmul.f32.gmra.mxu0 %v4958
      %v5073 = vpop.f32.mrf.mxu0
      %v5074 = vadd.f32 0.0, %v5073
      %5075 = vmatmul.f32.gmra.mxu0 %v4961
      %v5076 = vpop.f32.mrf.mxu0
      %v5077 = vadd.f32 0.0, %v5076
      %5078 = vmatmul.f32.gmra.mxu0 %v4964
      %v5079 = vpop.f32.mrf.mxu0
      %v5080 = vadd.f32 0.0, %v5079
      %5081 = vmatmul.f32.gmra.mxu0 %v4967
      %v5082 = vpop.f32.mrf.mxu0
      %v5083 = vadd.f32 0.0, %v5082
      %5084 = vmatmul.f32.gmra.mxu0 %v4970
      %v5085 = vpop.f32.mrf.mxu0
      %v5086 = vadd.f32 0.0, %v5085
      %5087 = vmatmul.f32.gmra.mxu0 %v4973
      %v5088 = vpop.f32.mrf.mxu0
      %v5089 = vadd.f32 0.0, %v5088
      %5090 = vmatmul.f32.gmra.mxu0 %v4976
      %v5091 = vpop.f32.mrf.mxu0
      %v5092 = vadd.f32 0.0, %v5091
      %5093 = vdwg.mxu0
      %v5094 = vadd.f32 %v4816, %v4999
      %v5095 = vadd.f32 %v4817, %v5002
      %v5096 = vadd.f32 %v4818, %v5005
      %v5097 = vadd.f32 %v4819, %v5008
      %v5098 = vadd.f32 %v4820, %v5011
      %v5099 = vadd.f32 %v4821, %v5014
      %v5100 = vadd.f32 %v4822, %v5017
      %v5101 = vadd.f32 %v4823, %v5020
      %v5102 = vadd.f32 %v4824, %v5023
      %v5103 = vadd.f32 %v4825, %v5026
      %v5104 = vadd.f32 %v4826, %v5029
      %v5105 = vadd.f32 %v4827, %v5032
      %v5106 = vadd.f32 %v4828, %v5035
      %v5107 = vadd.f32 %v4829, %v5038
      %v5108 = vadd.f32 %v4830, %v5041
      %v5109 = vadd.f32 %v4831, %v5044
      %v5110 = vadd.f32 %v4832, %v5047
      %v5111 = vadd.f32 %v4833, %v5050
      %v5112 = vadd.f32 %v4834, %v5053
      %v5113 = vadd.f32 %v4835, %v5056
      %v5114 = vadd.f32 %v4836, %v5059
      %v5115 = vadd.f32 %v4837, %v5062
      %v5116 = vadd.f32 %v4838, %v5065
      %v5117 = vadd.f32 %v4839, %v5068
      %v5118 = vadd.f32 %v4840, %v5071
      %v5119 = vadd.f32 %v4841, %v5074
      %v5120 = vadd.f32 %v4842, %v5077
      %v5121 = vadd.f32 %v4843, %v5080
      %v5122 = vadd.f32 %v4844, %v5083
      %v5123 = vadd.f32 %v4845, %v5086
      %v5124 = vadd.f32 %v4846, %v5089
      %v5125 = vadd.f32 %v4847, %v5092
      %v5126 = vld [vmem:[%s4569 + $0x2] sm:$0xff]
      %v5127 = vld [vmem:[%s4569 + $0xa] sm:$0xff]
      %v5128 = vld [vmem:[%s4569 + $0x1a] sm:$0xff]
      %v5129 = vld [vmem:[%s4569 + $0x22] sm:$0xff]
      %v5130 = vld [vmem:[%s4569 + $0x32] sm:$0xff]
      %v5131 = vld [vmem:[%s4569 + $0x3a] sm:$0xff]
      %v5132 = vld [vmem:[%s4569 + $0x4a] sm:$0xff]
      %v5133 = vld [vmem:[%s4569 + $0x52] sm:$0xff]
      %v5134 = vld [vmem:[%s4569 + $0x62] sm:$0xff]
      %v5135 = vld [vmem:[%s4569 + $0x6a] sm:$0xff]
      %v5136 = vld [vmem:[%s4569 + $0x7a] sm:$0xff]
      %v5137 = vld [vmem:[%s4569 + $0x82] sm:$0xff]
      %v5138 = vld [vmem:[%s4569 + $0x92] sm:$0xff]
      %v5139 = vld [vmem:[%s4569 + $0x9a] sm:$0xff]
      %v5140 = vld [vmem:[%s4569 + $0xaa] sm:$0xff]
      %v5141 = vld [vmem:[%s4569 + $0xb2] sm:$0xff]
      %v5142 = vld [vmem:[%s4569 + $0xc2] sm:$0xff]
      %v5143 = vld [vmem:[%s4569 + $0xca] sm:$0xff]
      %v5144 = vld [vmem:[%s4569 + $0xda] sm:$0xff]
      %v5145 = vld [vmem:[%s4569 + $0xe2] sm:$0xff]
      %v5146 = vld [vmem:[%s4569 + $0xf2] sm:$0xff]
      %v5147 = vld [vmem:[%s4569 + $0xfa] sm:$0xff]
      %v5148 = vld [vmem:[%s4569 + $0x10a] sm:$0xff]
      %v5149 = vld [vmem:[%s4569 + $0x112] sm:$0xff]
      %v5150 = vld [vmem:[%s4569 + $0x122] sm:$0xff]
      %v5151 = vld [vmem:[%s4569 + $0x12a] sm:$0xff]
      %v5152 = vld [vmem:[%s4569 + $0x13a] sm:$0xff]
      %v5153 = vld [vmem:[%s4569 + $0x142] sm:$0xff]
      %v5154 = vld [vmem:[%s4569 + $0x152] sm:$0xff]
      %v5155 = vld [vmem:[%s4569 + $0x15a] sm:$0xff]
      %v5156 = vld [vmem:[%s4569 + $0x16a] sm:$0xff]
      %v5157 = vld [vmem:[%s4569 + $0x172] sm:$0xff]
      %s5158 = scalar_lea.vmem %s3, 32
      %v5159 = vld [vmem:[%s5158] sm:$0xf]
      %v5161 = vsel %vm272, %v5126, 0
      %v5164 = vsel %vm272, %v5127, 0
      %v5167 = vsel %vm272, %v5128, 0
      %v5170 = vsel %vm272, %v5129, 0
      %v5173 = vsel %vm272, %v5130, 0
      %v5176 = vsel %vm272, %v5131, 0
      %v5179 = vsel %vm272, %v5132, 0
      %v5182 = vsel %vm272, %v5133, 0
      %v5185 = vsel %vm272, %v5134, 0
      %v5188 = vsel %vm272, %v5135, 0
      %v5191 = vsel %vm272, %v5136, 0
      %v5194 = vsel %vm272, %v5137, 0
      %v5197 = vsel %vm272, %v5138, 0
      %v5200 = vsel %vm272, %v5139, 0
      %v5203 = vsel %vm272, %v5140, 0
      %v5206 = vsel %vm272, %v5141, 0
      %v5209 = vsel %vm272, %v5142, 0
      %v5212 = vsel %vm272, %v5143, 0
      %v5215 = vsel %vm272, %v5144, 0
      %v5218 = vsel %vm272, %v5145, 0
      %v5221 = vsel %vm272, %v5146, 0
      %v5224 = vsel %vm272, %v5147, 0
      %v5227 = vsel %vm272, %v5148, 0
      %v5230 = vsel %vm272, %v5149, 0
      %v5233 = vsel %vm272, %v5150, 0
      %v5236 = vsel %vm272, %v5151, 0
      %v5239 = vsel %vm272, %v5152, 0
      %v5242 = vsel %vm272, %v5153, 0
      %v5245 = vsel %vm272, %v5154, 0
      %v5248 = vsel %vm272, %v5155, 0
      %v5251 = vsel %vm272, %v5156, 0
      %v5254 = vsel %vm272, %v5157, 0
      %v5257 = vsel %vm546, %v5159, 0
      %5259 = vmatpush.msra.mxu0 0.0
      %5260 = vmatpush.msra.mxu0 0.0
      %5261 = vmatpush.msra.mxu0 0.0
      %5262 = vmatpush.msra.mxu0 0.0
      %5263 = vmatpush.msra.mxu0 0.0
      %5264 = vmatpush.msra.mxu0 0.0
      %5265 = vmatpush.msra.mxu0 0.0
      %5266 = vmatpush.msra.mxu0 0.0
      %5267 = vmatpush.msra.mxu0 0.0
      %5268 = vmatpush.msra.mxu0 0.0
      %5269 = vmatpush.msra.mxu0 0.0
      %5270 = vmatpush.msra.mxu0 0.0
      %5271 = vmatpush.msra.mxu0 0.0
      %5272 = vmatpush.msra.mxu0 0.0
      %5273 = vmatpush.msra.mxu0 0.0
      %5274 = vmatpush.msra.mxu0 %v5257
      %5275 = vmatmul.f32.gmra.mxu0 %v5161
      %v5276 = vpop.f32.mrf.mxu0
      %v5277 = vadd.f32 0.0, %v5276
      %5278 = vmatmul.f32.gmra.mxu0 %v5164
      %v5279 = vpop.f32.mrf.mxu0
      %v5280 = vadd.f32 0.0, %v5279
      %5281 = vmatmul.f32.gmra.mxu0 %v5167
      %v5282 = vpop.f32.mrf.mxu0
      %v5283 = vadd.f32 0.0, %v5282
      %5284 = vmatmul.f32.gmra.mxu0 %v5170
      %v5285 = vpop.f32.mrf.mxu0
      %v5286 = vadd.f32 0.0, %v5285
      %5287 = vmatmul.f32.gmra.mxu0 %v5173
      %v5288 = vpop.f32.mrf.mxu0
      %v5289 = vadd.f32 0.0, %v5288
      %5290 = vmatmul.f32.gmra.mxu0 %v5176
      %v5291 = vpop.f32.mrf.mxu0
      %v5292 = vadd.f32 0.0, %v5291
      %5293 = vmatmul.f32.gmra.mxu0 %v5179
      %v5294 = vpop.f32.mrf.mxu0
      %v5295 = vadd.f32 0.0, %v5294
      %5296 = vmatmul.f32.gmra.mxu0 %v5182
      %v5297 = vpop.f32.mrf.mxu0
      %v5298 = vadd.f32 0.0, %v5297
      %5299 = vmatmul.f32.gmra.mxu0 %v5185
      %v5300 = vpop.f32.mrf.mxu0
      %v5301 = vadd.f32 0.0, %v5300
      %5302 = vmatmul.f32.gmra.mxu0 %v5188
      %v5303 = vpop.f32.mrf.mxu0
      %v5304 = vadd.f32 0.0, %v5303
      %5305 = vmatmul.f32.gmra.mxu0 %v5191
      %v5306 = vpop.f32.mrf.mxu0
      %v5307 = vadd.f32 0.0, %v5306
      %5308 = vmatmul.f32.gmra.mxu0 %v5194
      %v5309 = vpop.f32.mrf.mxu0
      %v5310 = vadd.f32 0.0, %v5309
      %5311 = vmatmul.f32.gmra.mxu0 %v5197
      %v5312 = vpop.f32.mrf.mxu0
      %v5313 = vadd.f32 0.0, %v5312
      %5314 = vmatmul.f32.gmra.mxu0 %v5200
      %v5315 = vpop.f32.mrf.mxu0
      %v5316 = vadd.f32 0.0, %v5315
      %5317 = vmatmul.f32.gmra.mxu0 %v5203
      %v5318 = vpop.f32.mrf.mxu0
      %v5319 = vadd.f32 0.0, %v5318
      %5320 = vmatmul.f32.gmra.mxu0 %v5206
      %v5321 = vpop.f32.mrf.mxu0
      %v5322 = vadd.f32 0.0, %v5321
      %5323 = vmatmul.f32.gmra.mxu0 %v5209
      %v5324 = vpop.f32.mrf.mxu0
      %v5325 = vadd.f32 0.0, %v5324
      %5326 = vmatmul.f32.gmra.mxu0 %v5212
      %v5327 = vpop.f32.mrf.mxu0
      %v5328 = vadd.f32 0.0, %v5327
      %5329 = vmatmul.f32.gmra.mxu0 %v5215
      %v5330 = vpop.f32.mrf.mxu0
      %v5331 = vadd.f32 0.0, %v5330
      %5332 = vmatmul.f32.gmra.mxu0 %v5218
      %v5333 = vpop.f32.mrf.mxu0
      %v5334 = vadd.f32 0.0, %v5333
      %5335 = vmatmul.f32.gmra.mxu0 %v5221
      %v5336 = vpop.f32.mrf.mxu0
      %v5337 = vadd.f32 0.0, %v5336
      %5338 = vmatmul.f32.gmra.mxu0 %v5224
      %v5339 = vpop.f32.mrf.mxu0
      %v5340 = vadd.f32 0.0, %v5339
      %5341 = vmatmul.f32.gmra.mxu0 %v5227
      %v5342 = vpop.f32.mrf.mxu0
      %v5343 = vadd.f32 0.0, %v5342
      %5344 = vmatmul.f32.gmra.mxu0 %v5230
      %v5345 = vpop.f32.mrf.mxu0
      %v5346 = vadd.f32 0.0, %v5345
      %5347 = vmatmul.f32.gmra.mxu0 %v5233
      %v5348 = vpop.f32.mrf.mxu0
      %v5349 = vadd.f32 0.0, %v5348
      %5350 = vmatmul.f32.gmra.mxu0 %v5236
      %v5351 = vpop.f32.mrf.mxu0
      %v5352 = vadd.f32 0.0, %v5351
      %5353 = vmatmul.f32.gmra.mxu0 %v5239
      %v5354 = vpop.f32.mrf.mxu0
      %v5355 = vadd.f32 0.0, %v5354
      %5356 = vmatmul.f32.gmra.mxu0 %v5242
      %v5357 = vpop.f32.mrf.mxu0
      %v5358 = vadd.f32 0.0, %v5357
      %5359 = vmatmul.f32.gmra.mxu0 %v5245
      %v5360 = vpop.f32.mrf.mxu0
      %v5361 = vadd.f32 0.0, %v5360
      %5362 = vmatmul.f32.gmra.mxu0 %v5248
      %v5363 = vpop.f32.mrf.mxu0
      %v5364 = vadd.f32 0.0, %v5363
      %5365 = vmatmul.f32.gmra.mxu0 %v5251
      %v5366 = vpop.f32.mrf.mxu0
      %v5367 = vadd.f32 0.0, %v5366
      %5368 = vmatmul.f32.gmra.mxu0 %v5254
      %v5369 = vpop.f32.mrf.mxu0
      %v5370 = vadd.f32 0.0, %v5369
      %5371 = vdwg.mxu0
      %v5372 = vadd.f32 %v5094, %v5277
      %v5373 = vadd.f32 %v5095, %v5280
      %v5374 = vadd.f32 %v5096, %v5283
      %v5375 = vadd.f32 %v5097, %v5286
      %v5376 = vadd.f32 %v5098, %v5289
      %v5377 = vadd.f32 %v5099, %v5292
      %v5378 = vadd.f32 %v5100, %v5295
      %v5379 = vadd.f32 %v5101, %v5298
      %v5380 = vadd.f32 %v5102, %v5301
      %v5381 = vadd.f32 %v5103, %v5304
      %v5382 = vadd.f32 %v5104, %v5307
      %v5383 = vadd.f32 %v5105, %v5310
      %v5384 = vadd.f32 %v5106, %v5313
      %v5385 = vadd.f32 %v5107, %v5316
      %v5386 = vadd.f32 %v5108, %v5319
      %v5387 = vadd.f32 %v5109, %v5322
      %v5388 = vadd.f32 %v5110, %v5325
      %v5389 = vadd.f32 %v5111, %v5328
      %v5390 = vadd.f32 %v5112, %v5331
      %v5391 = vadd.f32 %v5113, %v5334
      %v5392 = vadd.f32 %v5114, %v5337
      %v5393 = vadd.f32 %v5115, %v5340
      %v5394 = vadd.f32 %v5116, %v5343
      %v5395 = vadd.f32 %v5117, %v5346
      %v5396 = vadd.f32 %v5118, %v5349
      %v5397 = vadd.f32 %v5119, %v5352
      %v5398 = vadd.f32 %v5120, %v5355
      %v5399 = vadd.f32 %v5121, %v5358
      %v5400 = vadd.f32 %v5122, %v5361
      %v5401 = vadd.f32 %v5123, %v5364
      %v5402 = vadd.f32 %v5124, %v5367
      %v5403 = vadd.f32 %v5125, %v5370
      %v5404 = vld [vmem:[%s4] sm:$0x1]
      %v5406 = vperm.slane %v5404, 0
      %v5408 = vadd.f32 %v5372, %v5406
      %v5409 = vadd.f32 %v5373, %v5406
      %v5410 = vadd.f32 %v5374, %v5406
      %v5411 = vadd.f32 %v5375, %v5406
      %v5412 = vadd.f32 %v5376, %v5406
      %v5413 = vadd.f32 %v5377, %v5406
      %v5414 = vadd.f32 %v5378, %v5406
      %v5415 = vadd.f32 %v5379, %v5406
      %v5416 = vadd.f32 %v5380, %v5406
      %v5417 = vadd.f32 %v5381, %v5406
      %v5418 = vadd.f32 %v5382, %v5406
      %v5419 = vadd.f32 %v5383, %v5406
      %v5420 = vadd.f32 %v5384, %v5406
      %v5421 = vadd.f32 %v5385, %v5406
      %v5422 = vadd.f32 %v5386, %v5406
      %v5423 = vadd.f32 %v5387, %v5406
      %v5424 = vadd.f32 %v5388, %v5406
      %v5425 = vadd.f32 %v5389, %v5406
      %v5426 = vadd.f32 %v5390, %v5406
      %v5427 = vadd.f32 %v5391, %v5406
      %v5428 = vadd.f32 %v5392, %v5406
      %v5429 = vadd.f32 %v5393, %v5406
      %v5430 = vadd.f32 %v5394, %v5406
      %v5431 = vadd.f32 %v5395, %v5406
      %v5432 = vadd.f32 %v5396, %v5406
      %v5433 = vadd.f32 %v5397, %v5406
      %v5434 = vadd.f32 %v5398, %v5406
      %v5435 = vadd.f32 %v5399, %v5406
      %v5436 = vadd.f32 %v5400, %v5406
      %v5437 = vadd.f32 %v5401, %v5406
      %v5438 = vadd.f32 %v5402, %v5406
      %v5439 = vadd.f32 %v5403, %v5406
      %v5440 = vld [vmem:[%s266] sm:$0xff]
      %v5441 = vld [vmem:[%s266 + $0x8] sm:$0xff]
      %v5442 = vld [vmem:[%s266 + $0x10] sm:$0xff]
      %v5443 = vld [vmem:[%s266 + $0x18] sm:$0xff]
      %v5444 = vld [vmem:[%s266 + $0x20] sm:$0xff]
      %v5445 = vld [vmem:[%s266 + $0x28] sm:$0xff]
      %v5446 = vld [vmem:[%s266 + $0x30] sm:$0xff]
      %v5447 = vld [vmem:[%s266 + $0x38] sm:$0xff]
      %v5448 = vld [vmem:[%s266 + $0x40] sm:$0xff]
      %v5449 = vld [vmem:[%s266 + $0x48] sm:$0xff]
      %v5450 = vld [vmem:[%s266 + $0x50] sm:$0xff]
      %v5451 = vld [vmem:[%s266 + $0x58] sm:$0xff]
      %v5452 = vld [vmem:[%s266 + $0x60] sm:$0xff]
      %v5453 = vld [vmem:[%s266 + $0x68] sm:$0xff]
      %v5454 = vld [vmem:[%s266 + $0x70] sm:$0xff]
      %v5455 = vld [vmem:[%s266 + $0x78] sm:$0xff]
      %v5456 = vld [vmem:[%s266 + $0x80] sm:$0xff]
      %v5457 = vld [vmem:[%s266 + $0x88] sm:$0xff]
      %v5458 = vld [vmem:[%s266 + $0x90] sm:$0xff]
      %v5459 = vld [vmem:[%s266 + $0x98] sm:$0xff]
      %v5460 = vld [vmem:[%s266 + $0xa0] sm:$0xff]
      %v5461 = vld [vmem:[%s266 + $0xa8] sm:$0xff]
      %v5462 = vld [vmem:[%s266 + $0xb0] sm:$0xff]
      %v5463 = vld [vmem:[%s266 + $0xb8] sm:$0xff]
      %v5464 = vld [vmem:[%s266 + $0xc0] sm:$0xff]
      %v5465 = vld [vmem:[%s266 + $0xc8] sm:$0xff]
      %v5466 = vld [vmem:[%s266 + $0xd0] sm:$0xff]
      %v5467 = vld [vmem:[%s266 + $0xd8] sm:$0xff]
      %v5468 = vld [vmem:[%s266 + $0xe0] sm:$0xff]
      %v5469 = vld [vmem:[%s266 + $0xe8] sm:$0xff]
      %v5470 = vld [vmem:[%s266 + $0xf0] sm:$0xff]
      %v5471 = vld [vmem:[%s266 + $0xf8] sm:$0xff]
      %v5472 = vadd.f32 %v5408, %v5440
      %v5473 = vadd.f32 %v5409, %v5441
      %v5474 = vadd.f32 %v5410, %v5442
      %v5475 = vadd.f32 %v5411, %v5443
      %v5476 = vadd.f32 %v5412, %v5444
      %v5477 = vadd.f32 %v5413, %v5445
      %v5478 = vadd.f32 %v5414, %v5446
      %v5479 = vadd.f32 %v5415, %v5447
      %v5480 = vadd.f32 %v5416, %v5448
      %v5481 = vadd.f32 %v5417, %v5449
      %v5482 = vadd.f32 %v5418, %v5450
      %v5483 = vadd.f32 %v5419, %v5451
      %v5484 = vadd.f32 %v5420, %v5452
      %v5485 = vadd.f32 %v5421, %v5453
      %v5486 = vadd.f32 %v5422, %v5454
      %v5487 = vadd.f32 %v5423, %v5455
      %v5488 = vadd.f32 %v5424, %v5456
      %v5489 = vadd.f32 %v5425, %v5457
      %v5490 = vadd.f32 %v5426, %v5458
      %v5491 = vadd.f32 %v5427, %v5459
      %v5492 = vadd.f32 %v5428, %v5460
      %v5493 = vadd.f32 %v5429, %v5461
      %v5494 = vadd.f32 %v5430, %v5462
      %v5495 = vadd.f32 %v5431, %v5463
      %v5496 = vadd.f32 %v5432, %v5464
      %v5497 = vadd.f32 %v5433, %v5465
      %v5498 = vadd.f32 %v5434, %v5466
      %v5499 = vadd.f32 %v5435, %v5467
      %v5500 = vadd.f32 %v5436, %v5468
      %v5501 = vadd.f32 %v5437, %v5469
      %v5502 = vadd.f32 %v5438, %v5470
      %v5503 = vadd.f32 %v5439, %v5471
      %v5504 = vmax.f32 %v5472, 0.0
      %v5505 = vmax.f32 %v5473, 0.0
      %v5506 = vmax.f32 %v5474, 0.0
      %v5507 = vmax.f32 %v5475, 0.0
      %v5508 = vmax.f32 %v5476, 0.0
      %v5509 = vmax.f32 %v5477, 0.0
      %v5510 = vmax.f32 %v5478, 0.0
      %v5511 = vmax.f32 %v5479, 0.0
      %v5512 = vmax.f32 %v5480, 0.0
      %v5513 = vmax.f32 %v5481, 0.0
      %v5514 = vmax.f32 %v5482, 0.0
      %v5515 = vmax.f32 %v5483, 0.0
      %v5516 = vmax.f32 %v5484, 0.0
      %v5517 = vmax.f32 %v5485, 0.0
      %v5518 = vmax.f32 %v5486, 0.0
      %v5519 = vmax.f32 %v5487, 0.0
      %v5520 = vmax.f32 %v5488, 0.0
      %v5521 = vmax.f32 %v5489, 0.0
      %v5522 = vmax.f32 %v5490, 0.0
      %v5523 = vmax.f32 %v5491, 0.0
      %v5524 = vmax.f32 %v5492, 0.0
      %v5525 = vmax.f32 %v5493, 0.0
      %v5526 = vmax.f32 %v5494, 0.0
      %v5527 = vmax.f32 %v5495, 0.0
      %v5528 = vmax.f32 %v5496, 0.0
      %v5529 = vmax.f32 %v5497, 0.0
      %v5530 = vmax.f32 %v5498, 0.0
      %v5531 = vmax.f32 %v5499, 0.0
      %v5532 = vmax.f32 %v5500, 0.0
      %v5533 = vmax.f32 %v5501, 0.0
      %v5534 = vmax.f32 %v5502, 0.0
      %v5535 = vmax.f32 %v5503, 0.0
      %5536 = vst.msk [vmem:[%s271] sm:$0xff] %vm272, %v5504
      %5537 = vst.msk [vmem:[%s271 + $0x8] sm:$0xff] %vm272, %v5505
      %5538 = vst.msk [vmem:[%s271 + $0x10] sm:$0xff] %vm272, %v5506
      %5539 = vst.msk [vmem:[%s271 + $0x18] sm:$0xff] %vm272, %v5507
      %5540 = vst.msk [vmem:[%s271 + $0x20] sm:$0xff] %vm272, %v5508
      %5541 = vst.msk [vmem:[%s271 + $0x28] sm:$0xff] %vm272, %v5509
      %5542 = vst.msk [vmem:[%s271 + $0x30] sm:$0xff] %vm272, %v5510
      %5543 = vst.msk [vmem:[%s271 + $0x38] sm:$0xff] %vm272, %v5511
      %5544 = vst.msk [vmem:[%s271 + $0x40] sm:$0xff] %vm272, %v5512
      %5545 = vst.msk [vmem:[%s271 + $0x48] sm:$0xff] %vm272, %v5513
      %5546 = vst.msk [vmem:[%s271 + $0x50] sm:$0xff] %vm272, %v5514
      %5547 = vst.msk [vmem:[%s271 + $0x58] sm:$0xff] %vm272, %v5515
      %5548 = vst.msk [vmem:[%s271 + $0x60] sm:$0xff] %vm272, %v5516
      %5549 = vst.msk [vmem:[%s271 + $0x68] sm:$0xff] %vm272, %v5517
      %5550 = vst.msk [vmem:[%s271 + $0x70] sm:$0xff] %vm272, %v5518
      %5551 = vst.msk [vmem:[%s271 + $0x78] sm:$0xff] %vm272, %v5519
      %5552 = vst.msk [vmem:[%s271 + $0x80] sm:$0xff] %vm272, %v5520
      %5553 = vst.msk [vmem:[%s271 + $0x88] sm:$0xff] %vm272, %v5521
      %5554 = vst.msk [vmem:[%s271 + $0x90] sm:$0xff] %vm272, %v5522
      %5555 = vst.msk [vmem:[%s271 + $0x98] sm:$0xff] %vm272, %v5523
      %5556 = vst.msk [vmem:[%s271 + $0xa0] sm:$0xff] %vm272, %v5524
      %5557 = vst.msk [vmem:[%s271 + $0xa8] sm:$0xff] %vm272, %v5525
      %5558 = vst.msk [vmem:[%s271 + $0xb0] sm:$0xff] %vm272, %v5526
      %5559 = vst.msk [vmem:[%s271 + $0xb8] sm:$0xff] %vm272, %v5527
      %5560 = vst.msk [vmem:[%s271 + $0xc0] sm:$0xff] %vm272, %v5528
      %5561 = vst.msk [vmem:[%s271 + $0xc8] sm:$0xff] %vm272, %v5529
      %5562 = vst.msk [vmem:[%s271 + $0xd0] sm:$0xff] %vm272, %v5530
      %5563 = vst.msk [vmem:[%s271 + $0xd8] sm:$0xff] %vm272, %v5531
      %5564 = vst.msk [vmem:[%s271 + $0xe0] sm:$0xff] %vm272, %v5532
      %5565 = vst.msk [vmem:[%s271 + $0xe8] sm:$0xff] %vm272, %v5533
      %5566 = vst.msk [vmem:[%s271 + $0xf0] sm:$0xff] %vm272, %v5534
      %5567 = vst.msk [vmem:[%s271 + $0xf8] sm:$0xff] %vm272, %v5535
      %p5568 = scmp.lt.s32.totalorder %s17, 1
      %s5569 = scalar_select %p5568, %s17, 1
      %s5570 = smul.addr %s5569, 32
      %s5571 = smul.addr %s5570, 8
      %s5572 = scalar_lea.vmem %s6, %s5571
      // Predicated region
      $region45: #{tpu_custom_call.1} parent=43 // pred_check
        %p5573 = pneg %p171
      $region46: #{tpu_custom_call.1} parent=43 // pred_check_branch
        %5575 = sbr.rel (%p5573) target = $region48
      $region47: #{tpu_custom_call.1} parent=43 // pred_region
        _
      $region48: #{tpu_custom_call.1} parent=43 // pred_fallthru
        _
    $region44: #{tpu_custom_call.1} parent=5 // pred_fallthru
      _
    %p5576 = scmp.le.s32.totalorder 2, %s12
    // Predicated region
    $region49: #{tpu_custom_call.1} parent=5 // pred_check
      %p5577 = pneg %p5576
    $region50: #{tpu_custom_call.1} parent=5 // pred_check_branch
      %5579 = sbr.rel (%p5577) target = $region52
    $region51: #{tpu_custom_call.1} parent=5 // pred_region
      %s5580 = ssub.s32 %s12, 2
      // Predicated region
      $region53: #{tpu_custom_call.1} parent=51 // pred_check
        %p5581 = pneg %p177
      $region54: #{tpu_custom_call.1} parent=51 // pred_check_branch
        %5583 = sbr.rel (%p5581) target = $region56
      $region55: #{tpu_custom_call.1} parent=51 // pred_region
        %p5584 = scmp.lt.s32.totalorder %s18, 1
        %s5585 = scalar_select %p5584, %s18, 1
        %s5586 = smul.addr %s5585, 32
        %s5587 = smul.addr %s5586, 8
        %s5588 = scalar_lea.vmem %s6, %s5587
      $region56: #{tpu_custom_call.1} parent=51 // pred_fallthru
        _
    $region52: #{tpu_custom_call.1} parent=5 // pred_fallthru
      _
  $region6: #{tpu_custom_call.1} parent=0 // loop_footer
    %s16 = sadd.s32 1, %s12
  $region7: #{tpu_custom_call.1} parent=0 // loop_footer_branch
    %11 = sbr.rel target = $region3
  $region8: #{tpu_custom_call.1} parent=0 // loop_exit
    _

</llo_original>
